<compile_context>
chip_gen: v6e
topology: v6e:2x2x1
jax: 0.10.0
libtpu: 0.0.40
codegen_flags: <defaults>
</compile_context>

<pallas_src>
import jax
import jax.numpy as jnp
from jax.experimental import pallas as pl
from jax.experimental.pallas import tpu as pltpu

EPS = 1e-5

# Logical (PyTorch) dims.
D_IN, H1, H2, H3, D_OUT = 28 * 28, 612, 410, 210, 10
# Lane-padded dims (multiples of 128).
D_IN_P, H1_P, H2_P, H3_P, D_OUT_P = 896, 640, 512, 256, 128

# Row layout of the packed small-vector table (shape (8, H1_P), f32).
ROW_G1, ROW_BE1, ROW_G2, ROW_BE2, ROW_G3, ROW_BE3, ROW_B4 = range(7)


def mlp_kernel(x_ref, w1_ref, w2_ref, w3_ref, w4_ref, vec_ref, out_ref):
    """Fused 4-layer MLP with training-mode BatchNorm1d + ReLU."""
    inv_b = 1.0 / x_ref.shape[0]  # static batch size

    def linear(h, w_ref):
        # bf16 MXU inputs, f32 accumulation.  No bias for layers 1-3: it is
        # exactly cancelled by the BN batch-mean subtraction.
        return jnp.dot(h.astype(jnp.bfloat16), w_ref[...],
                       preferred_element_type=jnp.float32)

    def bn_relu(h, g, be):
        # BatchNorm1d training mode, single-pass stats: var = E[x^2] - mean^2
        # (biased variance, matching PyTorch's normalization path).
        mean = jnp.sum(h, axis=0, keepdims=True) * inv_b
        ex2 = jnp.sum(h * h, axis=0, keepdims=True) * inv_b
        var = ex2 - mean * mean
        hn = (h - mean) * jax.lax.rsqrt(var + EPS)   # rsqrt -> EUP slot
        return jnp.maximum(hn * g + be, 0.0)

    h = x_ref[...]  # bf16, already flattened + lane-padded
    h = bn_relu(linear(h, w1_ref),
                vec_ref[ROW_G1:ROW_G1 + 1, :H1_P],
                vec_ref[ROW_BE1:ROW_BE1 + 1, :H1_P])
    h = bn_relu(linear(h, w2_ref),
                vec_ref[ROW_G2:ROW_G2 + 1, :H2_P],
                vec_ref[ROW_BE2:ROW_BE2 + 1, :H2_P])
    h = bn_relu(linear(h, w3_ref),
                vec_ref[ROW_G3:ROW_G3 + 1, :H3_P],
                vec_ref[ROW_BE3:ROW_BE3 + 1, :H3_P])
    out_ref[...] = linear(h, w4_ref) + vec_ref[ROW_B4:ROW_B4 + 1, :D_OUT_P]


def init_params(key):
    """Deterministic synthetic parameters (PyTorch-like init, logical shapes).

    Biases of layers 1-3 are not generated: they are exactly cancelled by the
    training-mode BatchNorm mean subtraction that follows each layer.
    """
    dims = [(D_IN, H1), (H1, H2), (H2, H3), (H3, D_OUT)]
    weights, vectors = [], {}
    for i, (fan_in, fan_out) in enumerate(dims):
        kw, kb, key = jax.random.split(key, 3)
        bound = 1.0 / jnp.sqrt(float(fan_in))
        # Stored pre-transposed: (in_features, out_features).
        weights.append(
            jax.random.uniform(kw, (fan_in, fan_out), jnp.float32, -bound, bound))
        if i == 3:
            vectors["b4"] = jax.random.uniform(kb, (fan_out,), jnp.float32,
                                               -bound, bound)
        else:
            vectors[f"g{i + 1}"] = jnp.ones((fan_out,), jnp.float32)   # BN gamma
            vectors[f"be{i + 1}"] = jnp.zeros((fan_out,), jnp.float32)  # BN beta
    return weights, vectors


def prepare_params(weights, vectors):
    """Zero-pad to lane multiples; weights -> bf16; pack small vectors.

    Padded columns stay exactly zero through every layer (zero weight
    rows/cols, beta=0, padded b4=0), so the logical result is unchanged.
    """
    w1, w2, w3, w4 = weights

    def pad_w(w, in_p, out_p):
        w = jnp.pad(w, ((0, in_p - w.shape[0]), (0, out_p - w.shape[1])))
        return w.astype(jnp.bfloat16)   # weight storage dtype only

    def pad_row(v):
        return jnp.pad(v, (0, H1_P - v.shape[0]))

    vec = jnp.stack([
        pad_row(vectors["g1"]), pad_row(vectors["be1"]),
        pad_row(vectors["g2"]), pad_row(vectors["be2"]),
        pad_row(vectors["g3"]), pad_row(vectors["be3"]),
        pad_row(vectors["b4"]),
        jnp.zeros((H1_P,), jnp.float32),
    ]).astype(jnp.float32)   # (8, H1_P): one lane-dense DMA for all vectors

    return (pad_w(w1, D_IN_P, H1_P), pad_w(w2, H1_P, H2_P),
            pad_w(w3, H2_P, H3_P), pad_w(w4, H3_P, D_OUT_P), vec)


@jax.jit
def neural_network_forward(x, w1, w2, w3, w4, vec):
    B = x.shape[0]
    # nn.Flatten + bf16 cast + lane-pad.  bf16 halves the x DMA bytes with no
    # extra precision loss (the kernel casts to bf16 before the MXU anyway);
    # allow_input_fusion below fuses this producer into the pallas_call input.
    x2 = x.reshape(B, -1).astype(jnp.bfloat16)
    x2 = jnp.pad(x2, ((0, 0), (0, D_IN_P - D_IN)))

    # Advisory cost hint: ~13 MFLOP vs ~2.1 MB bf16 weights -> DMA-bound.
    flops = 2 * B * (D_IN * H1 + H1 * H2 + H2 * H3 + H3 * D_OUT)
    weight_bytes = 2 * (D_IN_P * H1_P + H1_P * H2_P + H2_P * H3_P + H3_P * D_OUT_P)
    io_bytes = 2 * B * D_IN_P + 4 * 8 * H1_P + 4 * B * D_OUT_P
    cost = pl.CostEstimate(flops=flops,
                           transcendentals=H1 + H2 + H3,  # rsqrt per BN feature
                           bytes_accessed=weight_bytes + io_bytes)

    out = pl.pallas_call(
        mlp_kernel,
        out_shape=jax.ShapeDtypeStruct((B, D_OUT_P), jnp.float32),
        in_specs=[pl.BlockSpec(memory_space=pltpu.MemorySpace.VMEM)] * 6,
        out_specs=pl.BlockSpec(memory_space=pltpu.MemorySpace.VMEM),
        compiler_params=pltpu.CompilerParams(
            # Permit XLA to fuse the reshape/cast/pad producing x2 (operand 0)
            # directly into the custom call input.
            allow_input_fusion=[True, False, False, False, False, False],
        ),
        cost_estimate=cost,
    )(x2, w1, w2, w3, w4, vec)
    # Slice the lane-padded logits back to the 10 logical classes.
    return out[:, :D_OUT]


if __name__ == "__main__":
    key = jax.random.PRNGKey(0)
    kx, kp = jax.random.split(key)

    # Small MNIST-like batch: (B, C, H, W) = (8, 1, 28, 28), NCHW like PyTorch.
    # NOTE: larger batches (hundreds+) amortize the weight DMA far better; BN
    # stats stay correct as long as the batch is a single block.
    x = jax.random.normal(kx, (8, 1, 28, 28), dtype=jnp.float32)
    weights, vectors = init_params(kp)
    params = prepare_params(weights, vectors)

    out = jax.block_until_ready(neural_network_forward(x, *params))
    assert out.shape == (8, D_OUT), out.shape
    print("KERNEL_OK")
</pallas_src>

<mosaic_0001>
module attributes {stable_mosaic.version = 11 : i64} {
  func.func @mlp_kernel(%arg0: memref<8x896xbf16, #tpu.memory_space<vmem>>, %arg1: memref<896x640xbf16, #tpu.memory_space<vmem>>, %arg2: memref<640x512xbf16, #tpu.memory_space<vmem>>, %arg3: memref<512x256xbf16, #tpu.memory_space<vmem>>, %arg4: memref<256x128xbf16, #tpu.memory_space<vmem>>, %arg5: memref<8x640xf32, #tpu.memory_space<vmem>>, %arg6: memref<8x128xf32, #tpu.memory_space<vmem>>) attributes {dimension_semantics = [], scalar_prefetch = 0 : i64, scratch_operands = 0 : i64, tpu.core_type = #tpu.core_type<tc>} {
    %c0 = arith.constant 0 : index
    %c0_0 = arith.constant 0 : index
    %0 = vector.load %arg0[%c0, %c0_0] : memref<8x896xbf16, #tpu.memory_space<vmem>>, vector<8x896xbf16>
    %c0_1 = arith.constant 0 : index
    %c0_2 = arith.constant 0 : index
    %1 = vector.load %arg1[%c0_1, %c0_2] : memref<896x640xbf16, #tpu.memory_space<vmem>>, vector<896x640xbf16>
    %cst = arith.constant dense<0.000000e+00> : vector<8x640xf32>
    %2 = tpu.matmul %0, %1, %cst {dimension_numbers = #tpu.dot_dimension_numbers<[1], [0], [0], [1], [0, 0, 1, 1], [], []>} : vector<8x896xbf16>, vector<896x640xbf16>, vector<8x640xf32> -> vector<8x640xf32>
    %c0_3 = arith.constant 0 : index
    %c0_4 = arith.constant 0 : index
    %3 = vector.load %arg5[%c0_3, %c0_4] : memref<8x640xf32, #tpu.memory_space<vmem>>, vector<1x640xf32>
    %c1 = arith.constant 1 : index
    %c0_5 = arith.constant 0 : index
    %4 = vector.load %arg5[%c1, %c0_5] : memref<8x640xf32, #tpu.memory_space<vmem>>, vector<1x640xf32>
    %cst_6 = arith.constant dense<0.000000e+00> : vector<640xf32>
    %5 = vector.multi_reduction <add>, %2, %cst_6 [0] : vector<8x640xf32> to vector<640xf32>
    %6 = vector.shape_cast %5 : vector<640xf32> to vector<1x640xf32>
    %cst_7 = arith.constant 1.250000e-01 : f32
    %7 = vector.broadcast %cst_7 : f32 to vector<1x640xf32>
    %8 = arith.mulf %6, %7 : vector<1x640xf32>
    %9 = arith.mulf %2, %2 : vector<8x640xf32>
    %cst_8 = arith.constant dense<0.000000e+00> : vector<640xf32>
    %10 = vector.multi_reduction <add>, %9, %cst_8 [0] : vector<8x640xf32> to vector<640xf32>
    %11 = vector.shape_cast %10 : vector<640xf32> to vector<1x640xf32>
    %cst_9 = arith.constant 1.250000e-01 : f32
    %12 = vector.broadcast %cst_9 : f32 to vector<1x640xf32>
    %13 = arith.mulf %11, %12 : vector<1x640xf32>
    %14 = arith.mulf %8, %8 : vector<1x640xf32>
    %15 = arith.subf %13, %14 : vector<1x640xf32>
    %16 = vector.broadcast %8 : vector<1x640xf32> to vector<8x640xf32>
    %17 = arith.subf %2, %16 : vector<8x640xf32>
    %cst_10 = arith.constant 9.99999974E-6 : f32
    %18 = vector.broadcast %cst_10 : f32 to vector<1x640xf32>
    %19 = arith.addf %15, %18 : vector<1x640xf32>
    %20 = math.rsqrt %19 : vector<1x640xf32>
    %21 = vector.broadcast %20 : vector<1x640xf32> to vector<8x640xf32>
    %22 = arith.mulf %17, %21 : vector<8x640xf32>
    %23 = vector.broadcast %3 : vector<1x640xf32> to vector<8x640xf32>
    %24 = arith.mulf %22, %23 : vector<8x640xf32>
    %25 = vector.broadcast %4 : vector<1x640xf32> to vector<8x640xf32>
    %26 = arith.addf %24, %25 : vector<8x640xf32>
    %cst_11 = arith.constant 0.000000e+00 : f32
    %27 = vector.broadcast %cst_11 : f32 to vector<8x640xf32>
    %28 = arith.maximumf %26, %27 : vector<8x640xf32>
    %29 = arith.truncf %28 : vector<8x640xf32> to vector<8x640xbf16>
    %c0_12 = arith.constant 0 : index
    %c0_13 = arith.constant 0 : index
    %30 = vector.load %arg2[%c0_12, %c0_13] : memref<640x512xbf16, #tpu.memory_space<vmem>>, vector<640x512xbf16>
    %cst_14 = arith.constant dense<0.000000e+00> : vector<8x512xf32>
    %31 = tpu.matmul %29, %30, %cst_14 {dimension_numbers = #tpu.dot_dimension_numbers<[1], [0], [0], [1], [0, 0, 1, 1], [], []>} : vector<8x640xbf16>, vector<640x512xbf16>, vector<8x512xf32> -> vector<8x512xf32>
    %c2 = arith.constant 2 : index
    %c0_15 = arith.constant 0 : index
    %32 = vector.load %arg5[%c2, %c0_15] : memref<8x640xf32, #tpu.memory_space<vmem>>, vector<1x512xf32>
    %c3 = arith.constant 3 : index
    %c0_16 = arith.constant 0 : index
    %33 = vector.load %arg5[%c3, %c0_16] : memref<8x640xf32, #tpu.memory_space<vmem>>, vector<1x512xf32>
    %cst_17 = arith.constant dense<0.000000e+00> : vector<512xf32>
    %34 = vector.multi_reduction <add>, %31, %cst_17 [0] : vector<8x512xf32> to vector<512xf32>
    %35 = vector.shape_cast %34 : vector<512xf32> to vector<1x512xf32>
    %cst_18 = arith.constant 1.250000e-01 : f32
    %36 = vector.broadcast %cst_18 : f32 to vector<1x512xf32>
    %37 = arith.mulf %35, %36 : vector<1x512xf32>
    %38 = arith.mulf %31, %31 : vector<8x512xf32>
    %cst_19 = arith.constant dense<0.000000e+00> : vector<512xf32>
    %39 = vector.multi_reduction <add>, %38, %cst_19 [0] : vector<8x512xf32> to vector<512xf32>
    %40 = vector.shape_cast %39 : vector<512xf32> to vector<1x512xf32>
    %cst_20 = arith.constant 1.250000e-01 : f32
    %41 = vector.broadcast %cst_20 : f32 to vector<1x512xf32>
    %42 = arith.mulf %40, %41 : vector<1x512xf32>
    %43 = arith.mulf %37, %37 : vector<1x512xf32>
    %44 = arith.subf %42, %43 : vector<1x512xf32>
    %45 = vector.broadcast %37 : vector<1x512xf32> to vector<8x512xf32>
    %46 = arith.subf %31, %45 : vector<8x512xf32>
    %cst_21 = arith.constant 9.99999974E-6 : f32
    %47 = vector.broadcast %cst_21 : f32 to vector<1x512xf32>
    %48 = arith.addf %44, %47 : vector<1x512xf32>
    %49 = math.rsqrt %48 : vector<1x512xf32>
    %50 = vector.broadcast %49 : vector<1x512xf32> to vector<8x512xf32>
    %51 = arith.mulf %46, %50 : vector<8x512xf32>
    %52 = vector.broadcast %32 : vector<1x512xf32> to vector<8x512xf32>
    %53 = arith.mulf %51, %52 : vector<8x512xf32>
    %54 = vector.broadcast %33 : vector<1x512xf32> to vector<8x512xf32>
    %55 = arith.addf %53, %54 : vector<8x512xf32>
    %cst_22 = arith.constant 0.000000e+00 : f32
    %56 = vector.broadcast %cst_22 : f32 to vector<8x512xf32>
    %57 = arith.maximumf %55, %56 : vector<8x512xf32>
    %58 = arith.truncf %57 : vector<8x512xf32> to vector<8x512xbf16>
    %c0_23 = arith.constant 0 : index
    %c0_24 = arith.constant 0 : index
    %59 = vector.load %arg3[%c0_23, %c0_24] : memref<512x256xbf16, #tpu.memory_space<vmem>>, vector<512x256xbf16>
    %cst_25 = arith.constant dense<0.000000e+00> : vector<8x256xf32>
    %60 = tpu.matmul %58, %59, %cst_25 {dimension_numbers = #tpu.dot_dimension_numbers<[1], [0], [0], [1], [0, 0, 1, 1], [], []>} : vector<8x512xbf16>, vector<512x256xbf16>, vector<8x256xf32> -> vector<8x256xf32>
    %c4 = arith.constant 4 : index
    %c0_26 = arith.constant 0 : index
    %61 = vector.load %arg5[%c4, %c0_26] : memref<8x640xf32, #tpu.memory_space<vmem>>, vector<1x256xf32>
    %c5 = arith.constant 5 : index
    %c0_27 = arith.constant 0 : index
    %62 = vector.load %arg5[%c5, %c0_27] : memref<8x640xf32, #tpu.memory_space<vmem>>, vector<1x256xf32>
    %cst_28 = arith.constant dense<0.000000e+00> : vector<256xf32>
    %63 = vector.multi_reduction <add>, %60, %cst_28 [0] : vector<8x256xf32> to vector<256xf32>
    %64 = vector.shape_cast %63 : vector<256xf32> to vector<1x256xf32>
    %cst_29 = arith.constant 1.250000e-01 : f32
    %65 = vector.broadcast %cst_29 : f32 to vector<1x256xf32>
    %66 = arith.mulf %64, %65 : vector<1x256xf32>
    %67 = arith.mulf %60, %60 : vector<8x256xf32>
    %cst_30 = arith.constant dense<0.000000e+00> : vector<256xf32>
    %68 = vector.multi_reduction <add>, %67, %cst_30 [0] : vector<8x256xf32> to vector<256xf32>
    %69 = vector.shape_cast %68 : vector<256xf32> to vector<1x256xf32>
    %cst_31 = arith.constant 1.250000e-01 : f32
    %70 = vector.broadcast %cst_31 : f32 to vector<1x256xf32>
    %71 = arith.mulf %69, %70 : vector<1x256xf32>
    %72 = arith.mulf %66, %66 : vector<1x256xf32>
    %73 = arith.subf %71, %72 : vector<1x256xf32>
    %74 = vector.broadcast %66 : vector<1x256xf32> to vector<8x256xf32>
    %75 = arith.subf %60, %74 : vector<8x256xf32>
    %cst_32 = arith.constant 9.99999974E-6 : f32
    %76 = vector.broadcast %cst_32 : f32 to vector<1x256xf32>
    %77 = arith.addf %73, %76 : vector<1x256xf32>
    %78 = math.rsqrt %77 : vector<1x256xf32>
    %79 = vector.broadcast %78 : vector<1x256xf32> to vector<8x256xf32>
    %80 = arith.mulf %75, %79 : vector<8x256xf32>
    %81 = vector.broadcast %61 : vector<1x256xf32> to vector<8x256xf32>
    %82 = arith.mulf %80, %81 : vector<8x256xf32>
    %83 = vector.broadcast %62 : vector<1x256xf32> to vector<8x256xf32>
    %84 = arith.addf %82, %83 : vector<8x256xf32>
    %cst_33 = arith.constant 0.000000e+00 : f32
    %85 = vector.broadcast %cst_33 : f32 to vector<8x256xf32>
    %86 = arith.maximumf %84, %85 : vector<8x256xf32>
    %87 = arith.truncf %86 : vector<8x256xf32> to vector<8x256xbf16>
    %c0_34 = arith.constant 0 : index
    %c0_35 = arith.constant 0 : index
    %88 = vector.load %arg4[%c0_34, %c0_35] : memref<256x128xbf16, #tpu.memory_space<vmem>>, vector<256x128xbf16>
    %cst_36 = arith.constant dense<0.000000e+00> : vector<8x128xf32>
    %89 = tpu.matmul %87, %88, %cst_36 {dimension_numbers = #tpu.dot_dimension_numbers<[1], [0], [0], [1], [0, 0, 1, 1], [], []>} : vector<8x256xbf16>, vector<256x128xbf16>, vector<8x128xf32> -> vector<8x128xf32>
    %c6 = arith.constant 6 : index
    %c0_37 = arith.constant 0 : index
    %90 = vector.load %arg5[%c6, %c0_37] : memref<8x640xf32, #tpu.memory_space<vmem>>, vector<1x128xf32>
    %91 = vector.broadcast %90 : vector<1x128xf32> to vector<8x128xf32>
    %92 = arith.addf %89, %91 : vector<8x128xf32>
    %c0_38 = arith.constant 0 : index
    %c0_39 = arith.constant 0 : index
    %93 = vector.load %arg6[%c0_38, %c0_39] : memref<8x128xf32, #tpu.memory_space<vmem>>, vector<8x128xf32>
    tpu.vector_store %arg6[%c0_38, %c0_39], %92 {strides = array<i32>} : memref<8x128xf32, #tpu.memory_space<vmem>>, vector<8x128xf32>,
    return
  }
}

</mosaic_0001>

<llo_original>
// kernel: neural_network_forward.2
$region0: #{neural_network_forward.2}
  #allocation0 [shape = 'u32[]', space=smem, size = 0x4, offset = 0x4, fixed_abs, tag = 'smem constant byte address 0x4 - core index']
  #allocation1 [shape = 'u32[144,128]{1,0:T(1,128)}', space=vmem, size = 0x12000, scoped, tag = 'internal scratch']
  #allocation2 [shape = 'u32[2048]{0}', space=vmem, size = 0x2000, scoped, tag = 'scoped memory for neural_network_forward.2']
  #allocation3 [shape = 'u32[2048]{0}', space=vmem, size = 0x2000, scoped, tag = 'scoped memory for neural_network_forward.2']
  #allocation4 [shape = 'u32[2048]{0}', space=vmem, size = 0x2000, scoped, tag = 'scoped memory for neural_network_forward.2']
  #allocation5 [shape = 'u32[2048]{0}', space=vmem, size = 0x2000, scoped, tag = 'scoped memory for neural_network_forward.2']
  #allocation6 [shape = 'u32[2048]{0}', space=vmem, size = 0x2000, scoped, tag = 'scoped memory for neural_network_forward.2']
  %s0 = inlined_call_operand.hbm [shape: bf16[896,640], index: 0, kind: input, shape index: {}]
  %s1 = inlined_call_operand.hbm [shape: bf16[640,512], index: 1, kind: input, shape index: {}]
  %s2 = inlined_call_operand.hbm [shape: bf16[512,256], index: 2, kind: input, shape index: {}]
  %s3 = inlined_call_operand.hbm [shape: bf16[256,128], index: 3, kind: input, shape index: {}]
  %s4 = inlined_call_operand.hbm [shape: f32[8,640], index: 4, kind: input, shape index: {}]
  %s5 = inlined_call_operand.vmem [shape: bf16[8,784], index: 5, kind: input, shape index: {}]
  %s6 = inlined_call_operand.<no memory space> [shape: bf16[], index: 6, kind: input, shape index: {}]
  %s7 = inlined_call_operand.hbm [shape: f32[8,128], index: 7, kind: output, shape index: {}]
  %s8 = sld [smem:[#allocation0]]
  $region54: #{neural_network_forward.2} parent=0
    _
  %s10 = ssub.s32 1, %s8
  %s11 = scalar_select 0, %s10, %s8
  %v12 = vstv %s6
  %v13 = vunpack.i.l.bf16 %v12
  %v15 = vunpack.i.h.bf16 %v12
  $region1: #{neural_network_forward.2} parent=0
    #allocation7 [shape = 'u8[1146880]{0}', space=vmem, size = 0x118000, scoped, tag = 'input window, operand 1, single buffered']
    #allocation8 [shape = 's32[1]{0}', space=sflag, size = 0x4, scoped, tag = 'scoped memory for neural_network_forward.2']
    #allocation9 [shape = 's32[1]{0}', space=sflag, size = 0x4, scoped, tag = 'scoped memory for neural_network_forward.2']
    #allocation10 [shape = 'u8[655360]{0}', space=vmem, size = 0xa0000, scoped, tag = 'input window, operand 2, single buffered']
    #allocation11 [shape = 's32[1]{0}', space=sflag, size = 0x4, scoped, tag = 'scoped memory for neural_network_forward.2']
    #allocation12 [shape = 'u8[262144]{0}', space=vmem, size = 0x40000, scoped, tag = 'input window, operand 3, single buffered']
    #allocation13 [shape = 'u8[65536]{0}', space=vmem, size = 0x10000, scoped, tag = 'input window, operand 4, single buffered']
    #allocation14 [shape = 's32[1]{0}', space=sflag, size = 0x4, scoped, tag = 'scoped memory for neural_network_forward.2']
    #allocation15 [shape = 'u8[20480]{0}', space=vmem, size = 0x5000, scoped, tag = 'input window, operand 5, single buffered']
    #allocation16 [shape = 'u8[4096]{0}', space=vmem, size = 0x1000, scoped, tag = 'output window, operand 0, single buffered']
    #allocation17 [shape = 'u8[14336]{0}', space=vmem, size = 0x3800, dematerialized = true, scoped, tag = 'FusionAdapter Buffer %fusion.1 = bf16[8,896]{1,0:T(8,128)(2,1)} fusion(%param_5.1, %param_6), kind=kLoop, calls=%fused_computation.2.clone, metadata={op_name="jit(neural_network_forward)/jit(_pad)/pad" stack_frame_id=8}']
    %17 = vsyncpa [#allocation8], 0
    %18 = vsyncpa [#allocation11], 0
    %19 = vsyncpa [#allocation14], 0
    %20 = vsyncpa [#allocation9], 0
    // Predicated region
    $region2: #{neural_network_forward.2} parent=1 // pred_check
      _
    $region3: #{neural_network_forward.2} parent=1 // pred_check_branch
      %22 = sbr.rel (0) target = $region5
    $region4: #{neural_network_forward.2} parent=1 // pred_region
      _
    $region5: #{neural_network_forward.2} parent=1 // pred_fallthru
      _
    // Predicated region
    $region6: #{neural_network_forward.2} parent=1 // pred_check
      _
    $region7: #{neural_network_forward.2} parent=1 // pred_check_branch
      %24 = sbr.rel (0) target = $region9
    $region8: #{neural_network_forward.2} parent=1 // pred_region
      %s26 = ssub.s32 35840, 35840
      %27 = vsyncadd [#allocation8], %s26
      %s28 = sshll.u32 [#allocation7], 4
      %s29 = int_to_ptr.vmem [resolvable:$true] %s28
      %34 = dma.hbm_to_vmem [thread:$0]  %s0, 35840, %s29, [#allocation8], 320, 320, 20
    $region9: #{neural_network_forward.2} parent=1 // pred_fallthru
      _
    // Predicated region
    $region10: #{neural_network_forward.2} parent=1 // pred_check
      _
    $region11: #{neural_network_forward.2} parent=1 // pred_check_branch
      %36 = sbr.rel (0) target = $region13
    $region12: #{neural_network_forward.2} parent=1 // pred_region
      %s38 = ssub.s32 20480, 20480
      %39 = vsyncadd [#allocation11], %s38
      %s40 = sshll.u32 [#allocation10], 4
      %s41 = int_to_ptr.vmem [resolvable:$true] %s40
      %46 = dma.hbm_to_vmem [thread:$0]  %s1, 20480, %s41, [#allocation11], 256, 256, 16
    $region13: #{neural_network_forward.2} parent=1 // pred_fallthru
      _
    // Predicated region
    $region14: #{neural_network_forward.2} parent=1 // pred_check
      _
    $region15: #{neural_network_forward.2} parent=1 // pred_check_branch
      %48 = sbr.rel (0) target = $region17
    $region16: #{neural_network_forward.2} parent=1 // pred_region
      %s50 = ssub.s32 8192, 8192
      %51 = vsyncadd [#allocation11], %s50
      %s52 = sshll.u32 [#allocation12], 4
      %s53 = int_to_ptr.vmem [resolvable:$true] %s52
      %58 = dma.hbm_to_vmem [thread:$0]  %s2, 8192, %s53, [#allocation11], 128, 128, 8
    $region17: #{neural_network_forward.2} parent=1 // pred_fallthru
      _
    // Predicated region
    $region18: #{neural_network_forward.2} parent=1 // pred_check
      _
    $region19: #{neural_network_forward.2} parent=1 // pred_check_branch
      %60 = sbr.rel (0) target = $region21
    $region20: #{neural_network_forward.2} parent=1 // pred_region
      %s62 = ssub.s32 2048, 2048
      %63 = vsyncadd [#allocation14], %s62
      %s64 = sshll.u32 [#allocation13], 4
      %s65 = int_to_ptr.vmem [resolvable:$true] %s64
      %70 = dma.hbm_to_vmem [thread:$0]  %s3, 2048, %s65, [#allocation14], 64, 64, 4
    $region21: #{neural_network_forward.2} parent=1 // pred_fallthru
      _
    // Predicated region
    $region22: #{neural_network_forward.2} parent=1 // pred_check
      _
    $region23: #{neural_network_forward.2} parent=1 // pred_check_branch
      %72 = sbr.rel (0) target = $region25
    $region24: #{neural_network_forward.2} parent=1 // pred_region
      %s74 = ssub.s32 640, 640
      %75 = vsyncadd [#allocation14], %s74
      %s77 = sshll.u32 [#allocation15], 4
      %s78 = int_to_ptr.vmem [resolvable:$true] %s77
      %80 = dma.hbm_to_vmem [thread:$0]  %s4, 640, %s78, [#allocation14]
    $region25: #{neural_network_forward.2} parent=1 // pred_fallthru
      _
    // Predicated region
    $region26: #{neural_network_forward.2} parent=1 // pred_check
      _
    $region27: #{neural_network_forward.2} parent=1 // pred_check_branch
      %82 = sbr.rel (0) target = $region29
    $region28: #{neural_network_forward.2} parent=1 // pred_region
      %83 = dma.done [#allocation8], 35840
    $region29: #{neural_network_forward.2} parent=1 // pred_fallthru
      _
    // Predicated region
    $region30: #{neural_network_forward.2} parent=1 // pred_check
      _
    $region31: #{neural_network_forward.2} parent=1 // pred_check_branch
      %85 = sbr.rel (0) target = $region33
    $region32: #{neural_network_forward.2} parent=1 // pred_region
      %86 = dma.done [#allocation11], 20480
    $region33: #{neural_network_forward.2} parent=1 // pred_fallthru
      _
    // Predicated region
    $region34: #{neural_network_forward.2} parent=1 // pred_check
      _
    $region35: #{neural_network_forward.2} parent=1 // pred_check_branch
      %88 = sbr.rel (0) target = $region37
    $region36: #{neural_network_forward.2} parent=1 // pred_region
      %89 = dma.done [#allocation11], 8192
    $region37: #{neural_network_forward.2} parent=1 // pred_fallthru
      _
    // Predicated region
    $region38: #{neural_network_forward.2} parent=1 // pred_check
      _
    $region39: #{neural_network_forward.2} parent=1 // pred_check_branch
      %91 = sbr.rel (0) target = $region41
    $region40: #{neural_network_forward.2} parent=1 // pred_region
      %92 = dma.done [#allocation14], 2048
    $region41: #{neural_network_forward.2} parent=1 // pred_fallthru
      _
    // Predicated region
    $region42: #{neural_network_forward.2} parent=1 // pred_check
      _
    $region43: #{neural_network_forward.2} parent=1 // pred_check_branch
      %94 = sbr.rel (0) target = $region45
    $region44: #{neural_network_forward.2} parent=1 // pred_region
      %95 = dma.done [#allocation14], 640
    $region45: #{neural_network_forward.2} parent=1 // pred_fallthru
      _
    %v96 = vld [vmem:[%s5] sm:$0xf]
    %v97 = vunpack.c.l.bf16 %v96
    %v98 = vunpack.c.h.bf16 %v96
    %v99 = vlaneseq
    %v100 = vand.u32 %v99, 127
    %vm102 = vcmp.lt.s32.totalorder %v100, 784
    %v103 = vsel %vm102, %v97, %v13
    %v104 = vpack.c.bf16 0.0, %v103
    %s106 = ssub.s32 16, 1
    %107 = vst [vmem:[#allocation17] sm:%s106] %v104
    %s108 = scalar_lea.vmem %s5, 4
    %v109 = vld [vmem:[%s108] sm:$0xf]
    %v110 = vunpack.c.l.bf16 %v109
    %v111 = vunpack.c.h.bf16 %v109
    %v112 = vlaneseq
    %v113 = vand.u32 %v112, 127
    %v114 = vadd.s32 %v113, 128
    %vm115 = vcmp.lt.s32.totalorder %v114, 784
    %v116 = vsel %vm115, %v110, %v13
    %s117 = scalar_lea.vmem [#allocation17], 4
    %v118 = vpack.c.bf16 0.0, %v116
    %s120 = ssub.s32 16, 1
    %121 = vst [vmem:[%s117] sm:%s120] %v118
    %s122 = scalar_lea.vmem %s5, 8
    %v123 = vld [vmem:[%s122] sm:$0xf]
    %v124 = vunpack.c.l.bf16 %v123
    %v125 = vunpack.c.h.bf16 %v123
    %v126 = vlaneseq
    %v127 = vand.u32 %v126, 127
    %v128 = vadd.s32 %v127, 256
    %vm129 = vcmp.lt.s32.totalorder %v128, 784
    %v130 = vsel %vm129, %v124, %v13
    %s131 = scalar_lea.vmem [#allocation17], 8
    %v132 = vpack.c.bf16 0.0, %v130
    %s134 = ssub.s32 16, 1
    %135 = vst [vmem:[%s131] sm:%s134] %v132
    %s136 = scalar_lea.vmem %s5, 12
    %v137 = vld [vmem:[%s136] sm:$0xf]
    %v138 = vunpack.c.l.bf16 %v137
    %v139 = vunpack.c.h.bf16 %v137
    %v140 = vlaneseq
    %v141 = vand.u32 %v140, 127
    %v142 = vadd.s32 %v141, 384
    %vm143 = vcmp.lt.s32.totalorder %v142, 784
    %v144 = vsel %vm143, %v138, %v13
    %s145 = scalar_lea.vmem [#allocation17], 12
    %v146 = vpack.c.bf16 0.0, %v144
    %s148 = ssub.s32 16, 1
    %149 = vst [vmem:[%s145] sm:%s148] %v146
    %s150 = scalar_lea.vmem %s5, 16
    %v151 = vld [vmem:[%s150] sm:$0xf]
    %v152 = vunpack.c.l.bf16 %v151
    %v153 = vunpack.c.h.bf16 %v151
    %v154 = vlaneseq
    %v155 = vand.u32 %v154, 127
    %v156 = vadd.s32 %v155, 512
    %vm157 = vcmp.lt.s32.totalorder %v156, 784
    %v158 = vsel %vm157, %v152, %v13
    %s159 = scalar_lea.vmem [#allocation17], 16
    %v160 = vpack.c.bf16 0.0, %v158
    %s162 = ssub.s32 16, 1
    %163 = vst [vmem:[%s159] sm:%s162] %v160
    %s164 = scalar_lea.vmem %s5, 20
    %v165 = vld [vmem:[%s164] sm:$0xf]
    %v166 = vunpack.c.l.bf16 %v165
    %v167 = vunpack.c.h.bf16 %v165
    %v168 = vlaneseq
    %v169 = vand.u32 %v168, 127
    %v170 = vadd.s32 %v169, 640
    %vm171 = vcmp.lt.s32.totalorder %v170, 784
    %v172 = vsel %vm171, %v166, %v13
    %s173 = scalar_lea.vmem [#allocation17], 20
    %v174 = vpack.c.bf16 0.0, %v172
    %s176 = ssub.s32 16, 1
    %177 = vst [vmem:[%s173] sm:%s176] %v174
    %s178 = scalar_lea.vmem %s5, 24
    %s180 = sor.u32 255, 127
    %s181 = sand.u32 %s180, 85
    %s182 = sshrl.u32 %s181, 1
    %s183 = sor.u32 %s181, %s182
    %s184 = sand.u32 51, %s183
    %s185 = sshrl.u32 %s184, 2
    %s186 = sor.u32 %s184, %s185
    %s187 = sand.u32 15, %s186
    %v188 = vld [vmem:[%s178] sm:%s187]
    %v189 = vunpack.c.l.bf16 %v188
    %v190 = vunpack.c.h.bf16 %v188
    %v191 = vlaneseq
    %v192 = vand.u32 %v191, 127
    %v193 = vadd.s32 %v192, 768
    %vm194 = vcmp.lt.s32.totalorder %v193, 784
    %v195 = vsel %vm194, %v189, %v13
    %s196 = scalar_lea.vmem [#allocation17], 24
    %v197 = vpack.c.bf16 0.0, %v195
    %s199 = ssub.s32 16, 1
    %200 = vst [vmem:[%s196] sm:%s199] %v197
    %v202 = vld [vmem:[#allocation17] sm:$0xff]
    %v203 = vld [vmem:[#allocation17 + $0x8] sm:$0xff]
    %v204 = vld [vmem:[#allocation17 + $0x10] sm:$0xff]
    %v205 = vld [vmem:[#allocation17 + $0x18] sm:$0xf]
    %v206 = vld [vmem:[#allocation7] sm:$0xff]
    %v207 = vld [vmem:[#allocation7 + $0x8] sm:$0xff]
    %v208 = vld [vmem:[#allocation7 + $0x10] sm:$0xf]
    %v209 = vld [vmem:[#allocation7 + $0x14] sm:$0xff]
    %v210 = vld [vmem:[#allocation7 + $0x1c] sm:$0xff]
    %v211 = vld [vmem:[#allocation7 + $0x24] sm:$0xf]
    %v212 = vld [vmem:[#allocation7 + $0x28] sm:$0xff]
    %v213 = vld [vmem:[#allocation7 + $0x30] sm:$0xff]
    %v214 = vld [vmem:[#allocation7 + $0x38] sm:$0xf]
    %v215 = vld [vmem:[#allocation7 + $0x3c] sm:$0xff]
    %v216 = vld [vmem:[#allocation7 + $0x44] sm:$0xff]
    %v217 = vld [vmem:[#allocation7 + $0x4c] sm:$0xf]
    %v218 = vld [vmem:[#allocation7 + $0x50] sm:$0xff]
    %v219 = vld [vmem:[#allocation7 + $0x58] sm:$0xff]
    %v220 = vld [vmem:[#allocation7 + $0x60] sm:$0xf]
    %v221 = vld [vmem:[#allocation7 + $0x64] sm:$0xff]
    %v222 = vld [vmem:[#allocation7 + $0x6c] sm:$0xff]
    %v223 = vld [vmem:[#allocation7 + $0x74] sm:$0xf]
    %v224 = vld [vmem:[#allocation7 + $0x78] sm:$0xff]
    %v225 = vld [vmem:[#allocation7 + $0x80] sm:$0xff]
    %v226 = vld [vmem:[#allocation7 + $0x88] sm:$0xf]
    %v227 = vld [vmem:[#allocation7 + $0x8c] sm:$0xff]
    %v228 = vld [vmem:[#allocation7 + $0x94] sm:$0xff]
    %v229 = vld [vmem:[#allocation7 + $0x9c] sm:$0xf]
    %v230 = vld [vmem:[#allocation7 + $0xa0] sm:$0xff]
    %v231 = vld [vmem:[#allocation7 + $0xa8] sm:$0xff]
    %v232 = vld [vmem:[#allocation7 + $0xb0] sm:$0xf]
    %v233 = vld [vmem:[#allocation7 + $0xb4] sm:$0xff]
    %v234 = vld [vmem:[#allocation7 + $0xbc] sm:$0xff]
    %v235 = vld [vmem:[#allocation7 + $0xc4] sm:$0xf]
    %v236 = vld [vmem:[#allocation7 + $0xc8] sm:$0xff]
    %v237 = vld [vmem:[#allocation7 + $0xd0] sm:$0xff]
    %v238 = vld [vmem:[#allocation7 + $0xd8] sm:$0xf]
    %v239 = vld [vmem:[#allocation7 + $0xdc] sm:$0xff]
    %v240 = vld [vmem:[#allocation7 + $0xe4] sm:$0xff]
    %v241 = vld [vmem:[#allocation7 + $0xec] sm:$0xf]
    %v242 = vld [vmem:[#allocation7 + $0xf0] sm:$0xff]
    %v243 = vld [vmem:[#allocation7 + $0xf8] sm:$0xff]
    %v244 = vld [vmem:[#allocation7 + $0x100] sm:$0xf]
    %v245 = vld [vmem:[#allocation7 + $0x104] sm:$0xff]
    %v246 = vld [vmem:[#allocation7 + $0x10c] sm:$0xff]
    %v247 = vld [vmem:[#allocation7 + $0x114] sm:$0xf]
    %v248 = vld [vmem:[#allocation7 + $0x118] sm:$0xff]
    %v249 = vld [vmem:[#allocation7 + $0x120] sm:$0xff]
    %v250 = vld [vmem:[#allocation7 + $0x128] sm:$0xf]
    %v251 = vld [vmem:[#allocation7 + $0x12c] sm:$0xff]
    %v252 = vld [vmem:[#allocation7 + $0x134] sm:$0xff]
    %v253 = vld [vmem:[#allocation7 + $0x13c] sm:$0xf]
    %v254 = vld [vmem:[#allocation7 + $0x140] sm:$0xff]
    %v255 = vld [vmem:[#allocation7 + $0x148] sm:$0xff]
    %v256 = vld [vmem:[#allocation7 + $0x150] sm:$0xf]
    %v257 = vld [vmem:[#allocation7 + $0x154] sm:$0xff]
    %v258 = vld [vmem:[#allocation7 + $0x15c] sm:$0xff]
    %v259 = vld [vmem:[#allocation7 + $0x164] sm:$0xf]
    %v260 = vld [vmem:[#allocation7 + $0x168] sm:$0xff]
    %v261 = vld [vmem:[#allocation7 + $0x170] sm:$0xff]
    %v262 = vld [vmem:[#allocation7 + $0x178] sm:$0xf]
    %v263 = vld [vmem:[#allocation7 + $0x17c] sm:$0xff]
    %v264 = vld [vmem:[#allocation7 + $0x184] sm:$0xff]
    %v265 = vld [vmem:[#allocation7 + $0x18c] sm:$0xf]
    %v266 = vld [vmem:[#allocation7 + $0x190] sm:$0xff]
    %v267 = vld [vmem:[#allocation7 + $0x198] sm:$0xff]
    %v268 = vld [vmem:[#allocation7 + $0x1a0] sm:$0xf]
    %v269 = vld [vmem:[#allocation7 + $0x1a4] sm:$0xff]
    %v270 = vld [vmem:[#allocation7 + $0x1ac] sm:$0xff]
    %v271 = vld [vmem:[#allocation7 + $0x1b4] sm:$0xf]
    %v272 = vld [vmem:[#allocation7 + $0x1b8] sm:$0xff]
    %v273 = vld [vmem:[#allocation7 + $0x1c0] sm:$0xff]
    %v274 = vld [vmem:[#allocation7 + $0x1c8] sm:$0xf]
    %v275 = vld [vmem:[#allocation7 + $0x1cc] sm:$0xff]
    %v276 = vld [vmem:[#allocation7 + $0x1d4] sm:$0xff]
    %v277 = vld [vmem:[#allocation7 + $0x1dc] sm:$0xf]
    %v278 = vld [vmem:[#allocation7 + $0x1e0] sm:$0xff]
    %v279 = vld [vmem:[#allocation7 + $0x1e8] sm:$0xff]
    %v280 = vld [vmem:[#allocation7 + $0x1f0] sm:$0xf]
    %v281 = vld [vmem:[#allocation7 + $0x1f4] sm:$0xff]
    %v282 = vld [vmem:[#allocation7 + $0x1fc] sm:$0xff]
    %v283 = vld [vmem:[#allocation7 + $0x204] sm:$0xf]
    %v284 = vld [vmem:[#allocation7 + $0x208] sm:$0xff]
    %v285 = vld [vmem:[#allocation7 + $0x210] sm:$0xff]
    %v286 = vld [vmem:[#allocation7 + $0x218] sm:$0xf]
    %v287 = vld [vmem:[#allocation7 + $0x21c] sm:$0xff]
    %v288 = vld [vmem:[#allocation7 + $0x224] sm:$0xff]
    %v289 = vld [vmem:[#allocation7 + $0x22c] sm:$0xf]
    %v290 = vld [vmem:[#allocation7 + $0x230] sm:$0xff]
    %v291 = vld [vmem:[#allocation7 + $0x238] sm:$0xff]
    %v292 = vld [vmem:[#allocation7 + $0x240] sm:$0xf]
    %v293 = vld [vmem:[#allocation7 + $0x244] sm:$0xff]
    %v294 = vld [vmem:[#allocation7 + $0x24c] sm:$0xff]
    %v295 = vld [vmem:[#allocation7 + $0x254] sm:$0xf]
    %v296 = vld [vmem:[#allocation7 + $0x258] sm:$0xff]
    %v297 = vld [vmem:[#allocation7 + $0x260] sm:$0xff]
    %v298 = vld [vmem:[#allocation7 + $0x268] sm:$0xf]
    %v299 = vld [vmem:[#allocation7 + $0x26c] sm:$0xff]
    %v300 = vld [vmem:[#allocation7 + $0x274] sm:$0xff]
    %v301 = vld [vmem:[#allocation7 + $0x27c] sm:$0xf]
    %v302 = vld [vmem:[#allocation7 + $0x280] sm:$0xff]
    %v303 = vld [vmem:[#allocation7 + $0x288] sm:$0xff]
    %v304 = vld [vmem:[#allocation7 + $0x290] sm:$0xf]
    %v305 = vld [vmem:[#allocation7 + $0x294] sm:$0xff]
    %v306 = vld [vmem:[#allocation7 + $0x29c] sm:$0xff]
    %v307 = vld [vmem:[#allocation7 + $0x2a4] sm:$0xf]
    %v308 = vld [vmem:[#allocation7 + $0x2a8] sm:$0xff]
    %v309 = vld [vmem:[#allocation7 + $0x2b0] sm:$0xff]
    %v310 = vld [vmem:[#allocation7 + $0x2b8] sm:$0xf]
    %v311 = vld [vmem:[#allocation7 + $0x2bc] sm:$0xff]
    %v312 = vld [vmem:[#allocation7 + $0x2c4] sm:$0xff]
    %v313 = vld [vmem:[#allocation7 + $0x2cc] sm:$0xf]
    %v314 = vld [vmem:[#allocation7 + $0x2d0] sm:$0xff]
    %v315 = vld [vmem:[#allocation7 + $0x2d8] sm:$0xff]
    %v316 = vld [vmem:[#allocation7 + $0x2e0] sm:$0xf]
    %v317 = vld [vmem:[#allocation7 + $0x2e4] sm:$0xff]
    %v318 = vld [vmem:[#allocation7 + $0x2ec] sm:$0xff]
    %v319 = vld [vmem:[#allocation7 + $0x2f4] sm:$0xf]
    %v320 = vld [vmem:[#allocation7 + $0x2f8] sm:$0xff]
    %v321 = vld [vmem:[#allocation7 + $0x300] sm:$0xff]
    %v322 = vld [vmem:[#allocation7 + $0x308] sm:$0xf]
    %v323 = vld [vmem:[#allocation7 + $0x30c] sm:$0xff]
    %v324 = vld [vmem:[#allocation7 + $0x314] sm:$0xff]
    %v325 = vld [vmem:[#allocation7 + $0x31c] sm:$0xf]
    %v326 = vld [vmem:[#allocation7 + $0x320] sm:$0xff]
    %v327 = vld [vmem:[#allocation7 + $0x328] sm:$0xff]
    %v328 = vld [vmem:[#allocation7 + $0x330] sm:$0xf]
    %v329 = vld [vmem:[#allocation7 + $0x334] sm:$0xff]
    %v330 = vld [vmem:[#allocation7 + $0x33c] sm:$0xff]
    %v331 = vld [vmem:[#allocation7 + $0x344] sm:$0xf]
    %v332 = vld [vmem:[#allocation7 + $0x348] sm:$0xff]
    %v333 = vld [vmem:[#allocation7 + $0x350] sm:$0xff]
    %v334 = vld [vmem:[#allocation7 + $0x358] sm:$0xf]
    %v335 = vld [vmem:[#allocation7 + $0x35c] sm:$0xff]
    %v336 = vld [vmem:[#allocation7 + $0x364] sm:$0xff]
    %v337 = vld [vmem:[#allocation7 + $0x36c] sm:$0xf]
    %v338 = vld [vmem:[#allocation7 + $0x370] sm:$0xff]
    %v339 = vld [vmem:[#allocation7 + $0x378] sm:$0xff]
    %v340 = vld [vmem:[#allocation7 + $0x380] sm:$0xf]
    %v341 = vld [vmem:[#allocation7 + $0x384] sm:$0xff]
    %v342 = vld [vmem:[#allocation7 + $0x38c] sm:$0xff]
    %v343 = vld [vmem:[#allocation7 + $0x394] sm:$0xf]
    %v344 = vld [vmem:[#allocation7 + $0x398] sm:$0xff]
    %v345 = vld [vmem:[#allocation7 + $0x3a0] sm:$0xff]
    %v346 = vld [vmem:[#allocation7 + $0x3a8] sm:$0xf]
    %v347 = vld [vmem:[#allocation7 + $0x3ac] sm:$0xff]
    %v348 = vld [vmem:[#allocation7 + $0x3b4] sm:$0xff]
    %v349 = vld [vmem:[#allocation7 + $0x3bc] sm:$0xf]
    %v350 = vld [vmem:[#allocation7 + $0x3c0] sm:$0xff]
    %v351 = vld [vmem:[#allocation7 + $0x3c8] sm:$0xff]
    %v352 = vld [vmem:[#allocation7 + $0x3d0] sm:$0xf]
    %v353 = vld [vmem:[#allocation7 + $0x3d4] sm:$0xff]
    %v354 = vld [vmem:[#allocation7 + $0x3dc] sm:$0xff]
    %v355 = vld [vmem:[#allocation7 + $0x3e4] sm:$0xf]
    %v356 = vld [vmem:[#allocation7 + $0x3e8] sm:$0xff]
    %v357 = vld [vmem:[#allocation7 + $0x3f0] sm:$0xff]
    %v358 = vld [vmem:[#allocation7 + $0x3f8] sm:$0xf]
    %v359 = vld [vmem:[#allocation7 + $0x3fc] sm:$0xff]
    %v360 = vld [vmem:[#allocation7 + $0x404] sm:$0xff]
    %v361 = vld [vmem:[#allocation7 + $0x40c] sm:$0xf]
    %v362 = vld [vmem:[#allocation7 + $0x410] sm:$0xff]
    %v363 = vld [vmem:[#allocation7 + $0x418] sm:$0xff]
    %v364 = vld [vmem:[#allocation7 + $0x420] sm:$0xf]
    %v365 = vld [vmem:[#allocation7 + $0x424] sm:$0xff]
    %v366 = vld [vmem:[#allocation7 + $0x42c] sm:$0xff]
    %v367 = vld [vmem:[#allocation7 + $0x434] sm:$0xf]
    %v368 = vld [vmem:[#allocation7 + $0x438] sm:$0xff]
    %v369 = vld [vmem:[#allocation7 + $0x440] sm:$0xff]
    %v370 = vld [vmem:[#allocation7 + $0x448] sm:$0xf]
    %v371 = vld [vmem:[#allocation7 + $0x44c] sm:$0xff]
    %v372 = vld [vmem:[#allocation7 + $0x454] sm:$0xff]
    %v373 = vld [vmem:[#allocation7 + $0x45c] sm:$0xf]
    %v374 = vld [vmem:[#allocation7 + $0x460] sm:$0xff]
    %v375 = vld [vmem:[#allocation7 + $0x468] sm:$0xff]
    %v376 = vld [vmem:[#allocation7 + $0x470] sm:$0xf]
    %v377 = vld [vmem:[#allocation7 + $0x474] sm:$0xff]
    %v378 = vld [vmem:[#allocation7 + $0x47c] sm:$0xff]
    %v379 = vld [vmem:[#allocation7 + $0x484] sm:$0xf]
    %v380 = vld [vmem:[#allocation7 + $0x488] sm:$0xff]
    %v381 = vld [vmem:[#allocation7 + $0x490] sm:$0xff]
    %v382 = vld [vmem:[#allocation7 + $0x498] sm:$0xf]
    %v383 = vld [vmem:[#allocation7 + $0x49c] sm:$0xff]
    %v384 = vld [vmem:[#allocation7 + $0x4a4] sm:$0xff]
    %v385 = vld [vmem:[#allocation7 + $0x4ac] sm:$0xf]
    %v386 = vld [vmem:[#allocation7 + $0x4b0] sm:$0xff]
    %v387 = vld [vmem:[#allocation7 + $0x4b8] sm:$0xff]
    %v388 = vld [vmem:[#allocation7 + $0x4c0] sm:$0xf]
    %v389 = vld [vmem:[#allocation7 + $0x4c4] sm:$0xff]
    %v390 = vld [vmem:[#allocation7 + $0x4cc] sm:$0xff]
    %v391 = vld [vmem:[#allocation7 + $0x4d4] sm:$0xf]
    %v392 = vld [vmem:[#allocation7 + $0x4d8] sm:$0xff]
    %v393 = vld [vmem:[#allocation7 + $0x4e0] sm:$0xff]
    %v394 = vld [vmem:[#allocation7 + $0x4e8] sm:$0xf]
    %v395 = vld [vmem:[#allocation7 + $0x4ec] sm:$0xff]
    %v396 = vld [vmem:[#allocation7 + $0x4f4] sm:$0xff]
    %v397 = vld [vmem:[#allocation7 + $0x4fc] sm:$0xf]
    %v398 = vld [vmem:[#allocation7 + $0x500] sm:$0xff]
    %v399 = vld [vmem:[#allocation7 + $0x508] sm:$0xff]
    %v400 = vld [vmem:[#allocation7 + $0x510] sm:$0xf]
    %v401 = vld [vmem:[#allocation7 + $0x514] sm:$0xff]
    %v402 = vld [vmem:[#allocation7 + $0x51c] sm:$0xff]
    %v403 = vld [vmem:[#allocation7 + $0x524] sm:$0xf]
    %v404 = vld [vmem:[#allocation7 + $0x528] sm:$0xff]
    %v405 = vld [vmem:[#allocation7 + $0x530] sm:$0xff]
    %v406 = vld [vmem:[#allocation7 + $0x538] sm:$0xf]
    %v407 = vld [vmem:[#allocation7 + $0x53c] sm:$0xff]
    %v408 = vld [vmem:[#allocation7 + $0x544] sm:$0xff]
    %v409 = vld [vmem:[#allocation7 + $0x54c] sm:$0xf]
    %v410 = vld [vmem:[#allocation7 + $0x550] sm:$0xff]
    %v411 = vld [vmem:[#allocation7 + $0x558] sm:$0xff]
    %v412 = vld [vmem:[#allocation7 + $0x560] sm:$0xf]
    %v413 = vld [vmem:[#allocation7 + $0x564] sm:$0xff]
    %v414 = vld [vmem:[#allocation7 + $0x56c] sm:$0xff]
    %v415 = vld [vmem:[#allocation7 + $0x574] sm:$0xf]
    %v416 = vld [vmem:[#allocation7 + $0x578] sm:$0xff]
    %v417 = vld [vmem:[#allocation7 + $0x580] sm:$0xff]
    %v418 = vld [vmem:[#allocation7 + $0x588] sm:$0xf]
    %v419 = vld [vmem:[#allocation7 + $0x58c] sm:$0xff]
    %v420 = vld [vmem:[#allocation7 + $0x594] sm:$0xff]
    %v421 = vld [vmem:[#allocation7 + $0x59c] sm:$0xf]
    %v422 = vld [vmem:[#allocation7 + $0x5a0] sm:$0xff]
    %v423 = vld [vmem:[#allocation7 + $0x5a8] sm:$0xff]
    %v424 = vld [vmem:[#allocation7 + $0x5b0] sm:$0xf]
    %v425 = vld [vmem:[#allocation7 + $0x5b4] sm:$0xff]
    %v426 = vld [vmem:[#allocation7 + $0x5bc] sm:$0xff]
    %v427 = vld [vmem:[#allocation7 + $0x5c4] sm:$0xf]
    %v428 = vld [vmem:[#allocation7 + $0x5c8] sm:$0xff]
    %v429 = vld [vmem:[#allocation7 + $0x5d0] sm:$0xff]
    %v430 = vld [vmem:[#allocation7 + $0x5d8] sm:$0xf]
    %v431 = vld [vmem:[#allocation7 + $0x5dc] sm:$0xff]
    %v432 = vld [vmem:[#allocation7 + $0x5e4] sm:$0xff]
    %v433 = vld [vmem:[#allocation7 + $0x5ec] sm:$0xf]
    %v434 = vld [vmem:[#allocation7 + $0x5f0] sm:$0xff]
    %v435 = vld [vmem:[#allocation7 + $0x5f8] sm:$0xff]
    %v436 = vld [vmem:[#allocation7 + $0x600] sm:$0xf]
    %v437 = vld [vmem:[#allocation7 + $0x604] sm:$0xff]
    %v438 = vld [vmem:[#allocation7 + $0x60c] sm:$0xff]
    %v439 = vld [vmem:[#allocation7 + $0x614] sm:$0xf]
    %v440 = vld [vmem:[#allocation7 + $0x618] sm:$0xff]
    %v441 = vld [vmem:[#allocation7 + $0x620] sm:$0xff]
    %v442 = vld [vmem:[#allocation7 + $0x628] sm:$0xf]
    %v443 = vld [vmem:[#allocation7 + $0x62c] sm:$0xff]
    %v444 = vld [vmem:[#allocation7 + $0x634] sm:$0xff]
    %v445 = vld [vmem:[#allocation7 + $0x63c] sm:$0xf]
    %v446 = vld [vmem:[#allocation7 + $0x640] sm:$0xff]
    %v447 = vld [vmem:[#allocation7 + $0x648] sm:$0xff]
    %v448 = vld [vmem:[#allocation7 + $0x650] sm:$0xf]
    %v449 = vld [vmem:[#allocation7 + $0x654] sm:$0xff]
    %v450 = vld [vmem:[#allocation7 + $0x65c] sm:$0xff]
    %v451 = vld [vmem:[#allocation7 + $0x664] sm:$0xf]
    %v452 = vld [vmem:[#allocation7 + $0x668] sm:$0xff]
    %v453 = vld [vmem:[#allocation7 + $0x670] sm:$0xff]
    %v454 = vld [vmem:[#allocation7 + $0x678] sm:$0xf]
    %v455 = vld [vmem:[#allocation7 + $0x67c] sm:$0xff]
    %v456 = vld [vmem:[#allocation7 + $0x684] sm:$0xff]
    %v457 = vld [vmem:[#allocation7 + $0x68c] sm:$0xf]
    %v458 = vld [vmem:[#allocation7 + $0x690] sm:$0xff]
    %v459 = vld [vmem:[#allocation7 + $0x698] sm:$0xff]
    %v460 = vld [vmem:[#allocation7 + $0x6a0] sm:$0xf]
    %v461 = vld [vmem:[#allocation7 + $0x6a4] sm:$0xff]
    %v462 = vld [vmem:[#allocation7 + $0x6ac] sm:$0xff]
    %v463 = vld [vmem:[#allocation7 + $0x6b4] sm:$0xf]
    %v464 = vld [vmem:[#allocation7 + $0x6b8] sm:$0xff]
    %v465 = vld [vmem:[#allocation7 + $0x6c0] sm:$0xff]
    %v466 = vld [vmem:[#allocation7 + $0x6c8] sm:$0xf]
    %v467 = vld [vmem:[#allocation7 + $0x6cc] sm:$0xff]
    %v468 = vld [vmem:[#allocation7 + $0x6d4] sm:$0xff]
    %v469 = vld [vmem:[#allocation7 + $0x6dc] sm:$0xf]
    %v470 = vld [vmem:[#allocation7 + $0x6e0] sm:$0xff]
    %v471 = vld [vmem:[#allocation7 + $0x6e8] sm:$0xff]
    %v472 = vld [vmem:[#allocation7 + $0x6f0] sm:$0xf]
    %v473 = vld [vmem:[#allocation7 + $0x6f4] sm:$0xff]
    %v474 = vld [vmem:[#allocation7 + $0x6fc] sm:$0xff]
    %v475 = vld [vmem:[#allocation7 + $0x704] sm:$0xf]
    %v476 = vld [vmem:[#allocation7 + $0x708] sm:$0xff]
    %v477 = vld [vmem:[#allocation7 + $0x710] sm:$0xff]
    %v478 = vld [vmem:[#allocation7 + $0x718] sm:$0xf]
    %v479 = vld [vmem:[#allocation7 + $0x71c] sm:$0xff]
    %v480 = vld [vmem:[#allocation7 + $0x724] sm:$0xff]
    %v481 = vld [vmem:[#allocation7 + $0x72c] sm:$0xf]
    %v482 = vld [vmem:[#allocation7 + $0x730] sm:$0xff]
    %v483 = vld [vmem:[#allocation7 + $0x738] sm:$0xff]
    %v484 = vld [vmem:[#allocation7 + $0x740] sm:$0xf]
    %v485 = vld [vmem:[#allocation7 + $0x744] sm:$0xff]
    %v486 = vld [vmem:[#allocation7 + $0x74c] sm:$0xff]
    %v487 = vld [vmem:[#allocation7 + $0x754] sm:$0xf]
    %v488 = vld [vmem:[#allocation7 + $0x758] sm:$0xff]
    %v489 = vld [vmem:[#allocation7 + $0x760] sm:$0xff]
    %v490 = vld [vmem:[#allocation7 + $0x768] sm:$0xf]
    %v491 = vld [vmem:[#allocation7 + $0x76c] sm:$0xff]
    %v492 = vld [vmem:[#allocation7 + $0x774] sm:$0xff]
    %v493 = vld [vmem:[#allocation7 + $0x77c] sm:$0xf]
    %v494 = vld [vmem:[#allocation7 + $0x780] sm:$0xff]
    %v495 = vld [vmem:[#allocation7 + $0x788] sm:$0xff]
    %v496 = vld [vmem:[#allocation7 + $0x790] sm:$0xf]
    %v497 = vld [vmem:[#allocation7 + $0x794] sm:$0xff]
    %v498 = vld [vmem:[#allocation7 + $0x79c] sm:$0xff]
    %v499 = vld [vmem:[#allocation7 + $0x7a4] sm:$0xf]
    %v500 = vld [vmem:[#allocation7 + $0x7a8] sm:$0xff]
    %v501 = vld [vmem:[#allocation7 + $0x7b0] sm:$0xff]
    %v502 = vld [vmem:[#allocation7 + $0x7b8] sm:$0xf]
    %v503 = vld [vmem:[#allocation7 + $0x7bc] sm:$0xff]
    %v504 = vld [vmem:[#allocation7 + $0x7c4] sm:$0xff]
    %v505 = vld [vmem:[#allocation7 + $0x7cc] sm:$0xf]
    %v506 = vld [vmem:[#allocation7 + $0x7d0] sm:$0xff]
    %v507 = vld [vmem:[#allocation7 + $0x7d8] sm:$0xff]
    %v508 = vld [vmem:[#allocation7 + $0x7e0] sm:$0xf]
    %v509 = vld [vmem:[#allocation7 + $0x7e4] sm:$0xff]
    %v510 = vld [vmem:[#allocation7 + $0x7ec] sm:$0xff]
    %v511 = vld [vmem:[#allocation7 + $0x7f4] sm:$0xf]
    %v512 = vld [vmem:[#allocation7 + $0x7f8] sm:$0xff]
    %v513 = vld [vmem:[#allocation7 + $0x800] sm:$0xff]
    %v514 = vld [vmem:[#allocation7 + $0x808] sm:$0xf]
    %v515 = vld [vmem:[#allocation7 + $0x80c] sm:$0xff]
    %v516 = vld [vmem:[#allocation7 + $0x814] sm:$0xff]
    %v517 = vld [vmem:[#allocation7 + $0x81c] sm:$0xf]
    %v518 = vld [vmem:[#allocation7 + $0x820] sm:$0xff]
    %v519 = vld [vmem:[#allocation7 + $0x828] sm:$0xff]
    %v520 = vld [vmem:[#allocation7 + $0x830] sm:$0xf]
    %v521 = vld [vmem:[#allocation7 + $0x834] sm:$0xff]
    %v522 = vld [vmem:[#allocation7 + $0x83c] sm:$0xff]
    %v523 = vld [vmem:[#allocation7 + $0x844] sm:$0xf]
    %v524 = vld [vmem:[#allocation7 + $0x848] sm:$0xff]
    %v525 = vld [vmem:[#allocation7 + $0x850] sm:$0xff]
    %v526 = vld [vmem:[#allocation7 + $0x858] sm:$0xf]
    %v527 = vld [vmem:[#allocation7 + $0x85c] sm:$0xff]
    %v528 = vld [vmem:[#allocation7 + $0x864] sm:$0xff]
    %v529 = vld [vmem:[#allocation7 + $0x86c] sm:$0xf]
    %v530 = vld [vmem:[#allocation7 + $0x870] sm:$0xff]
    %v531 = vld [vmem:[#allocation7 + $0x878] sm:$0xff]
    %v532 = vld [vmem:[#allocation7 + $0x880] sm:$0xf]
    %v533 = vld [vmem:[#allocation7 + $0x884] sm:$0xff]
    %v534 = vld [vmem:[#allocation7 + $0x88c] sm:$0xff]
    %v535 = vld [vmem:[#allocation7 + $0x894] sm:$0xf]
    %v536 = vld [vmem:[#allocation7 + $0x898] sm:$0xff]
    %v537 = vld [vmem:[#allocation7 + $0x8a0] sm:$0xff]
    %v538 = vld [vmem:[#allocation7 + $0x8a8] sm:$0xf]
    %v539 = vld [vmem:[#allocation7 + $0x8ac] sm:$0xff]
    %v540 = vld [vmem:[#allocation7 + $0x8b4] sm:$0xff]
    %v541 = vld [vmem:[#allocation7 + $0x8bc] sm:$0xf]
    %v546 = vunpack.c.l.b16 %v202
    %v547 = vunpack.c.h.b16 %v202
    %v548 = vunpack.c.l.b16 %v203
    %v549 = vunpack.c.h.b16 %v203
    %v550 = vunpack.c.l.b16 %v204
    %v551 = vunpack.c.h.b16 %v204
    %v552 = vunpack.c.l.b16 %v205
    %v553 = vpack.c.b16 %v546, %v546
    %v554 = vpack.c.b16 %v547, %v547
    %v555 = vpack.c.b16 %v548, %v548
    %v556 = vpack.c.b16 %v549, %v549
    %v557 = vpack.c.b16 %v550, %v550
    %v558 = vpack.c.b16 %v551, %v551
    %v559 = vpack.c.b16 %v552, %v552
    %v903 = vunpack.c.l.b16 %v206
    %v904 = vunpack.c.h.b16 %v206
    %v905 = vunpack.c.l.b16 %v207
    %v906 = vunpack.c.h.b16 %v207
    %v907 = vunpack.c.l.b16 %v208
    %v908 = vunpack.c.l.b16 %v209
    %v909 = vunpack.c.h.b16 %v209
    %v910 = vunpack.c.l.b16 %v210
    %v911 = vunpack.c.h.b16 %v210
    %v912 = vunpack.c.l.b16 %v211
    %v913 = vunpack.c.l.b16 %v212
    %v914 = vunpack.c.h.b16 %v212
    %v915 = vunpack.c.l.b16 %v213
    %v916 = vunpack.c.h.b16 %v213
    %v917 = vunpack.c.l.b16 %v214
    %v918 = vunpack.c.l.b16 %v215
    %v919 = vunpack.c.h.b16 %v215
    %v920 = vunpack.c.l.b16 %v216
    %v921 = vunpack.c.h.b16 %v216
    %v922 = vunpack.c.l.b16 %v217
    %v923 = vunpack.c.l.b16 %v218
    %v924 = vunpack.c.h.b16 %v218
    %v925 = vunpack.c.l.b16 %v219
    %v926 = vunpack.c.h.b16 %v219
    %v927 = vunpack.c.l.b16 %v220
    %v928 = vunpack.c.l.b16 %v221
    %v929 = vunpack.c.h.b16 %v221
    %v930 = vunpack.c.l.b16 %v222
    %v931 = vunpack.c.h.b16 %v222
    %v932 = vunpack.c.l.b16 %v223
    %v933 = vunpack.c.l.b16 %v224
    %v934 = vunpack.c.h.b16 %v224
    %v935 = vunpack.c.l.b16 %v225
    %v936 = vunpack.c.h.b16 %v225
    %v937 = vunpack.c.l.b16 %v226
    %v938 = vunpack.c.l.b16 %v227
    %v939 = vunpack.c.h.b16 %v227
    %v940 = vunpack.c.l.b16 %v228
    %v941 = vunpack.c.h.b16 %v228
    %v942 = vunpack.c.l.b16 %v229
    %v943 = vunpack.c.l.b16 %v230
    %v944 = vunpack.c.h.b16 %v230
    %v945 = vunpack.c.l.b16 %v231
    %v946 = vunpack.c.h.b16 %v231
    %v947 = vunpack.c.l.b16 %v232
    %v948 = vunpack.c.l.b16 %v233
    %v949 = vunpack.c.h.b16 %v233
    %v950 = vunpack.c.l.b16 %v234
    %v951 = vunpack.c.h.b16 %v234
    %v952 = vunpack.c.l.b16 %v235
    %v953 = vunpack.c.l.b16 %v236
    %v954 = vunpack.c.h.b16 %v236
    %v955 = vunpack.c.l.b16 %v237
    %v956 = vunpack.c.h.b16 %v237
    %v957 = vunpack.c.l.b16 %v238
    %v958 = vunpack.c.l.b16 %v239
    %v959 = vunpack.c.h.b16 %v239
    %v960 = vunpack.c.l.b16 %v240
    %v961 = vunpack.c.h.b16 %v240
    %v962 = vunpack.c.l.b16 %v241
    %v963 = vunpack.c.l.b16 %v242
    %v964 = vunpack.c.h.b16 %v242
    %v965 = vunpack.c.l.b16 %v243
    %v966 = vunpack.c.h.b16 %v243
    %v967 = vunpack.c.l.b16 %v244
    %v968 = vunpack.c.l.b16 %v245
    %v969 = vunpack.c.h.b16 %v245
    %v970 = vunpack.c.l.b16 %v246
    %v971 = vunpack.c.h.b16 %v246
    %v972 = vunpack.c.l.b16 %v247
    %v973 = vunpack.c.l.b16 %v248
    %v974 = vunpack.c.h.b16 %v248
    %v975 = vunpack.c.l.b16 %v249
    %v976 = vunpack.c.h.b16 %v249
    %v977 = vunpack.c.l.b16 %v250
    %v978 = vunpack.c.l.b16 %v251
    %v979 = vunpack.c.h.b16 %v251
    %v980 = vunpack.c.l.b16 %v252
    %v981 = vunpack.c.h.b16 %v252
    %v982 = vunpack.c.l.b16 %v253
    %v983 = vunpack.c.l.b16 %v254
    %v984 = vunpack.c.h.b16 %v254
    %v985 = vunpack.c.l.b16 %v255
    %v986 = vunpack.c.h.b16 %v255
    %v987 = vunpack.c.l.b16 %v256
    %v988 = vunpack.c.l.b16 %v257
    %v989 = vunpack.c.h.b16 %v257
    %v990 = vunpack.c.l.b16 %v258
    %v991 = vunpack.c.h.b16 %v258
    %v992 = vunpack.c.l.b16 %v259
    %v993 = vunpack.c.l.b16 %v260
    %v994 = vunpack.c.h.b16 %v260
    %v995 = vunpack.c.l.b16 %v261
    %v996 = vunpack.c.h.b16 %v261
    %v997 = vunpack.c.l.b16 %v262
    %v998 = vunpack.c.l.b16 %v263
    %v999 = vunpack.c.h.b16 %v263
    %v1000 = vunpack.c.l.b16 %v264
    %v1001 = vunpack.c.h.b16 %v264
    %v1002 = vunpack.c.l.b16 %v265
    %v1003 = vunpack.c.l.b16 %v266
    %v1004 = vunpack.c.h.b16 %v266
    %v1005 = vunpack.c.l.b16 %v267
    %v1006 = vunpack.c.h.b16 %v267
    %v1007 = vunpack.c.l.b16 %v268
    %v1008 = vunpack.c.l.b16 %v269
    %v1009 = vunpack.c.h.b16 %v269
    %v1010 = vunpack.c.l.b16 %v270
    %v1011 = vunpack.c.h.b16 %v270
    %v1012 = vunpack.c.l.b16 %v271
    %v1013 = vunpack.c.l.b16 %v272
    %v1014 = vunpack.c.h.b16 %v272
    %v1015 = vunpack.c.l.b16 %v273
    %v1016 = vunpack.c.h.b16 %v273
    %v1017 = vunpack.c.l.b16 %v274
    %v1018 = vunpack.c.l.b16 %v275
    %v1019 = vunpack.c.h.b16 %v275
    %v1020 = vunpack.c.l.b16 %v276
    %v1021 = vunpack.c.h.b16 %v276
    %v1022 = vunpack.c.l.b16 %v277
    %v1023 = vunpack.c.l.b16 %v278
    %v1024 = vunpack.c.h.b16 %v278
    %v1025 = vunpack.c.l.b16 %v279
    %v1026 = vunpack.c.h.b16 %v279
    %v1027 = vunpack.c.l.b16 %v280
    %v1028 = vunpack.c.l.b16 %v281
    %v1029 = vunpack.c.h.b16 %v281
    %v1030 = vunpack.c.l.b16 %v282
    %v1031 = vunpack.c.h.b16 %v282
    %v1032 = vunpack.c.l.b16 %v283
    %v1033 = vunpack.c.l.b16 %v284
    %v1034 = vunpack.c.h.b16 %v284
    %v1035 = vunpack.c.l.b16 %v285
    %v1036 = vunpack.c.h.b16 %v285
    %v1037 = vunpack.c.l.b16 %v286
    %v1038 = vunpack.c.l.b16 %v287
    %v1039 = vunpack.c.h.b16 %v287
    %v1040 = vunpack.c.l.b16 %v288
    %v1041 = vunpack.c.h.b16 %v288
    %v1042 = vunpack.c.l.b16 %v289
    %v1043 = vunpack.c.l.b16 %v290
    %v1044 = vunpack.c.h.b16 %v290
    %v1045 = vunpack.c.l.b16 %v291
    %v1046 = vunpack.c.h.b16 %v291
    %v1047 = vunpack.c.l.b16 %v292
    %v1048 = vunpack.c.l.b16 %v293
    %v1049 = vunpack.c.h.b16 %v293
    %v1050 = vunpack.c.l.b16 %v294
    %v1051 = vunpack.c.h.b16 %v294
    %v1052 = vunpack.c.l.b16 %v295
    %v1053 = vunpack.c.l.b16 %v296
    %v1054 = vunpack.c.h.b16 %v296
    %v1055 = vunpack.c.l.b16 %v297
    %v1056 = vunpack.c.h.b16 %v297
    %v1057 = vunpack.c.l.b16 %v298
    %v1058 = vunpack.c.l.b16 %v299
    %v1059 = vunpack.c.h.b16 %v299
    %v1060 = vunpack.c.l.b16 %v300
    %v1061 = vunpack.c.h.b16 %v300
    %v1062 = vunpack.c.l.b16 %v301
    %v1063 = vunpack.c.l.b16 %v302
    %v1064 = vunpack.c.h.b16 %v302
    %v1065 = vunpack.c.l.b16 %v303
    %v1066 = vunpack.c.h.b16 %v303
    %v1067 = vunpack.c.l.b16 %v304
    %v1068 = vunpack.c.l.b16 %v305
    %v1069 = vunpack.c.h.b16 %v305
    %v1070 = vunpack.c.l.b16 %v306
    %v1071 = vunpack.c.h.b16 %v306
    %v1072 = vunpack.c.l.b16 %v307
    %v1073 = vunpack.c.l.b16 %v308
    %v1074 = vunpack.c.h.b16 %v308
    %v1075 = vunpack.c.l.b16 %v309
    %v1076 = vunpack.c.h.b16 %v309
    %v1077 = vunpack.c.l.b16 %v310
    %v1078 = vunpack.c.l.b16 %v311
    %v1079 = vunpack.c.h.b16 %v311
    %v1080 = vunpack.c.l.b16 %v312
    %v1081 = vunpack.c.h.b16 %v312
    %v1082 = vunpack.c.l.b16 %v313
    %v1083 = vunpack.c.l.b16 %v314
    %v1084 = vunpack.c.h.b16 %v314
    %v1085 = vunpack.c.l.b16 %v315
    %v1086 = vunpack.c.h.b16 %v315
    %v1087 = vunpack.c.l.b16 %v316
    %v1088 = vunpack.c.l.b16 %v317
    %v1089 = vunpack.c.h.b16 %v317
    %v1090 = vunpack.c.l.b16 %v318
    %v1091 = vunpack.c.h.b16 %v318
    %v1092 = vunpack.c.l.b16 %v319
    %v1093 = vunpack.c.l.b16 %v320
    %v1094 = vunpack.c.h.b16 %v320
    %v1095 = vunpack.c.l.b16 %v321
    %v1096 = vunpack.c.h.b16 %v321
    %v1097 = vunpack.c.l.b16 %v322
    %v1098 = vunpack.c.l.b16 %v323
    %v1099 = vunpack.c.h.b16 %v323
    %v1100 = vunpack.c.l.b16 %v324
    %v1101 = vunpack.c.h.b16 %v324
    %v1102 = vunpack.c.l.b16 %v325
    %v1103 = vunpack.c.l.b16 %v326
    %v1104 = vunpack.c.h.b16 %v326
    %v1105 = vunpack.c.l.b16 %v327
    %v1106 = vunpack.c.h.b16 %v327
    %v1107 = vunpack.c.l.b16 %v328
    %v1108 = vunpack.c.l.b16 %v329
    %v1109 = vunpack.c.h.b16 %v329
    %v1110 = vunpack.c.l.b16 %v330
    %v1111 = vunpack.c.h.b16 %v330
    %v1112 = vunpack.c.l.b16 %v331
    %v1113 = vunpack.c.l.b16 %v332
    %v1114 = vunpack.c.h.b16 %v332
    %v1115 = vunpack.c.l.b16 %v333
    %v1116 = vunpack.c.h.b16 %v333
    %v1117 = vunpack.c.l.b16 %v334
    %v1118 = vunpack.c.l.b16 %v335
    %v1119 = vunpack.c.h.b16 %v335
    %v1120 = vunpack.c.l.b16 %v336
    %v1121 = vunpack.c.h.b16 %v336
    %v1122 = vunpack.c.l.b16 %v337
    %v1123 = vunpack.c.l.b16 %v338
    %v1124 = vunpack.c.h.b16 %v338
    %v1125 = vunpack.c.l.b16 %v339
    %v1126 = vunpack.c.h.b16 %v339
    %v1127 = vunpack.c.l.b16 %v340
    %v1128 = vunpack.c.l.b16 %v341
    %v1129 = vunpack.c.h.b16 %v341
    %v1130 = vunpack.c.l.b16 %v342
    %v1131 = vunpack.c.h.b16 %v342
    %v1132 = vunpack.c.l.b16 %v343
    %v1133 = vunpack.c.l.b16 %v344
    %v1134 = vunpack.c.h.b16 %v344
    %v1135 = vunpack.c.l.b16 %v345
    %v1136 = vunpack.c.h.b16 %v345
    %v1137 = vunpack.c.l.b16 %v346
    %v1138 = vunpack.c.l.b16 %v347
    %v1139 = vunpack.c.h.b16 %v347
    %v1140 = vunpack.c.l.b16 %v348
    %v1141 = vunpack.c.h.b16 %v348
    %v1142 = vunpack.c.l.b16 %v349
    %v1143 = vunpack.c.l.b16 %v350
    %v1144 = vunpack.c.h.b16 %v350
    %v1145 = vunpack.c.l.b16 %v351
    %v1146 = vunpack.c.h.b16 %v351
    %v1147 = vunpack.c.l.b16 %v352
    %v1148 = vunpack.c.l.b16 %v353
    %v1149 = vunpack.c.h.b16 %v353
    %v1150 = vunpack.c.l.b16 %v354
    %v1151 = vunpack.c.h.b16 %v354
    %v1152 = vunpack.c.l.b16 %v355
    %v1153 = vunpack.c.l.b16 %v356
    %v1154 = vunpack.c.h.b16 %v356
    %v1155 = vunpack.c.l.b16 %v357
    %v1156 = vunpack.c.h.b16 %v357
    %v1157 = vunpack.c.l.b16 %v358
    %v1158 = vunpack.c.l.b16 %v359
    %v1159 = vunpack.c.h.b16 %v359
    %v1160 = vunpack.c.l.b16 %v360
    %v1161 = vunpack.c.h.b16 %v360
    %v1162 = vunpack.c.l.b16 %v361
    %v1163 = vunpack.c.l.b16 %v362
    %v1164 = vunpack.c.h.b16 %v362
    %v1165 = vunpack.c.l.b16 %v363
    %v1166 = vunpack.c.h.b16 %v363
    %v1167 = vunpack.c.l.b16 %v364
    %v1168 = vunpack.c.l.b16 %v365
    %v1169 = vunpack.c.h.b16 %v365
    %v1170 = vunpack.c.l.b16 %v366
    %v1171 = vunpack.c.h.b16 %v366
    %v1172 = vunpack.c.l.b16 %v367
    %v1173 = vunpack.c.l.b16 %v368
    %v1174 = vunpack.c.h.b16 %v368
    %v1175 = vunpack.c.l.b16 %v369
    %v1176 = vunpack.c.h.b16 %v369
    %v1177 = vunpack.c.l.b16 %v370
    %v1178 = vunpack.c.l.b16 %v371
    %v1179 = vunpack.c.h.b16 %v371
    %v1180 = vunpack.c.l.b16 %v372
    %v1181 = vunpack.c.h.b16 %v372
    %v1182 = vunpack.c.l.b16 %v373
    %v1183 = vunpack.c.l.b16 %v374
    %v1184 = vunpack.c.h.b16 %v374
    %v1185 = vunpack.c.l.b16 %v375
    %v1186 = vunpack.c.h.b16 %v375
    %v1187 = vunpack.c.l.b16 %v376
    %v1188 = vunpack.c.l.b16 %v377
    %v1189 = vunpack.c.h.b16 %v377
    %v1190 = vunpack.c.l.b16 %v378
    %v1191 = vunpack.c.h.b16 %v378
    %v1192 = vunpack.c.l.b16 %v379
    %v1193 = vunpack.c.l.b16 %v380
    %v1194 = vunpack.c.h.b16 %v380
    %v1195 = vunpack.c.l.b16 %v381
    %v1196 = vunpack.c.h.b16 %v381
    %v1197 = vunpack.c.l.b16 %v382
    %v1198 = vunpack.c.l.b16 %v383
    %v1199 = vunpack.c.h.b16 %v383
    %v1200 = vunpack.c.l.b16 %v384
    %v1201 = vunpack.c.h.b16 %v384
    %v1202 = vunpack.c.l.b16 %v385
    %v1203 = vunpack.c.l.b16 %v386
    %v1204 = vunpack.c.h.b16 %v386
    %v1205 = vunpack.c.l.b16 %v387
    %v1206 = vunpack.c.h.b16 %v387
    %v1207 = vunpack.c.l.b16 %v388
    %v1208 = vunpack.c.l.b16 %v389
    %v1209 = vunpack.c.h.b16 %v389
    %v1210 = vunpack.c.l.b16 %v390
    %v1211 = vunpack.c.h.b16 %v390
    %v1212 = vunpack.c.l.b16 %v391
    %v1213 = vunpack.c.l.b16 %v392
    %v1214 = vunpack.c.h.b16 %v392
    %v1215 = vunpack.c.l.b16 %v393
    %v1216 = vunpack.c.h.b16 %v393
    %v1217 = vunpack.c.l.b16 %v394
    %v1218 = vunpack.c.l.b16 %v395
    %v1219 = vunpack.c.h.b16 %v395
    %v1220 = vunpack.c.l.b16 %v396
    %v1221 = vunpack.c.h.b16 %v396
    %v1222 = vunpack.c.l.b16 %v397
    %v1223 = vunpack.c.l.b16 %v398
    %v1224 = vunpack.c.h.b16 %v398
    %v1225 = vunpack.c.l.b16 %v399
    %v1226 = vunpack.c.h.b16 %v399
    %v1227 = vunpack.c.l.b16 %v400
    %v1228 = vunpack.c.l.b16 %v401
    %v1229 = vunpack.c.h.b16 %v401
    %v1230 = vunpack.c.l.b16 %v402
    %v1231 = vunpack.c.h.b16 %v402
    %v1232 = vunpack.c.l.b16 %v403
    %v1233 = vunpack.c.l.b16 %v404
    %v1234 = vunpack.c.h.b16 %v404
    %v1235 = vunpack.c.l.b16 %v405
    %v1236 = vunpack.c.h.b16 %v405
    %v1237 = vunpack.c.l.b16 %v406
    %v1238 = vunpack.c.l.b16 %v407
    %v1239 = vunpack.c.h.b16 %v407
    %v1240 = vunpack.c.l.b16 %v408
    %v1241 = vunpack.c.h.b16 %v408
    %v1242 = vunpack.c.l.b16 %v409
    %v1243 = vunpack.c.l.b16 %v410
    %v1244 = vunpack.c.h.b16 %v410
    %v1245 = vunpack.c.l.b16 %v411
    %v1246 = vunpack.c.h.b16 %v411
    %v1247 = vunpack.c.l.b16 %v412
    %v1248 = vunpack.c.l.b16 %v413
    %v1249 = vunpack.c.h.b16 %v413
    %v1250 = vunpack.c.l.b16 %v414
    %v1251 = vunpack.c.h.b16 %v414
    %v1252 = vunpack.c.l.b16 %v415
    %v1253 = vunpack.c.l.b16 %v416
    %v1254 = vunpack.c.h.b16 %v416
    %v1255 = vunpack.c.l.b16 %v417
    %v1256 = vunpack.c.h.b16 %v417
    %v1257 = vunpack.c.l.b16 %v418
    %v1258 = vunpack.c.l.b16 %v419
    %v1259 = vunpack.c.h.b16 %v419
    %v1260 = vunpack.c.l.b16 %v420
    %v1261 = vunpack.c.h.b16 %v420
    %v1262 = vunpack.c.l.b16 %v421
    %v1263 = vunpack.c.l.b16 %v422
    %v1264 = vunpack.c.h.b16 %v422
    %v1265 = vunpack.c.l.b16 %v423
    %v1266 = vunpack.c.h.b16 %v423
    %v1267 = vunpack.c.l.b16 %v424
    %v1268 = vunpack.c.l.b16 %v425
    %v1269 = vunpack.c.h.b16 %v425
    %v1270 = vunpack.c.l.b16 %v426
    %v1271 = vunpack.c.h.b16 %v426
    %v1272 = vunpack.c.l.b16 %v427
    %v1273 = vunpack.c.l.b16 %v428
    %v1274 = vunpack.c.h.b16 %v428
    %v1275 = vunpack.c.l.b16 %v429
    %v1276 = vunpack.c.h.b16 %v429
    %v1277 = vunpack.c.l.b16 %v430
    %v1278 = vunpack.c.l.b16 %v431
    %v1279 = vunpack.c.h.b16 %v431
    %v1280 = vunpack.c.l.b16 %v432
    %v1281 = vunpack.c.h.b16 %v432
    %v1282 = vunpack.c.l.b16 %v433
    %v1283 = vunpack.c.l.b16 %v434
    %v1284 = vunpack.c.h.b16 %v434
    %v1285 = vunpack.c.l.b16 %v435
    %v1286 = vunpack.c.h.b16 %v435
    %v1287 = vunpack.c.l.b16 %v436
    %v1288 = vunpack.c.l.b16 %v437
    %v1289 = vunpack.c.h.b16 %v437
    %v1290 = vunpack.c.l.b16 %v438
    %v1291 = vunpack.c.h.b16 %v438
    %v1292 = vunpack.c.l.b16 %v439
    %v1293 = vunpack.c.l.b16 %v440
    %v1294 = vunpack.c.h.b16 %v440
    %v1295 = vunpack.c.l.b16 %v441
    %v1296 = vunpack.c.h.b16 %v441
    %v1297 = vunpack.c.l.b16 %v442
    %v1298 = vunpack.c.l.b16 %v443
    %v1299 = vunpack.c.h.b16 %v443
    %v1300 = vunpack.c.l.b16 %v444
    %v1301 = vunpack.c.h.b16 %v444
    %v1302 = vunpack.c.l.b16 %v445
    %v1303 = vunpack.c.l.b16 %v446
    %v1304 = vunpack.c.h.b16 %v446
    %v1305 = vunpack.c.l.b16 %v447
    %v1306 = vunpack.c.h.b16 %v447
    %v1307 = vunpack.c.l.b16 %v448
    %v1308 = vunpack.c.l.b16 %v449
    %v1309 = vunpack.c.h.b16 %v449
    %v1310 = vunpack.c.l.b16 %v450
    %v1311 = vunpack.c.h.b16 %v450
    %v1312 = vunpack.c.l.b16 %v451
    %v1313 = vunpack.c.l.b16 %v452
    %v1314 = vunpack.c.h.b16 %v452
    %v1315 = vunpack.c.l.b16 %v453
    %v1316 = vunpack.c.h.b16 %v453
    %v1317 = vunpack.c.l.b16 %v454
    %v1318 = vunpack.c.l.b16 %v455
    %v1319 = vunpack.c.h.b16 %v455
    %v1320 = vunpack.c.l.b16 %v456
    %v1321 = vunpack.c.h.b16 %v456
    %v1322 = vunpack.c.l.b16 %v457
    %v1323 = vunpack.c.l.b16 %v458
    %v1324 = vunpack.c.h.b16 %v458
    %v1325 = vunpack.c.l.b16 %v459
    %v1326 = vunpack.c.h.b16 %v459
    %v1327 = vunpack.c.l.b16 %v460
    %v1328 = vunpack.c.l.b16 %v461
    %v1329 = vunpack.c.h.b16 %v461
    %v1330 = vunpack.c.l.b16 %v462
    %v1331 = vunpack.c.h.b16 %v462
    %v1332 = vunpack.c.l.b16 %v463
    %v1333 = vunpack.c.l.b16 %v464
    %v1334 = vunpack.c.h.b16 %v464
    %v1335 = vunpack.c.l.b16 %v465
    %v1336 = vunpack.c.h.b16 %v465
    %v1337 = vunpack.c.l.b16 %v466
    %v1338 = vunpack.c.l.b16 %v467
    %v1339 = vunpack.c.h.b16 %v467
    %v1340 = vunpack.c.l.b16 %v468
    %v1341 = vunpack.c.h.b16 %v468
    %v1342 = vunpack.c.l.b16 %v469
    %v1343 = vunpack.c.l.b16 %v470
    %v1344 = vunpack.c.h.b16 %v470
    %v1345 = vunpack.c.l.b16 %v471
    %v1346 = vunpack.c.h.b16 %v471
    %v1347 = vunpack.c.l.b16 %v472
    %v1348 = vunpack.c.l.b16 %v473
    %v1349 = vunpack.c.h.b16 %v473
    %v1350 = vunpack.c.l.b16 %v474
    %v1351 = vunpack.c.h.b16 %v474
    %v1352 = vunpack.c.l.b16 %v475
    %v1353 = vunpack.c.l.b16 %v476
    %v1354 = vunpack.c.h.b16 %v476
    %v1355 = vunpack.c.l.b16 %v477
    %v1356 = vunpack.c.h.b16 %v477
    %v1357 = vunpack.c.l.b16 %v478
    %v1358 = vunpack.c.l.b16 %v479
    %v1359 = vunpack.c.h.b16 %v479
    %v1360 = vunpack.c.l.b16 %v480
    %v1361 = vunpack.c.h.b16 %v480
    %v1362 = vunpack.c.l.b16 %v481
    %v1363 = vunpack.c.l.b16 %v482
    %v1364 = vunpack.c.h.b16 %v482
    %v1365 = vunpack.c.l.b16 %v483
    %v1366 = vunpack.c.h.b16 %v483
    %v1367 = vunpack.c.l.b16 %v484
    %v1368 = vunpack.c.l.b16 %v485
    %v1369 = vunpack.c.h.b16 %v485
    %v1370 = vunpack.c.l.b16 %v486
    %v1371 = vunpack.c.h.b16 %v486
    %v1372 = vunpack.c.l.b16 %v487
    %v1373 = vunpack.c.l.b16 %v488
    %v1374 = vunpack.c.h.b16 %v488
    %v1375 = vunpack.c.l.b16 %v489
    %v1376 = vunpack.c.h.b16 %v489
    %v1377 = vunpack.c.l.b16 %v490
    %v1378 = vunpack.c.l.b16 %v491
    %v1379 = vunpack.c.h.b16 %v491
    %v1380 = vunpack.c.l.b16 %v492
    %v1381 = vunpack.c.h.b16 %v492
    %v1382 = vunpack.c.l.b16 %v493
    %v1383 = vunpack.c.l.b16 %v494
    %v1384 = vunpack.c.h.b16 %v494
    %v1385 = vunpack.c.l.b16 %v495
    %v1386 = vunpack.c.h.b16 %v495
    %v1387 = vunpack.c.l.b16 %v496
    %v1388 = vunpack.c.l.b16 %v497
    %v1389 = vunpack.c.h.b16 %v497
    %v1390 = vunpack.c.l.b16 %v498
    %v1391 = vunpack.c.h.b16 %v498
    %v1392 = vunpack.c.l.b16 %v499
    %v1393 = vunpack.c.l.b16 %v500
    %v1394 = vunpack.c.h.b16 %v500
    %v1395 = vunpack.c.l.b16 %v501
    %v1396 = vunpack.c.h.b16 %v501
    %v1397 = vunpack.c.l.b16 %v502
    %v1398 = vunpack.c.l.b16 %v503
    %v1399 = vunpack.c.h.b16 %v503
    %v1400 = vunpack.c.l.b16 %v504
    %v1401 = vunpack.c.h.b16 %v504
    %v1402 = vunpack.c.l.b16 %v505
    %v1403 = vunpack.c.l.b16 %v506
    %v1404 = vunpack.c.h.b16 %v506
    %v1405 = vunpack.c.l.b16 %v507
    %v1406 = vunpack.c.h.b16 %v507
    %v1407 = vunpack.c.l.b16 %v508
    %v1408 = vunpack.c.l.b16 %v509
    %v1409 = vunpack.c.h.b16 %v509
    %v1410 = vunpack.c.l.b16 %v510
    %v1411 = vunpack.c.h.b16 %v510
    %v1412 = vunpack.c.l.b16 %v511
    %v1413 = vunpack.c.l.b16 %v512
    %v1414 = vunpack.c.h.b16 %v512
    %v1415 = vunpack.c.l.b16 %v513
    %v1416 = vunpack.c.h.b16 %v513
    %v1417 = vunpack.c.l.b16 %v514
    %v1418 = vunpack.c.l.b16 %v515
    %v1419 = vunpack.c.h.b16 %v515
    %v1420 = vunpack.c.l.b16 %v516
    %v1421 = vunpack.c.h.b16 %v516
    %v1422 = vunpack.c.l.b16 %v517
    %v1423 = vunpack.c.l.b16 %v518
    %v1424 = vunpack.c.h.b16 %v518
    %v1425 = vunpack.c.l.b16 %v519
    %v1426 = vunpack.c.h.b16 %v519
    %v1427 = vunpack.c.l.b16 %v520
    %v1428 = vunpack.c.l.b16 %v521
    %v1429 = vunpack.c.h.b16 %v521
    %v1430 = vunpack.c.l.b16 %v522
    %v1431 = vunpack.c.h.b16 %v522
    %v1432 = vunpack.c.l.b16 %v523
    %v1433 = vunpack.c.l.b16 %v524
    %v1434 = vunpack.c.h.b16 %v524
    %v1435 = vunpack.c.l.b16 %v525
    %v1436 = vunpack.c.h.b16 %v525
    %v1437 = vunpack.c.l.b16 %v526
    %v1438 = vunpack.c.l.b16 %v527
    %v1439 = vunpack.c.h.b16 %v527
    %v1440 = vunpack.c.l.b16 %v528
    %v1441 = vunpack.c.h.b16 %v528
    %v1442 = vunpack.c.l.b16 %v529
    %v1443 = vunpack.c.l.b16 %v530
    %v1444 = vunpack.c.h.b16 %v530
    %v1445 = vunpack.c.l.b16 %v531
    %v1446 = vunpack.c.h.b16 %v531
    %v1447 = vunpack.c.l.b16 %v532
    %v1448 = vunpack.c.l.b16 %v533
    %v1449 = vunpack.c.h.b16 %v533
    %v1450 = vunpack.c.l.b16 %v534
    %v1451 = vunpack.c.h.b16 %v534
    %v1452 = vunpack.c.l.b16 %v535
    %v1453 = vunpack.c.l.b16 %v536
    %v1454 = vunpack.c.h.b16 %v536
    %v1455 = vunpack.c.l.b16 %v537
    %v1456 = vunpack.c.h.b16 %v537
    %v1457 = vunpack.c.l.b16 %v538
    %v1458 = vunpack.c.l.b16 %v539
    %v1459 = vunpack.c.h.b16 %v539
    %v1460 = vunpack.c.l.b16 %v540
    %v1461 = vunpack.c.h.b16 %v540
    %v1462 = vunpack.c.l.b16 %v541
    %v1463 = vpack.c.b16 %v908, %v903
    %v1464 = vpack.c.b16 %v909, %v904
    %v1465 = vpack.c.b16 %v910, %v905
    %v1466 = vpack.c.b16 %v911, %v906
    %v1467 = vpack.c.b16 %v912, %v907
    %v1468 = vpack.c.b16 %v918, %v913
    %v1469 = vpack.c.b16 %v919, %v914
    %v1470 = vpack.c.b16 %v920, %v915
    %v1471 = vpack.c.b16 %v921, %v916
    %v1472 = vpack.c.b16 %v922, %v917
    %v1473 = vpack.c.b16 %v928, %v923
    %v1474 = vpack.c.b16 %v929, %v924
    %v1475 = vpack.c.b16 %v930, %v925
    %v1476 = vpack.c.b16 %v931, %v926
    %v1477 = vpack.c.b16 %v932, %v927
    %v1478 = vpack.c.b16 %v938, %v933
    %v1479 = vpack.c.b16 %v939, %v934
    %v1480 = vpack.c.b16 %v940, %v935
    %v1481 = vpack.c.b16 %v941, %v936
    %v1482 = vpack.c.b16 %v942, %v937
    %v1483 = vpack.c.b16 %v948, %v943
    %v1484 = vpack.c.b16 %v949, %v944
    %v1485 = vpack.c.b16 %v950, %v945
    %v1486 = vpack.c.b16 %v951, %v946
    %v1487 = vpack.c.b16 %v952, %v947
    %v1488 = vpack.c.b16 %v958, %v953
    %v1489 = vpack.c.b16 %v959, %v954
    %v1490 = vpack.c.b16 %v960, %v955
    %v1491 = vpack.c.b16 %v961, %v956
    %v1492 = vpack.c.b16 %v962, %v957
    %v1493 = vpack.c.b16 %v968, %v963
    %v1494 = vpack.c.b16 %v969, %v964
    %v1495 = vpack.c.b16 %v970, %v965
    %v1496 = vpack.c.b16 %v971, %v966
    %v1497 = vpack.c.b16 %v972, %v967
    %v1498 = vpack.c.b16 %v978, %v973
    %v1499 = vpack.c.b16 %v979, %v974
    %v1500 = vpack.c.b16 %v980, %v975
    %v1501 = vpack.c.b16 %v981, %v976
    %v1502 = vpack.c.b16 %v982, %v977
    %v1503 = vpack.c.b16 %v988, %v983
    %v1504 = vpack.c.b16 %v989, %v984
    %v1505 = vpack.c.b16 %v990, %v985
    %v1506 = vpack.c.b16 %v991, %v986
    %v1507 = vpack.c.b16 %v992, %v987
    %v1508 = vpack.c.b16 %v998, %v993
    %v1509 = vpack.c.b16 %v999, %v994
    %v1510 = vpack.c.b16 %v1000, %v995
    %v1511 = vpack.c.b16 %v1001, %v996
    %v1512 = vpack.c.b16 %v1002, %v997
    %v1513 = vpack.c.b16 %v1008, %v1003
    %v1514 = vpack.c.b16 %v1009, %v1004
    %v1515 = vpack.c.b16 %v1010, %v1005
    %v1516 = vpack.c.b16 %v1011, %v1006
    %v1517 = vpack.c.b16 %v1012, %v1007
    %v1518 = vpack.c.b16 %v1018, %v1013
    %v1519 = vpack.c.b16 %v1019, %v1014
    %v1520 = vpack.c.b16 %v1020, %v1015
    %v1521 = vpack.c.b16 %v1021, %v1016
    %v1522 = vpack.c.b16 %v1022, %v1017
    %v1523 = vpack.c.b16 %v1028, %v1023
    %v1524 = vpack.c.b16 %v1029, %v1024
    %v1525 = vpack.c.b16 %v1030, %v1025
    %v1526 = vpack.c.b16 %v1031, %v1026
    %v1527 = vpack.c.b16 %v1032, %v1027
    %v1528 = vpack.c.b16 %v1038, %v1033
    %v1529 = vpack.c.b16 %v1039, %v1034
    %v1530 = vpack.c.b16 %v1040, %v1035
    %v1531 = vpack.c.b16 %v1041, %v1036
    %v1532 = vpack.c.b16 %v1042, %v1037
    %v1533 = vpack.c.b16 %v1048, %v1043
    %v1534 = vpack.c.b16 %v1049, %v1044
    %v1535 = vpack.c.b16 %v1050, %v1045
    %v1536 = vpack.c.b16 %v1051, %v1046
    %v1537 = vpack.c.b16 %v1052, %v1047
    %v1538 = vpack.c.b16 %v1058, %v1053
    %v1539 = vpack.c.b16 %v1059, %v1054
    %v1540 = vpack.c.b16 %v1060, %v1055
    %v1541 = vpack.c.b16 %v1061, %v1056
    %v1542 = vpack.c.b16 %v1062, %v1057
    %v1543 = vpack.c.b16 %v1068, %v1063
    %v1544 = vpack.c.b16 %v1069, %v1064
    %v1545 = vpack.c.b16 %v1070, %v1065
    %v1546 = vpack.c.b16 %v1071, %v1066
    %v1547 = vpack.c.b16 %v1072, %v1067
    %v1548 = vpack.c.b16 %v1078, %v1073
    %v1549 = vpack.c.b16 %v1079, %v1074
    %v1550 = vpack.c.b16 %v1080, %v1075
    %v1551 = vpack.c.b16 %v1081, %v1076
    %v1552 = vpack.c.b16 %v1082, %v1077
    %v1553 = vpack.c.b16 %v1088, %v1083
    %v1554 = vpack.c.b16 %v1089, %v1084
    %v1555 = vpack.c.b16 %v1090, %v1085
    %v1556 = vpack.c.b16 %v1091, %v1086
    %v1557 = vpack.c.b16 %v1092, %v1087
    %v1558 = vpack.c.b16 %v1098, %v1093
    %v1559 = vpack.c.b16 %v1099, %v1094
    %v1560 = vpack.c.b16 %v1100, %v1095
    %v1561 = vpack.c.b16 %v1101, %v1096
    %v1562 = vpack.c.b16 %v1102, %v1097
    %v1563 = vpack.c.b16 %v1108, %v1103
    %v1564 = vpack.c.b16 %v1109, %v1104
    %v1565 = vpack.c.b16 %v1110, %v1105
    %v1566 = vpack.c.b16 %v1111, %v1106
    %v1567 = vpack.c.b16 %v1112, %v1107
    %v1568 = vpack.c.b16 %v1118, %v1113
    %v1569 = vpack.c.b16 %v1119, %v1114
    %v1570 = vpack.c.b16 %v1120, %v1115
    %v1571 = vpack.c.b16 %v1121, %v1116
    %v1572 = vpack.c.b16 %v1122, %v1117
    %v1573 = vpack.c.b16 %v1128, %v1123
    %v1574 = vpack.c.b16 %v1129, %v1124
    %v1575 = vpack.c.b16 %v1130, %v1125
    %v1576 = vpack.c.b16 %v1131, %v1126
    %v1577 = vpack.c.b16 %v1132, %v1127
    %v1578 = vpack.c.b16 %v1138, %v1133
    %v1579 = vpack.c.b16 %v1139, %v1134
    %v1580 = vpack.c.b16 %v1140, %v1135
    %v1581 = vpack.c.b16 %v1141, %v1136
    %v1582 = vpack.c.b16 %v1142, %v1137
    %v1583 = vpack.c.b16 %v1148, %v1143
    %v1584 = vpack.c.b16 %v1149, %v1144
    %v1585 = vpack.c.b16 %v1150, %v1145
    %v1586 = vpack.c.b16 %v1151, %v1146
    %v1587 = vpack.c.b16 %v1152, %v1147
    %v1588 = vpack.c.b16 %v1158, %v1153
    %v1589 = vpack.c.b16 %v1159, %v1154
    %v1590 = vpack.c.b16 %v1160, %v1155
    %v1591 = vpack.c.b16 %v1161, %v1156
    %v1592 = vpack.c.b16 %v1162, %v1157
    %v1593 = vpack.c.b16 %v1168, %v1163
    %v1594 = vpack.c.b16 %v1169, %v1164
    %v1595 = vpack.c.b16 %v1170, %v1165
    %v1596 = vpack.c.b16 %v1171, %v1166
    %v1597 = vpack.c.b16 %v1172, %v1167
    %v1598 = vpack.c.b16 %v1178, %v1173
    %v1599 = vpack.c.b16 %v1179, %v1174
    %v1600 = vpack.c.b16 %v1180, %v1175
    %v1601 = vpack.c.b16 %v1181, %v1176
    %v1602 = vpack.c.b16 %v1182, %v1177
    %v1603 = vpack.c.b16 %v1188, %v1183
    %v1604 = vpack.c.b16 %v1189, %v1184
    %v1605 = vpack.c.b16 %v1190, %v1185
    %v1606 = vpack.c.b16 %v1191, %v1186
    %v1607 = vpack.c.b16 %v1192, %v1187
    %v1608 = vpack.c.b16 %v1198, %v1193
    %v1609 = vpack.c.b16 %v1199, %v1194
    %v1610 = vpack.c.b16 %v1200, %v1195
    %v1611 = vpack.c.b16 %v1201, %v1196
    %v1612 = vpack.c.b16 %v1202, %v1197
    %v1613 = vpack.c.b16 %v1208, %v1203
    %v1614 = vpack.c.b16 %v1209, %v1204
    %v1615 = vpack.c.b16 %v1210, %v1205
    %v1616 = vpack.c.b16 %v1211, %v1206
    %v1617 = vpack.c.b16 %v1212, %v1207
    %v1618 = vpack.c.b16 %v1218, %v1213
    %v1619 = vpack.c.b16 %v1219, %v1214
    %v1620 = vpack.c.b16 %v1220, %v1215
    %v1621 = vpack.c.b16 %v1221, %v1216
    %v1622 = vpack.c.b16 %v1222, %v1217
    %v1623 = vpack.c.b16 %v1228, %v1223
    %v1624 = vpack.c.b16 %v1229, %v1224
    %v1625 = vpack.c.b16 %v1230, %v1225
    %v1626 = vpack.c.b16 %v1231, %v1226
    %v1627 = vpack.c.b16 %v1232, %v1227
    %v1628 = vpack.c.b16 %v1238, %v1233
    %v1629 = vpack.c.b16 %v1239, %v1234
    %v1630 = vpack.c.b16 %v1240, %v1235
    %v1631 = vpack.c.b16 %v1241, %v1236
    %v1632 = vpack.c.b16 %v1242, %v1237
    %v1633 = vpack.c.b16 %v1248, %v1243
    %v1634 = vpack.c.b16 %v1249, %v1244
    %v1635 = vpack.c.b16 %v1250, %v1245
    %v1636 = vpack.c.b16 %v1251, %v1246
    %v1637 = vpack.c.b16 %v1252, %v1247
    %v1638 = vpack.c.b16 %v1258, %v1253
    %v1639 = vpack.c.b16 %v1259, %v1254
    %v1640 = vpack.c.b16 %v1260, %v1255
    %v1641 = vpack.c.b16 %v1261, %v1256
    %v1642 = vpack.c.b16 %v1262, %v1257
    %v1643 = vpack.c.b16 %v1268, %v1263
    %v1644 = vpack.c.b16 %v1269, %v1264
    %v1645 = vpack.c.b16 %v1270, %v1265
    %v1646 = vpack.c.b16 %v1271, %v1266
    %v1647 = vpack.c.b16 %v1272, %v1267
    %v1648 = vpack.c.b16 %v1278, %v1273
    %v1649 = vpack.c.b16 %v1279, %v1274
    %v1650 = vpack.c.b16 %v1280, %v1275
    %v1651 = vpack.c.b16 %v1281, %v1276
    %v1652 = vpack.c.b16 %v1282, %v1277
    %v1653 = vpack.c.b16 %v1288, %v1283
    %v1654 = vpack.c.b16 %v1289, %v1284
    %v1655 = vpack.c.b16 %v1290, %v1285
    %v1656 = vpack.c.b16 %v1291, %v1286
    %v1657 = vpack.c.b16 %v1292, %v1287
    %v1658 = vpack.c.b16 %v1298, %v1293
    %v1659 = vpack.c.b16 %v1299, %v1294
    %v1660 = vpack.c.b16 %v1300, %v1295
    %v1661 = vpack.c.b16 %v1301, %v1296
    %v1662 = vpack.c.b16 %v1302, %v1297
    %v1663 = vpack.c.b16 %v1308, %v1303
    %v1664 = vpack.c.b16 %v1309, %v1304
    %v1665 = vpack.c.b16 %v1310, %v1305
    %v1666 = vpack.c.b16 %v1311, %v1306
    %v1667 = vpack.c.b16 %v1312, %v1307
    %v1668 = vpack.c.b16 %v1318, %v1313
    %v1669 = vpack.c.b16 %v1319, %v1314
    %v1670 = vpack.c.b16 %v1320, %v1315
    %v1671 = vpack.c.b16 %v1321, %v1316
    %v1672 = vpack.c.b16 %v1322, %v1317
    %v1673 = vpack.c.b16 %v1328, %v1323
    %v1674 = vpack.c.b16 %v1329, %v1324
    %v1675 = vpack.c.b16 %v1330, %v1325
    %v1676 = vpack.c.b16 %v1331, %v1326
    %v1677 = vpack.c.b16 %v1332, %v1327
    %v1678 = vpack.c.b16 %v1338, %v1333
    %v1679 = vpack.c.b16 %v1339, %v1334
    %v1680 = vpack.c.b16 %v1340, %v1335
    %v1681 = vpack.c.b16 %v1341, %v1336
    %v1682 = vpack.c.b16 %v1342, %v1337
    %v1683 = vpack.c.b16 %v1348, %v1343
    %v1684 = vpack.c.b16 %v1349, %v1344
    %v1685 = vpack.c.b16 %v1350, %v1345
    %v1686 = vpack.c.b16 %v1351, %v1346
    %v1687 = vpack.c.b16 %v1352, %v1347
    %v1688 = vpack.c.b16 %v1358, %v1353
    %v1689 = vpack.c.b16 %v1359, %v1354
    %v1690 = vpack.c.b16 %v1360, %v1355
    %v1691 = vpack.c.b16 %v1361, %v1356
    %v1692 = vpack.c.b16 %v1362, %v1357
    %v1693 = vpack.c.b16 %v1368, %v1363
    %v1694 = vpack.c.b16 %v1369, %v1364
    %v1695 = vpack.c.b16 %v1370, %v1365
    %v1696 = vpack.c.b16 %v1371, %v1366
    %v1697 = vpack.c.b16 %v1372, %v1367
    %v1698 = vpack.c.b16 %v1378, %v1373
    %v1699 = vpack.c.b16 %v1379, %v1374
    %v1700 = vpack.c.b16 %v1380, %v1375
    %v1701 = vpack.c.b16 %v1381, %v1376
    %v1702 = vpack.c.b16 %v1382, %v1377
    %v1703 = vpack.c.b16 %v1388, %v1383
    %v1704 = vpack.c.b16 %v1389, %v1384
    %v1705 = vpack.c.b16 %v1390, %v1385
    %v1706 = vpack.c.b16 %v1391, %v1386
    %v1707 = vpack.c.b16 %v1392, %v1387
    %v1708 = vpack.c.b16 %v1398, %v1393
    %v1709 = vpack.c.b16 %v1399, %v1394
    %v1710 = vpack.c.b16 %v1400, %v1395
    %v1711 = vpack.c.b16 %v1401, %v1396
    %v1712 = vpack.c.b16 %v1402, %v1397
    %v1713 = vpack.c.b16 %v1408, %v1403
    %v1714 = vpack.c.b16 %v1409, %v1404
    %v1715 = vpack.c.b16 %v1410, %v1405
    %v1716 = vpack.c.b16 %v1411, %v1406
    %v1717 = vpack.c.b16 %v1412, %v1407
    %v1718 = vpack.c.b16 %v1418, %v1413
    %v1719 = vpack.c.b16 %v1419, %v1414
    %v1720 = vpack.c.b16 %v1420, %v1415
    %v1721 = vpack.c.b16 %v1421, %v1416
    %v1722 = vpack.c.b16 %v1422, %v1417
    %v1723 = vpack.c.b16 %v1428, %v1423
    %v1724 = vpack.c.b16 %v1429, %v1424
    %v1725 = vpack.c.b16 %v1430, %v1425
    %v1726 = vpack.c.b16 %v1431, %v1426
    %v1727 = vpack.c.b16 %v1432, %v1427
    %v1728 = vpack.c.b16 %v1438, %v1433
    %v1729 = vpack.c.b16 %v1439, %v1434
    %v1730 = vpack.c.b16 %v1440, %v1435
    %v1731 = vpack.c.b16 %v1441, %v1436
    %v1732 = vpack.c.b16 %v1442, %v1437
    %v1733 = vpack.c.b16 %v1448, %v1443
    %v1734 = vpack.c.b16 %v1449, %v1444
    %v1735 = vpack.c.b16 %v1450, %v1445
    %v1736 = vpack.c.b16 %v1451, %v1446
    %v1737 = vpack.c.b16 %v1452, %v1447
    %v1738 = vpack.c.b16 %v1458, %v1453
    %v1739 = vpack.c.b16 %v1459, %v1454
    %v1740 = vpack.c.b16 %v1460, %v1455
    %v1741 = vpack.c.b16 %v1461, %v1456
    %v1742 = vpack.c.b16 %v1462, %v1457
    %2023 = vmatprep.subr.bf16.mxu0 %v1499
    %2024 = vmatpush1.bf16.msra.mxu0 %v1498
    %2025 = vmatprep.subr.bf16.mxu0 %v1494
    %2026 = vmatpush1.bf16.msra.mxu0 %v1493
    %2027 = vmatprep.subr.bf16.mxu0 %v1489
    %2028 = vmatpush1.bf16.msra.mxu0 %v1488
    %2029 = vmatprep.subr.bf16.mxu0 %v1484
    %2030 = vmatpush1.bf16.msra.mxu0 %v1483
    %2031 = vmatprep.subr.bf16.mxu0 %v1479
    %2032 = vmatpush1.bf16.msra.mxu0 %v1478
    %2033 = vmatprep.subr.bf16.mxu0 %v1474
    %2034 = vmatpush1.bf16.msra.mxu0 %v1473
    %2035 = vmatprep.subr.bf16.mxu0 %v1469
    %2036 = vmatpush1.bf16.msra.mxu0 %v1468
    %2037 = vmatprep.subr.bf16.mxu0 %v1464
    %2038 = vmatpush1.bf16.msra.mxu0 %v1463
    %2039 = vmatprep.subr.bf16.mxu0 %v1539
    %2040 = vmatpush2.bf16.msra.mxu0 %v1538
    %2041 = vmatprep.subr.bf16.mxu0 %v1534
    %2042 = vmatpush2.bf16.msra.mxu0 %v1533
    %2043 = vmatprep.subr.bf16.mxu0 %v1529
    %2044 = vmatpush2.bf16.msra.mxu0 %v1528
    %2045 = vmatprep.subr.bf16.mxu0 %v1524
    %2046 = vmatpush2.bf16.msra.mxu0 %v1523
    %2047 = vmatprep.subr.bf16.mxu0 %v1519
    %2048 = vmatpush2.bf16.msra.mxu0 %v1518
    %2049 = vmatprep.subr.bf16.mxu0 %v1514
    %2050 = vmatpush2.bf16.msra.mxu0 %v1513
    %2051 = vmatprep.subr.bf16.mxu0 %v1509
    %2052 = vmatpush2.bf16.msra.mxu0 %v1508
    %2053 = vmatprep.subr.bf16.mxu0 %v1504
    %2054 = vmatpush2.bf16.msra.mxu0 %v1503
    %2055 = vmatprep.mubr.bf16.mxu0 %v554
    %2056 = vmatmul.mubr.bf16.gmra.mxu0 %v553
    %v2057 = vpop.f32.mrf.mxu0
    %v2058 = vadd.f32 0.0, %v2057
    %v2059 = vpop.f32.mrf.mxu0
    %v2060 = vadd.f32 0.0, %v2059
    %v2061 = vpop.f32.mrf.mxu0
    %v2062 = vpop.f32.mrf.mxu0
    %2063 = vdwg.mxu0
    %2064 = vmatprep.subr.bf16.mxu0 %v1579
    %2065 = vmatpush1.bf16.msra.mxu0 %v1578
    %2066 = vmatprep.subr.bf16.mxu0 %v1574
    %2067 = vmatpush1.bf16.msra.mxu0 %v1573
    %2068 = vmatprep.subr.bf16.mxu0 %v1569
    %2069 = vmatpush1.bf16.msra.mxu0 %v1568
    %2070 = vmatprep.subr.bf16.mxu0 %v1564
    %2071 = vmatpush1.bf16.msra.mxu0 %v1563
    %2072 = vmatprep.subr.bf16.mxu0 %v1559
    %2073 = vmatpush1.bf16.msra.mxu0 %v1558
    %2074 = vmatprep.subr.bf16.mxu0 %v1554
    %2075 = vmatpush1.bf16.msra.mxu0 %v1553
    %2076 = vmatprep.subr.bf16.mxu0 %v1549
    %2077 = vmatpush1.bf16.msra.mxu0 %v1548
    %2078 = vmatprep.subr.bf16.mxu0 %v1544
    %2079 = vmatpush1.bf16.msra.mxu0 %v1543
    %2080 = vmatprep.subr.bf16.mxu0 %v1619
    %2081 = vmatpush2.bf16.msra.mxu0 %v1618
    %2082 = vmatprep.subr.bf16.mxu0 %v1614
    %2083 = vmatpush2.bf16.msra.mxu0 %v1613
    %2084 = vmatprep.subr.bf16.mxu0 %v1609
    %2085 = vmatpush2.bf16.msra.mxu0 %v1608
    %2086 = vmatprep.subr.bf16.mxu0 %v1604
    %2087 = vmatpush2.bf16.msra.mxu0 %v1603
    %2088 = vmatprep.subr.bf16.mxu0 %v1599
    %2089 = vmatpush2.bf16.msra.mxu0 %v1598
    %2090 = vmatprep.subr.bf16.mxu0 %v1594
    %2091 = vmatpush2.bf16.msra.mxu0 %v1593
    %2092 = vmatprep.subr.bf16.mxu0 %v1589
    %2093 = vmatpush2.bf16.msra.mxu0 %v1588
    %2094 = vmatprep.subr.bf16.mxu0 %v1584
    %2095 = vmatpush2.bf16.msra.mxu0 %v1583
    %2096 = vmatprep.mubr.bf16.mxu0 %v556
    %2097 = vmatmul.mubr.bf16.gmra.mxu0 %v555
    %v2098 = vpop.f32.mrf.mxu0
    %v2099 = vadd.f32 %v2058, %v2098
    %v2100 = vpop.f32.mrf.mxu0
    %v2101 = vadd.f32 %v2060, %v2100
    %v2102 = vpop.f32.mrf.mxu0
    %v2103 = vpop.f32.mrf.mxu0
    %2104 = vdwg.mxu0
    %2105 = vmatprep.subr.bf16.mxu0 %v1659
    %2106 = vmatpush1.bf16.msra.mxu0 %v1658
    %2107 = vmatprep.subr.bf16.mxu0 %v1654
    %2108 = vmatpush1.bf16.msra.mxu0 %v1653
    %2109 = vmatprep.subr.bf16.mxu0 %v1649
    %2110 = vmatpush1.bf16.msra.mxu0 %v1648
    %2111 = vmatprep.subr.bf16.mxu0 %v1644
    %2112 = vmatpush1.bf16.msra.mxu0 %v1643
    %2113 = vmatprep.subr.bf16.mxu0 %v1639
    %2114 = vmatpush1.bf16.msra.mxu0 %v1638
    %2115 = vmatprep.subr.bf16.mxu0 %v1634
    %2116 = vmatpush1.bf16.msra.mxu0 %v1633
    %2117 = vmatprep.subr.bf16.mxu0 %v1629
    %2118 = vmatpush1.bf16.msra.mxu0 %v1628
    %2119 = vmatprep.subr.bf16.mxu0 %v1624
    %2120 = vmatpush1.bf16.msra.mxu0 %v1623
    %2121 = vmatprep.subr.bf16.mxu0 %v1699
    %2122 = vmatpush2.bf16.msra.mxu0 %v1698
    %2123 = vmatprep.subr.bf16.mxu0 %v1694
    %2124 = vmatpush2.bf16.msra.mxu0 %v1693
    %2125 = vmatprep.subr.bf16.mxu0 %v1689
    %2126 = vmatpush2.bf16.msra.mxu0 %v1688
    %2127 = vmatprep.subr.bf16.mxu0 %v1684
    %2128 = vmatpush2.bf16.msra.mxu0 %v1683
    %2129 = vmatprep.subr.bf16.mxu0 %v1679
    %2130 = vmatpush2.bf16.msra.mxu0 %v1678
    %2131 = vmatprep.subr.bf16.mxu0 %v1674
    %2132 = vmatpush2.bf16.msra.mxu0 %v1673
    %2133 = vmatprep.subr.bf16.mxu0 %v1669
    %2134 = vmatpush2.bf16.msra.mxu0 %v1668
    %2135 = vmatprep.subr.bf16.mxu0 %v1664
    %2136 = vmatpush2.bf16.msra.mxu0 %v1663
    %2137 = vmatprep.mubr.bf16.mxu0 %v558
    %2138 = vmatmul.mubr.bf16.gmra.mxu0 %v557
    %v2139 = vpop.f32.mrf.mxu0
    %v2140 = vadd.f32 %v2099, %v2139
    %v2141 = vpop.f32.mrf.mxu0
    %v2142 = vadd.f32 %v2101, %v2141
    %v2143 = vpop.f32.mrf.mxu0
    %v2144 = vpop.f32.mrf.mxu0
    %2145 = vdwg.mxu0
    %2146 = vmatprep.subr.bf16.mxu0 %v1739
    %2147 = vmatpush1.bf16.msra.mxu0 %v1738
    %2148 = vmatprep.subr.bf16.mxu0 %v1734
    %2149 = vmatpush1.bf16.msra.mxu0 %v1733
    %2150 = vmatprep.subr.bf16.mxu0 %v1729
    %2151 = vmatpush1.bf16.msra.mxu0 %v1728
    %2152 = vmatprep.subr.bf16.mxu0 %v1724
    %2153 = vmatpush1.bf16.msra.mxu0 %v1723
    %2154 = vmatprep.subr.bf16.mxu0 %v1719
    %2155 = vmatpush1.bf16.msra.mxu0 %v1718
    %2156 = vmatprep.subr.bf16.mxu0 %v1714
    %2157 = vmatpush1.bf16.msra.mxu0 %v1713
    %2158 = vmatprep.subr.bf16.mxu0 %v1709
    %2159 = vmatpush1.bf16.msra.mxu0 %v1708
    %2160 = vmatprep.subr.bf16.mxu0 %v1704
    %2161 = vmatpush1.bf16.msra.mxu0 %v1703
    %2162 = vmatprep.subr.bf16.mxu0 0
    %2163 = vmatpush2.bf16.msra.mxu0 0
    %2164 = vmatprep.subr.bf16.mxu0 0
    %2165 = vmatpush2.bf16.msra.mxu0 0
    %2166 = vmatprep.subr.bf16.mxu0 0
    %2167 = vmatpush2.bf16.msra.mxu0 0
    %2168 = vmatprep.subr.bf16.mxu0 0
    %2169 = vmatpush2.bf16.msra.mxu0 0
    %2170 = vmatprep.subr.bf16.mxu0 0
    %2171 = vmatpush2.bf16.msra.mxu0 0
    %2172 = vmatprep.subr.bf16.mxu0 0
    %2173 = vmatpush2.bf16.msra.mxu0 0
    %2174 = vmatprep.subr.bf16.mxu0 0
    %2175 = vmatpush2.bf16.msra.mxu0 0
    %2176 = vmatprep.subr.bf16.mxu0 0
    %2177 = vmatpush2.bf16.msra.mxu0 0
    %2178 = vmatprep.mubr.bf16.mxu0 0
    %2179 = vmatmul.mubr.bf16.gmra.mxu0 %v559
    %v2180 = vpop.f32.mrf.mxu0
    %v2181 = vadd.f32 %v2140, %v2180
    %v2182 = vpop.f32.mrf.mxu0
    %v2183 = vadd.f32 %v2142, %v2182
    %v2184 = vpop.f32.mrf.mxu0
    %v2185 = vpop.f32.mrf.mxu0
    %2186 = vdwg.mxu0
    %2187 = vmatprep.subr.bf16.mxu0 %v1501
    %2188 = vmatpush1.bf16.msra.mxu0 %v1500
    %2189 = vmatprep.subr.bf16.mxu0 %v1496
    %2190 = vmatpush1.bf16.msra.mxu0 %v1495
    %2191 = vmatprep.subr.bf16.mxu0 %v1491
    %2192 = vmatpush1.bf16.msra.mxu0 %v1490
    %2193 = vmatprep.subr.bf16.mxu0 %v1486
    %2194 = vmatpush1.bf16.msra.mxu0 %v1485
    %2195 = vmatprep.subr.bf16.mxu0 %v1481
    %2196 = vmatpush1.bf16.msra.mxu0 %v1480
    %2197 = vmatprep.subr.bf16.mxu0 %v1476
    %2198 = vmatpush1.bf16.msra.mxu0 %v1475
    %2199 = vmatprep.subr.bf16.mxu0 %v1471
    %2200 = vmatpush1.bf16.msra.mxu0 %v1470
    %2201 = vmatprep.subr.bf16.mxu0 %v1466
    %2202 = vmatpush1.bf16.msra.mxu0 %v1465
    %2203 = vmatprep.subr.bf16.mxu0 %v1541
    %2204 = vmatpush2.bf16.msra.mxu0 %v1540
    %2205 = vmatprep.subr.bf16.mxu0 %v1536
    %2206 = vmatpush2.bf16.msra.mxu0 %v1535
    %2207 = vmatprep.subr.bf16.mxu0 %v1531
    %2208 = vmatpush2.bf16.msra.mxu0 %v1530
    %2209 = vmatprep.subr.bf16.mxu0 %v1526
    %2210 = vmatpush2.bf16.msra.mxu0 %v1525
    %2211 = vmatprep.subr.bf16.mxu0 %v1521
    %2212 = vmatpush2.bf16.msra.mxu0 %v1520
    %2213 = vmatprep.subr.bf16.mxu0 %v1516
    %2214 = vmatpush2.bf16.msra.mxu0 %v1515
    %2215 = vmatprep.subr.bf16.mxu0 %v1511
    %2216 = vmatpush2.bf16.msra.mxu0 %v1510
    %2217 = vmatprep.subr.bf16.mxu0 %v1506
    %2218 = vmatpush2.bf16.msra.mxu0 %v1505
    %2219 = vmatprep.mubr.bf16.mxu0 %v554
    %2220 = vmatmul.mubr.bf16.gmra.mxu0 %v553
    %v2221 = vpop.f32.mrf.mxu0
    %v2222 = vadd.f32 0.0, %v2221
    %v2223 = vpop.f32.mrf.mxu0
    %v2224 = vadd.f32 0.0, %v2223
    %v2225 = vpop.f32.mrf.mxu0
    %v2226 = vpop.f32.mrf.mxu0
    %2227 = vdwg.mxu0
    %2228 = vmatprep.subr.bf16.mxu0 %v1581
    %2229 = vmatpush1.bf16.msra.mxu0 %v1580
    %2230 = vmatprep.subr.bf16.mxu0 %v1576
    %2231 = vmatpush1.bf16.msra.mxu0 %v1575
    %2232 = vmatprep.subr.bf16.mxu0 %v1571
    %2233 = vmatpush1.bf16.msra.mxu0 %v1570
    %2234 = vmatprep.subr.bf16.mxu0 %v1566
    %2235 = vmatpush1.bf16.msra.mxu0 %v1565
    %2236 = vmatprep.subr.bf16.mxu0 %v1561
    %2237 = vmatpush1.bf16.msra.mxu0 %v1560
    %2238 = vmatprep.subr.bf16.mxu0 %v1556
    %2239 = vmatpush1.bf16.msra.mxu0 %v1555
    %2240 = vmatprep.subr.bf16.mxu0 %v1551
    %2241 = vmatpush1.bf16.msra.mxu0 %v1550
    %2242 = vmatprep.subr.bf16.mxu0 %v1546
    %2243 = vmatpush1.bf16.msra.mxu0 %v1545
    %2244 = vmatprep.subr.bf16.mxu0 %v1621
    %2245 = vmatpush2.bf16.msra.mxu0 %v1620
    %2246 = vmatprep.subr.bf16.mxu0 %v1616
    %2247 = vmatpush2.bf16.msra.mxu0 %v1615
    %2248 = vmatprep.subr.bf16.mxu0 %v1611
    %2249 = vmatpush2.bf16.msra.mxu0 %v1610
    %2250 = vmatprep.subr.bf16.mxu0 %v1606
    %2251 = vmatpush2.bf16.msra.mxu0 %v1605
    %2252 = vmatprep.subr.bf16.mxu0 %v1601
    %2253 = vmatpush2.bf16.msra.mxu0 %v1600
    %2254 = vmatprep.subr.bf16.mxu0 %v1596
    %2255 = vmatpush2.bf16.msra.mxu0 %v1595
    %2256 = vmatprep.subr.bf16.mxu0 %v1591
    %2257 = vmatpush2.bf16.msra.mxu0 %v1590
    %2258 = vmatprep.subr.bf16.mxu0 %v1586
    %2259 = vmatpush2.bf16.msra.mxu0 %v1585
    %2260 = vmatprep.mubr.bf16.mxu0 %v556
    %2261 = vmatmul.mubr.bf16.gmra.mxu0 %v555
    %v2262 = vpop.f32.mrf.mxu0
    %v2263 = vadd.f32 %v2222, %v2262
    %v2264 = vpop.f32.mrf.mxu0
    %v2265 = vadd.f32 %v2224, %v2264
    %v2266 = vpop.f32.mrf.mxu0
    %v2267 = vpop.f32.mrf.mxu0
    %2268 = vdwg.mxu0
    %2269 = vmatprep.subr.bf16.mxu0 %v1661
    %2270 = vmatpush1.bf16.msra.mxu0 %v1660
    %2271 = vmatprep.subr.bf16.mxu0 %v1656
    %2272 = vmatpush1.bf16.msra.mxu0 %v1655
    %2273 = vmatprep.subr.bf16.mxu0 %v1651
    %2274 = vmatpush1.bf16.msra.mxu0 %v1650
    %2275 = vmatprep.subr.bf16.mxu0 %v1646
    %2276 = vmatpush1.bf16.msra.mxu0 %v1645
    %2277 = vmatprep.subr.bf16.mxu0 %v1641
    %2278 = vmatpush1.bf16.msra.mxu0 %v1640
    %2279 = vmatprep.subr.bf16.mxu0 %v1636
    %2280 = vmatpush1.bf16.msra.mxu0 %v1635
    %2281 = vmatprep.subr.bf16.mxu0 %v1631
    %2282 = vmatpush1.bf16.msra.mxu0 %v1630
    %2283 = vmatprep.subr.bf16.mxu0 %v1626
    %2284 = vmatpush1.bf16.msra.mxu0 %v1625
    %2285 = vmatprep.subr.bf16.mxu0 %v1701
    %2286 = vmatpush2.bf16.msra.mxu0 %v1700
    %2287 = vmatprep.subr.bf16.mxu0 %v1696
    %2288 = vmatpush2.bf16.msra.mxu0 %v1695
    %2289 = vmatprep.subr.bf16.mxu0 %v1691
    %2290 = vmatpush2.bf16.msra.mxu0 %v1690
    %2291 = vmatprep.subr.bf16.mxu0 %v1686
    %2292 = vmatpush2.bf16.msra.mxu0 %v1685
    %2293 = vmatprep.subr.bf16.mxu0 %v1681
    %2294 = vmatpush2.bf16.msra.mxu0 %v1680
    %2295 = vmatprep.subr.bf16.mxu0 %v1676
    %2296 = vmatpush2.bf16.msra.mxu0 %v1675
    %2297 = vmatprep.subr.bf16.mxu0 %v1671
    %2298 = vmatpush2.bf16.msra.mxu0 %v1670
    %2299 = vmatprep.subr.bf16.mxu0 %v1666
    %2300 = vmatpush2.bf16.msra.mxu0 %v1665
    %2301 = vmatprep.mubr.bf16.mxu0 %v558
    %2302 = vmatmul.mubr.bf16.gmra.mxu0 %v557
    %v2303 = vpop.f32.mrf.mxu0
    %v2304 = vadd.f32 %v2263, %v2303
    %v2305 = vpop.f32.mrf.mxu0
    %v2306 = vadd.f32 %v2265, %v2305
    %v2307 = vpop.f32.mrf.mxu0
    %v2308 = vpop.f32.mrf.mxu0
    %2309 = vdwg.mxu0
    %2310 = vmatprep.subr.bf16.mxu0 %v1741
    %2311 = vmatpush1.bf16.msra.mxu0 %v1740
    %2312 = vmatprep.subr.bf16.mxu0 %v1736
    %2313 = vmatpush1.bf16.msra.mxu0 %v1735
    %2314 = vmatprep.subr.bf16.mxu0 %v1731
    %2315 = vmatpush1.bf16.msra.mxu0 %v1730
    %2316 = vmatprep.subr.bf16.mxu0 %v1726
    %2317 = vmatpush1.bf16.msra.mxu0 %v1725
    %2318 = vmatprep.subr.bf16.mxu0 %v1721
    %2319 = vmatpush1.bf16.msra.mxu0 %v1720
    %2320 = vmatprep.subr.bf16.mxu0 %v1716
    %2321 = vmatpush1.bf16.msra.mxu0 %v1715
    %2322 = vmatprep.subr.bf16.mxu0 %v1711
    %2323 = vmatpush1.bf16.msra.mxu0 %v1710
    %2324 = vmatprep.subr.bf16.mxu0 %v1706
    %2325 = vmatpush1.bf16.msra.mxu0 %v1705
    %2326 = vmatprep.subr.bf16.mxu0 0
    %2327 = vmatpush2.bf16.msra.mxu0 0
    %2328 = vmatprep.subr.bf16.mxu0 0
    %2329 = vmatpush2.bf16.msra.mxu0 0
    %2330 = vmatprep.subr.bf16.mxu0 0
    %2331 = vmatpush2.bf16.msra.mxu0 0
    %2332 = vmatprep.subr.bf16.mxu0 0
    %2333 = vmatpush2.bf16.msra.mxu0 0
    %2334 = vmatprep.subr.bf16.mxu0 0
    %2335 = vmatpush2.bf16.msra.mxu0 0
    %2336 = vmatprep.subr.bf16.mxu0 0
    %2337 = vmatpush2.bf16.msra.mxu0 0
    %2338 = vmatprep.subr.bf16.mxu0 0
    %2339 = vmatpush2.bf16.msra.mxu0 0
    %2340 = vmatprep.subr.bf16.mxu0 0
    %2341 = vmatpush2.bf16.msra.mxu0 0
    %2342 = vmatprep.mubr.bf16.mxu0 0
    %2343 = vmatmul.mubr.bf16.gmra.mxu0 %v559
    %v2344 = vpop.f32.mrf.mxu0
    %v2345 = vadd.f32 %v2304, %v2344
    %v2346 = vpop.f32.mrf.mxu0
    %v2347 = vadd.f32 %v2306, %v2346
    %v2348 = vpop.f32.mrf.mxu0
    %v2349 = vpop.f32.mrf.mxu0
    %2350 = vdwg.mxu0
    %2351 = vmatprep.subr.bf16.mxu0 0
    %2352 = vmatpush1.bf16.msra.mxu0 %v1502
    %2353 = vmatprep.subr.bf16.mxu0 0
    %2354 = vmatpush1.bf16.msra.mxu0 %v1497
    %2355 = vmatprep.subr.bf16.mxu0 0
    %2356 = vmatpush1.bf16.msra.mxu0 %v1492
    %2357 = vmatprep.subr.bf16.mxu0 0
    %2358 = vmatpush1.bf16.msra.mxu0 %v1487
    %2359 = vmatprep.subr.bf16.mxu0 0
    %2360 = vmatpush1.bf16.msra.mxu0 %v1482
    %2361 = vmatprep.subr.bf16.mxu0 0
    %2362 = vmatpush1.bf16.msra.mxu0 %v1477
    %2363 = vmatprep.subr.bf16.mxu0 0
    %2364 = vmatpush1.bf16.msra.mxu0 %v1472
    %2365 = vmatprep.subr.bf16.mxu0 0
    %2366 = vmatpush1.bf16.msra.mxu0 %v1467
    %2367 = vmatprep.subr.bf16.mxu0 0
    %2368 = vmatpush2.bf16.msra.mxu0 %v1542
    %2369 = vmatprep.subr.bf16.mxu0 0
    %2370 = vmatpush2.bf16.msra.mxu0 %v1537
    %2371 = vmatprep.subr.bf16.mxu0 0
    %2372 = vmatpush2.bf16.msra.mxu0 %v1532
    %2373 = vmatprep.subr.bf16.mxu0 0
    %2374 = vmatpush2.bf16.msra.mxu0 %v1527
    %2375 = vmatprep.subr.bf16.mxu0 0
    %2376 = vmatpush2.bf16.msra.mxu0 %v1522
    %2377 = vmatprep.subr.bf16.mxu0 0
    %2378 = vmatpush2.bf16.msra.mxu0 %v1517
    %2379 = vmatprep.subr.bf16.mxu0 0
    %2380 = vmatpush2.bf16.msra.mxu0 %v1512
    %2381 = vmatprep.subr.bf16.mxu0 0
    %2382 = vmatpush2.bf16.msra.mxu0 %v1507
    %2383 = vmatprep.mubr.bf16.mxu0 %v554
    %2384 = vmatmul.mubr.bf16.gmra.mxu0 %v553
    %v2385 = vpop.f32.mrf.mxu0
    %v2386 = vadd.f32 0.0, %v2385
    %v2387 = vpop.f32.mrf.mxu0
    %v2388 = vpop.f32.mrf.mxu0
    %v2389 = vpop.f32.mrf.mxu0
    %2390 = vdwg.mxu0
    %2391 = vmatprep.subr.bf16.mxu0 0
    %2392 = vmatpush1.bf16.msra.mxu0 %v1582
    %2393 = vmatprep.subr.bf16.mxu0 0
    %2394 = vmatpush1.bf16.msra.mxu0 %v1577
    %2395 = vmatprep.subr.bf16.mxu0 0
    %2396 = vmatpush1.bf16.msra.mxu0 %v1572
    %2397 = vmatprep.subr.bf16.mxu0 0
    %2398 = vmatpush1.bf16.msra.mxu0 %v1567
    %2399 = vmatprep.subr.bf16.mxu0 0
    %2400 = vmatpush1.bf16.msra.mxu0 %v1562
    %2401 = vmatprep.subr.bf16.mxu0 0
    %2402 = vmatpush1.bf16.msra.mxu0 %v1557
    %2403 = vmatprep.subr.bf16.mxu0 0
    %2404 = vmatpush1.bf16.msra.mxu0 %v1552
    %2405 = vmatprep.subr.bf16.mxu0 0
    %2406 = vmatpush1.bf16.msra.mxu0 %v1547
    %2407 = vmatprep.subr.bf16.mxu0 0
    %2408 = vmatpush2.bf16.msra.mxu0 %v1622
    %2409 = vmatprep.subr.bf16.mxu0 0
    %2410 = vmatpush2.bf16.msra.mxu0 %v1617
    %2411 = vmatprep.subr.bf16.mxu0 0
    %2412 = vmatpush2.bf16.msra.mxu0 %v1612
    %2413 = vmatprep.subr.bf16.mxu0 0
    %2414 = vmatpush2.bf16.msra.mxu0 %v1607
    %2415 = vmatprep.subr.bf16.mxu0 0
    %2416 = vmatpush2.bf16.msra.mxu0 %v1602
    %2417 = vmatprep.subr.bf16.mxu0 0
    %2418 = vmatpush2.bf16.msra.mxu0 %v1597
    %2419 = vmatprep.subr.bf16.mxu0 0
    %2420 = vmatpush2.bf16.msra.mxu0 %v1592
    %2421 = vmatprep.subr.bf16.mxu0 0
    %2422 = vmatpush2.bf16.msra.mxu0 %v1587
    %2423 = vmatprep.mubr.bf16.mxu0 %v556
    %2424 = vmatmul.mubr.bf16.gmra.mxu0 %v555
    %v2425 = vpop.f32.mrf.mxu0
    %v2426 = vadd.f32 %v2386, %v2425
    %v2427 = vpop.f32.mrf.mxu0
    %v2428 = vpop.f32.mrf.mxu0
    %v2429 = vpop.f32.mrf.mxu0
    %2430 = vdwg.mxu0
    %2431 = vmatprep.subr.bf16.mxu0 0
    %2432 = vmatpush1.bf16.msra.mxu0 %v1662
    %2433 = vmatprep.subr.bf16.mxu0 0
    %2434 = vmatpush1.bf16.msra.mxu0 %v1657
    %2435 = vmatprep.subr.bf16.mxu0 0
    %2436 = vmatpush1.bf16.msra.mxu0 %v1652
    %2437 = vmatprep.subr.bf16.mxu0 0
    %2438 = vmatpush1.bf16.msra.mxu0 %v1647
    %2439 = vmatprep.subr.bf16.mxu0 0
    %2440 = vmatpush1.bf16.msra.mxu0 %v1642
    %2441 = vmatprep.subr.bf16.mxu0 0
    %2442 = vmatpush1.bf16.msra.mxu0 %v1637
    %2443 = vmatprep.subr.bf16.mxu0 0
    %2444 = vmatpush1.bf16.msra.mxu0 %v1632
    %2445 = vmatprep.subr.bf16.mxu0 0
    %2446 = vmatpush1.bf16.msra.mxu0 %v1627
    %2447 = vmatprep.subr.bf16.mxu0 0
    %2448 = vmatpush2.bf16.msra.mxu0 %v1702
    %2449 = vmatprep.subr.bf16.mxu0 0
    %2450 = vmatpush2.bf16.msra.mxu0 %v1697
    %2451 = vmatprep.subr.bf16.mxu0 0
    %2452 = vmatpush2.bf16.msra.mxu0 %v1692
    %2453 = vmatprep.subr.bf16.mxu0 0
    %2454 = vmatpush2.bf16.msra.mxu0 %v1687
    %2455 = vmatprep.subr.bf16.mxu0 0
    %2456 = vmatpush2.bf16.msra.mxu0 %v1682
    %2457 = vmatprep.subr.bf16.mxu0 0
    %2458 = vmatpush2.bf16.msra.mxu0 %v1677
    %2459 = vmatprep.subr.bf16.mxu0 0
    %2460 = vmatpush2.bf16.msra.mxu0 %v1672
    %2461 = vmatprep.subr.bf16.mxu0 0
    %2462 = vmatpush2.bf16.msra.mxu0 %v1667
    %2463 = vmatprep.mubr.bf16.mxu0 %v558
    %2464 = vmatmul.mubr.bf16.gmra.mxu0 %v557
    %v2465 = vpop.f32.mrf.mxu0
    %v2466 = vadd.f32 %v2426, %v2465
    %v2467 = vpop.f32.mrf.mxu0
    %v2468 = vpop.f32.mrf.mxu0
    %v2469 = vpop.f32.mrf.mxu0
    %2470 = vdwg.mxu0
    %2471 = vmatprep.subr.bf16.mxu0 0
    %2472 = vmatpush1.bf16.msra.mxu0 %v1742
    %2473 = vmatprep.subr.bf16.mxu0 0
    %2474 = vmatpush1.bf16.msra.mxu0 %v1737
    %2475 = vmatprep.subr.bf16.mxu0 0
    %2476 = vmatpush1.bf16.msra.mxu0 %v1732
    %2477 = vmatprep.subr.bf16.mxu0 0
    %2478 = vmatpush1.bf16.msra.mxu0 %v1727
    %2479 = vmatprep.subr.bf16.mxu0 0
    %2480 = vmatpush1.bf16.msra.mxu0 %v1722
    %2481 = vmatprep.subr.bf16.mxu0 0
    %2482 = vmatpush1.bf16.msra.mxu0 %v1717
    %2483 = vmatprep.subr.bf16.mxu0 0
    %2484 = vmatpush1.bf16.msra.mxu0 %v1712
    %2485 = vmatprep.subr.bf16.mxu0 0
    %2486 = vmatpush1.bf16.msra.mxu0 %v1707
    %2487 = vmatprep.subr.bf16.mxu0 0
    %2488 = vmatpush2.bf16.msra.mxu0 0
    %2489 = vmatprep.subr.bf16.mxu0 0
    %2490 = vmatpush2.bf16.msra.mxu0 0
    %2491 = vmatprep.subr.bf16.mxu0 0
    %2492 = vmatpush2.bf16.msra.mxu0 0
    %2493 = vmatprep.subr.bf16.mxu0 0
    %2494 = vmatpush2.bf16.msra.mxu0 0
    %2495 = vmatprep.subr.bf16.mxu0 0
    %2496 = vmatpush2.bf16.msra.mxu0 0
    %2497 = vmatprep.subr.bf16.mxu0 0
    %2498 = vmatpush2.bf16.msra.mxu0 0
    %2499 = vmatprep.subr.bf16.mxu0 0
    %2500 = vmatpush2.bf16.msra.mxu0 0
    %2501 = vmatprep.subr.bf16.mxu0 0
    %2502 = vmatpush2.bf16.msra.mxu0 0
    %2503 = vmatprep.mubr.bf16.mxu0 0
    %2504 = vmatmul.mubr.bf16.gmra.mxu0 %v559
    %v2505 = vpop.f32.mrf.mxu0
    %v2506 = vadd.f32 %v2466, %v2505
    %v2507 = vpop.f32.mrf.mxu0
    %v2508 = vpop.f32.mrf.mxu0
    %v2509 = vpop.f32.mrf.mxu0
    %2510 = vdwg.mxu0
    %v2511 = vld [vmem:[#allocation15] ss:$8 sm:$0xf]
    %v2512 = vld [vmem:[#allocation15] ss:$8 sm:$0x10]
    %v2513 = vor.u32 %v2511, %v2512
    %s2514 = scalar_lea.vmem [#allocation15], 1
    %v2515 = vld [vmem:[%s2514] ss:$8 sm:$0xf]
    %v2516 = vld [vmem:[%s2514] ss:$8 sm:$0x10]
    %v2517 = vor.u32 %v2515, %v2516
    %v2518 = vrot.slane %v2181, 4
    %v2519 = vadd.f32 %v2181, %v2518
    %v2520 = vrot.slane %v2519, 2
    %v2521 = vadd.f32 %v2519, %v2520
    %v2522 = vrot.slane %v2521, 1
    %v2523 = vadd.f32 %v2521, %v2522
    %v2524 = vrot.slane %v2183, 4
    %v2525 = vadd.f32 %v2183, %v2524
    %v2526 = vrot.slane %v2525, 2
    %v2527 = vadd.f32 %v2525, %v2526
    %v2528 = vrot.slane %v2527, 1
    %v2529 = vadd.f32 %v2527, %v2528
    %v2530 = vrot.slane %v2345, 4
    %v2531 = vadd.f32 %v2345, %v2530
    %v2532 = vrot.slane %v2531, 2
    %v2533 = vadd.f32 %v2531, %v2532
    %v2534 = vrot.slane %v2533, 1
    %v2535 = vadd.f32 %v2533, %v2534
    %v2536 = vrot.slane %v2347, 4
    %v2537 = vadd.f32 %v2347, %v2536
    %v2538 = vrot.slane %v2537, 2
    %v2539 = vadd.f32 %v2537, %v2538
    %v2540 = vrot.slane %v2539, 1
    %v2541 = vadd.f32 %v2539, %v2540
    %v2542 = vrot.slane %v2506, 4
    %v2543 = vadd.f32 %v2506, %v2542
    %v2544 = vrot.slane %v2543, 2
    %v2545 = vadd.f32 %v2543, %v2544
    %v2546 = vrot.slane %v2545, 1
    %v2547 = vadd.f32 %v2545, %v2546
    %v2548 = vmul.f32 %v2523, 0.125
    %v2549 = vmul.f32 %v2529, 0.125
    %v2550 = vmul.f32 %v2535, 0.125
    %v2551 = vmul.f32 %v2541, 0.125
    %v2552 = vmul.f32 %v2547, 0.125
    %v2553 = vmul.f32 %v2181, %v2181
    %v2554 = vmul.f32 %v2183, %v2183
    %v2555 = vmul.f32 %v2345, %v2345
    %v2556 = vmul.f32 %v2347, %v2347
    %v2557 = vmul.f32 %v2506, %v2506
    %v2558 = vrot.slane %v2553, 4
    %v2559 = vadd.f32 %v2553, %v2558
    %v2560 = vrot.slane %v2559, 2
    %v2561 = vadd.f32 %v2559, %v2560
    %v2562 = vrot.slane %v2561, 1
    %v2563 = vadd.f32 %v2561, %v2562
    %v2564 = vrot.slane %v2554, 4
    %v2565 = vadd.f32 %v2554, %v2564
    %v2566 = vrot.slane %v2565, 2
    %v2567 = vadd.f32 %v2565, %v2566
    %v2568 = vrot.slane %v2567, 1
    %v2569 = vadd.f32 %v2567, %v2568
    %v2570 = vrot.slane %v2555, 4
    %v2571 = vadd.f32 %v2555, %v2570
    %v2572 = vrot.slane %v2571, 2
    %v2573 = vadd.f32 %v2571, %v2572
    %v2574 = vrot.slane %v2573, 1
    %v2575 = vadd.f32 %v2573, %v2574
    %v2576 = vrot.slane %v2556, 4
    %v2577 = vadd.f32 %v2556, %v2576
    %v2578 = vrot.slane %v2577, 2
    %v2579 = vadd.f32 %v2577, %v2578
    %v2580 = vrot.slane %v2579, 1
    %v2581 = vadd.f32 %v2579, %v2580
    %v2582 = vrot.slane %v2557, 4
    %v2583 = vadd.f32 %v2557, %v2582
    %v2584 = vrot.slane %v2583, 2
    %v2585 = vadd.f32 %v2583, %v2584
    %v2586 = vrot.slane %v2585, 1
    %v2587 = vadd.f32 %v2585, %v2586
    %v2588 = vmul.f32 %v2563, 0.125
    %v2589 = vmul.f32 %v2569, 0.125
    %v2590 = vmul.f32 %v2575, 0.125
    %v2591 = vmul.f32 %v2581, 0.125
    %v2592 = vmul.f32 %v2587, 0.125
    %v2593 = vmul.f32 %v2548, %v2548
    %v2594 = vmul.f32 %v2549, %v2549
    %v2595 = vmul.f32 %v2550, %v2550
    %v2596 = vmul.f32 %v2551, %v2551
    %v2597 = vmul.f32 %v2552, %v2552
    %v2598 = vsub.f32 %v2588, %v2593
    %v2599 = vsub.f32 %v2589, %v2594
    %v2600 = vsub.f32 %v2590, %v2595
    %v2601 = vsub.f32 %v2591, %v2596
    %v2602 = vsub.f32 %v2592, %v2597
    %v2603 = vsub.f32 %v2181, %v2548
    %v2604 = vsub.f32 %v2183, %v2549
    %v2605 = vsub.f32 %v2345, %v2550
    %v2606 = vsub.f32 %v2347, %v2551
    %v2607 = vsub.f32 %v2506, %v2552
    %v2608 = vadd.f32 %v2598, 1e-05
    %v2609 = vadd.f32 %v2599, 1e-05
    %v2610 = vadd.f32 %v2600, 1e-05
    %v2611 = vadd.f32 %v2601, 1e-05
    %v2612 = vadd.f32 %v2602, 1e-05
    %v2613 = vrsqrt.pop %v2608
    %v2614 = vrsqrt.pop %v2609
    %v2615 = vrsqrt.pop %v2610
    %v2616 = vrsqrt.pop %v2611
    %v2617 = vrsqrt.pop %v2612
    %v2618 = vmul.f32 %v2603, %v2613
    %v2619 = vmul.f32 %v2604, %v2614
    %v2620 = vmul.f32 %v2605, %v2615
    %v2621 = vmul.f32 %v2606, %v2616
    %v2622 = vmul.f32 %v2607, %v2617
    %v2624 = vlaneseq
    %v2625 = vshrl.u32 %v2624, 7
    %v2626 = vsub.s32 0, %v2625
    %v2627 = vrot.slane %v2513, %v2626
    %v2628 = vlaneseq
    %v2629 = vshrl.u32 %v2628, 7
    %v2630 = vsub.s32 1, %v2629
    %v2631 = vrot.slane %v2513, %v2630
    %v2632 = vlaneseq
    %v2633 = vshrl.u32 %v2632, 7
    %v2634 = vsub.s32 2, %v2633
    %v2635 = vrot.slane %v2513, %v2634
    %v2636 = vlaneseq
    %v2637 = vshrl.u32 %v2636, 7
    %v2638 = vsub.s32 3, %v2637
    %v2639 = vrot.slane %v2513, %v2638
    %v2640 = vlaneseq
    %v2641 = vshrl.u32 %v2640, 7
    %v2642 = vsub.s32 4, %v2641
    %v2643 = vrot.slane %v2513, %v2642
    %v2649 = vmul.f32 %v2618, %v2627
    %v2650 = vmul.f32 %v2619, %v2631
    %v2651 = vmul.f32 %v2620, %v2635
    %v2652 = vmul.f32 %v2621, %v2639
    %v2653 = vmul.f32 %v2622, %v2643
    %v2655 = vlaneseq
    %v2656 = vshrl.u32 %v2655, 7
    %v2657 = vsub.s32 0, %v2656
    %v2658 = vrot.slane %v2517, %v2657
    %v2659 = vlaneseq
    %v2660 = vshrl.u32 %v2659, 7
    %v2661 = vsub.s32 1, %v2660
    %v2662 = vrot.slane %v2517, %v2661
    %v2663 = vlaneseq
    %v2664 = vshrl.u32 %v2663, 7
    %v2665 = vsub.s32 2, %v2664
    %v2666 = vrot.slane %v2517, %v2665
    %v2667 = vlaneseq
    %v2668 = vshrl.u32 %v2667, 7
    %v2669 = vsub.s32 3, %v2668
    %v2670 = vrot.slane %v2517, %v2669
    %v2671 = vlaneseq
    %v2672 = vshrl.u32 %v2671, 7
    %v2673 = vsub.s32 4, %v2672
    %v2674 = vrot.slane %v2517, %v2673
    %v2680 = vadd.f32 %v2649, %v2658
    %v2681 = vadd.f32 %v2650, %v2662
    %v2682 = vadd.f32 %v2651, %v2666
    %v2683 = vadd.f32 %v2652, %v2670
    %v2684 = vadd.f32 %v2653, %v2674
    %v2685 = vmax.f32 %v2680, 0.0
    %v2686 = vmax.f32 %v2681, 0.0
    %v2687 = vmax.f32 %v2682, 0.0
    %v2688 = vmax.f32 %v2683, 0.0
    %v2689 = vmax.f32 %v2684, 0.0
    %v2690 = vpack.c.bf16 %v2685, %v2685
    %v2691 = vpack.c.bf16 %v2686, %v2686
    %v2692 = vpack.c.bf16 %v2687, %v2687
    %v2693 = vpack.c.bf16 %v2688, %v2688
    %v2694 = vpack.c.bf16 %v2689, %v2689
    %v2695 = vld [vmem:[#allocation10] sm:$0xff]
    %v2696 = vld [vmem:[#allocation10 + $0x8] sm:$0xff]
    %v2697 = vld [vmem:[#allocation10 + $0x10] sm:$0xff]
    %v2698 = vld [vmem:[#allocation10 + $0x18] sm:$0xff]
    %v2699 = vld [vmem:[#allocation10 + $0x20] sm:$0xff]
    %v2700 = vld [vmem:[#allocation10 + $0x28] sm:$0xff]
    %v2701 = vld [vmem:[#allocation10 + $0x30] sm:$0xff]
    %v2702 = vld [vmem:[#allocation10 + $0x38] sm:$0xff]
    %v2703 = vld [vmem:[#allocation10 + $0x40] sm:$0xff]
    %v2704 = vld [vmem:[#allocation10 + $0x48] sm:$0xff]
    %v2705 = vld [vmem:[#allocation10 + $0x50] sm:$0xff]
    %v2706 = vld [vmem:[#allocation10 + $0x58] sm:$0xff]
    %v2707 = vld [vmem:[#allocation10 + $0x60] sm:$0xff]
    %v2708 = vld [vmem:[#allocation10 + $0x68] sm:$0xff]
    %v2709 = vld [vmem:[#allocation10 + $0x70] sm:$0xff]
    %v2710 = vld [vmem:[#allocation10 + $0x78] sm:$0xff]
    %v2711 = vld [vmem:[#allocation10 + $0x80] sm:$0xff]
    %v2712 = vld [vmem:[#allocation10 + $0x88] sm:$0xff]
    %v2713 = vld [vmem:[#allocation10 + $0x90] sm:$0xff]
    %v2714 = vld [vmem:[#allocation10 + $0x98] sm:$0xff]
    %v2715 = vld [vmem:[#allocation10 + $0xa0] sm:$0xff]
    %v2716 = vld [vmem:[#allocation10 + $0xa8] sm:$0xff]
    %v2717 = vld [vmem:[#allocation10 + $0xb0] sm:$0xff]
    %v2718 = vld [vmem:[#allocation10 + $0xb8] sm:$0xff]
    %v2719 = vld [vmem:[#allocation10 + $0xc0] sm:$0xff]
    %v2720 = vld [vmem:[#allocation10 + $0xc8] sm:$0xff]
    %v2721 = vld [vmem:[#allocation10 + $0xd0] sm:$0xff]
    %v2722 = vld [vmem:[#allocation10 + $0xd8] sm:$0xff]
    %v2723 = vld [vmem:[#allocation10 + $0xe0] sm:$0xff]
    %v2724 = vld [vmem:[#allocation10 + $0xe8] sm:$0xff]
    %v2725 = vld [vmem:[#allocation10 + $0xf0] sm:$0xff]
    %v2726 = vld [vmem:[#allocation10 + $0xf8] sm:$0xff]
    %v2727 = vld [vmem:[#allocation10 + $0x100] sm:$0xff]
    %v2728 = vld [vmem:[#allocation10 + $0x108] sm:$0xff]
    %v2729 = vld [vmem:[#allocation10 + $0x110] sm:$0xff]
    %v2730 = vld [vmem:[#allocation10 + $0x118] sm:$0xff]
    %v2731 = vld [vmem:[#allocation10 + $0x120] sm:$0xff]
    %v2732 = vld [vmem:[#allocation10 + $0x128] sm:$0xff]
    %v2733 = vld [vmem:[#allocation10 + $0x130] sm:$0xff]
    %v2734 = vld [vmem:[#allocation10 + $0x138] sm:$0xff]
    %v2735 = vld [vmem:[#allocation10 + $0x140] sm:$0xff]
    %v2736 = vld [vmem:[#allocation10 + $0x148] sm:$0xff]
    %v2737 = vld [vmem:[#allocation10 + $0x150] sm:$0xff]
    %v2738 = vld [vmem:[#allocation10 + $0x158] sm:$0xff]
    %v2739 = vld [vmem:[#allocation10 + $0x160] sm:$0xff]
    %v2740 = vld [vmem:[#allocation10 + $0x168] sm:$0xff]
    %v2741 = vld [vmem:[#allocation10 + $0x170] sm:$0xff]
    %v2742 = vld [vmem:[#allocation10 + $0x178] sm:$0xff]
    %v2743 = vld [vmem:[#allocation10 + $0x180] sm:$0xff]
    %v2744 = vld [vmem:[#allocation10 + $0x188] sm:$0xff]
    %v2745 = vld [vmem:[#allocation10 + $0x190] sm:$0xff]
    %v2746 = vld [vmem:[#allocation10 + $0x198] sm:$0xff]
    %v2747 = vld [vmem:[#allocation10 + $0x1a0] sm:$0xff]
    %v2748 = vld [vmem:[#allocation10 + $0x1a8] sm:$0xff]
    %v2749 = vld [vmem:[#allocation10 + $0x1b0] sm:$0xff]
    %v2750 = vld [vmem:[#allocation10 + $0x1b8] sm:$0xff]
    %v2751 = vld [vmem:[#allocation10 + $0x1c0] sm:$0xff]
    %v2752 = vld [vmem:[#allocation10 + $0x1c8] sm:$0xff]
    %v2753 = vld [vmem:[#allocation10 + $0x1d0] sm:$0xff]
    %v2754 = vld [vmem:[#allocation10 + $0x1d8] sm:$0xff]
    %v2755 = vld [vmem:[#allocation10 + $0x1e0] sm:$0xff]
    %v2756 = vld [vmem:[#allocation10 + $0x1e8] sm:$0xff]
    %v2757 = vld [vmem:[#allocation10 + $0x1f0] sm:$0xff]
    %v2758 = vld [vmem:[#allocation10 + $0x1f8] sm:$0xff]
    %v2759 = vld [vmem:[#allocation10 + $0x200] sm:$0xff]
    %v2760 = vld [vmem:[#allocation10 + $0x208] sm:$0xff]
    %v2761 = vld [vmem:[#allocation10 + $0x210] sm:$0xff]
    %v2762 = vld [vmem:[#allocation10 + $0x218] sm:$0xff]
    %v2763 = vld [vmem:[#allocation10 + $0x220] sm:$0xff]
    %v2764 = vld [vmem:[#allocation10 + $0x228] sm:$0xff]
    %v2765 = vld [vmem:[#allocation10 + $0x230] sm:$0xff]
    %v2766 = vld [vmem:[#allocation10 + $0x238] sm:$0xff]
    %v2767 = vld [vmem:[#allocation10 + $0x240] sm:$0xff]
    %v2768 = vld [vmem:[#allocation10 + $0x248] sm:$0xff]
    %v2769 = vld [vmem:[#allocation10 + $0x250] sm:$0xff]
    %v2770 = vld [vmem:[#allocation10 + $0x258] sm:$0xff]
    %v2771 = vld [vmem:[#allocation10 + $0x260] sm:$0xff]
    %v2772 = vld [vmem:[#allocation10 + $0x268] sm:$0xff]
    %v2773 = vld [vmem:[#allocation10 + $0x270] sm:$0xff]
    %v2774 = vld [vmem:[#allocation10 + $0x278] sm:$0xff]
    %v2775 = vld [vmem:[#allocation10 + $0x280] sm:$0xff]
    %v2776 = vld [vmem:[#allocation10 + $0x288] sm:$0xff]
    %v2777 = vld [vmem:[#allocation10 + $0x290] sm:$0xff]
    %v2778 = vld [vmem:[#allocation10 + $0x298] sm:$0xff]
    %v2779 = vld [vmem:[#allocation10 + $0x2a0] sm:$0xff]
    %v2780 = vld [vmem:[#allocation10 + $0x2a8] sm:$0xff]
    %v2781 = vld [vmem:[#allocation10 + $0x2b0] sm:$0xff]
    %v2782 = vld [vmem:[#allocation10 + $0x2b8] sm:$0xff]
    %v2783 = vld [vmem:[#allocation10 + $0x2c0] sm:$0xff]
    %v2784 = vld [vmem:[#allocation10 + $0x2c8] sm:$0xff]
    %v2785 = vld [vmem:[#allocation10 + $0x2d0] sm:$0xff]
    %v2786 = vld [vmem:[#allocation10 + $0x2d8] sm:$0xff]
    %v2787 = vld [vmem:[#allocation10 + $0x2e0] sm:$0xff]
    %v2788 = vld [vmem:[#allocation10 + $0x2e8] sm:$0xff]
    %v2789 = vld [vmem:[#allocation10 + $0x2f0] sm:$0xff]
    %v2790 = vld [vmem:[#allocation10 + $0x2f8] sm:$0xff]
    %v2791 = vld [vmem:[#allocation10 + $0x300] sm:$0xff]
    %v2792 = vld [vmem:[#allocation10 + $0x308] sm:$0xff]
    %v2793 = vld [vmem:[#allocation10 + $0x310] sm:$0xff]
    %v2794 = vld [vmem:[#allocation10 + $0x318] sm:$0xff]
    %v2795 = vld [vmem:[#allocation10 + $0x320] sm:$0xff]
    %v2796 = vld [vmem:[#allocation10 + $0x328] sm:$0xff]
    %v2797 = vld [vmem:[#allocation10 + $0x330] sm:$0xff]
    %v2798 = vld [vmem:[#allocation10 + $0x338] sm:$0xff]
    %v2799 = vld [vmem:[#allocation10 + $0x340] sm:$0xff]
    %v2800 = vld [vmem:[#allocation10 + $0x348] sm:$0xff]
    %v2801 = vld [vmem:[#allocation10 + $0x350] sm:$0xff]
    %v2802 = vld [vmem:[#allocation10 + $0x358] sm:$0xff]
    %v2803 = vld [vmem:[#allocation10 + $0x360] sm:$0xff]
    %v2804 = vld [vmem:[#allocation10 + $0x368] sm:$0xff]
    %v2805 = vld [vmem:[#allocation10 + $0x370] sm:$0xff]
    %v2806 = vld [vmem:[#allocation10 + $0x378] sm:$0xff]
    %v2807 = vld [vmem:[#allocation10 + $0x380] sm:$0xff]
    %v2808 = vld [vmem:[#allocation10 + $0x388] sm:$0xff]
    %v2809 = vld [vmem:[#allocation10 + $0x390] sm:$0xff]
    %v2810 = vld [vmem:[#allocation10 + $0x398] sm:$0xff]
    %v2811 = vld [vmem:[#allocation10 + $0x3a0] sm:$0xff]
    %v2812 = vld [vmem:[#allocation10 + $0x3a8] sm:$0xff]
    %v2813 = vld [vmem:[#allocation10 + $0x3b0] sm:$0xff]
    %v2814 = vld [vmem:[#allocation10 + $0x3b8] sm:$0xff]
    %v2815 = vld [vmem:[#allocation10 + $0x3c0] sm:$0xff]
    %v2816 = vld [vmem:[#allocation10 + $0x3c8] sm:$0xff]
    %v2817 = vld [vmem:[#allocation10 + $0x3d0] sm:$0xff]
    %v2818 = vld [vmem:[#allocation10 + $0x3d8] sm:$0xff]
    %v2819 = vld [vmem:[#allocation10 + $0x3e0] sm:$0xff]
    %v2820 = vld [vmem:[#allocation10 + $0x3e8] sm:$0xff]
    %v2821 = vld [vmem:[#allocation10 + $0x3f0] sm:$0xff]
    %v2822 = vld [vmem:[#allocation10 + $0x3f8] sm:$0xff]
    %v2823 = vld [vmem:[#allocation10 + $0x400] sm:$0xff]
    %v2824 = vld [vmem:[#allocation10 + $0x408] sm:$0xff]
    %v2825 = vld [vmem:[#allocation10 + $0x410] sm:$0xff]
    %v2826 = vld [vmem:[#allocation10 + $0x418] sm:$0xff]
    %v2827 = vld [vmem:[#allocation10 + $0x420] sm:$0xff]
    %v2828 = vld [vmem:[#allocation10 + $0x428] sm:$0xff]
    %v2829 = vld [vmem:[#allocation10 + $0x430] sm:$0xff]
    %v2830 = vld [vmem:[#allocation10 + $0x438] sm:$0xff]
    %v2831 = vld [vmem:[#allocation10 + $0x440] sm:$0xff]
    %v2832 = vld [vmem:[#allocation10 + $0x448] sm:$0xff]
    %v2833 = vld [vmem:[#allocation10 + $0x450] sm:$0xff]
    %v2834 = vld [vmem:[#allocation10 + $0x458] sm:$0xff]
    %v2835 = vld [vmem:[#allocation10 + $0x460] sm:$0xff]
    %v2836 = vld [vmem:[#allocation10 + $0x468] sm:$0xff]
    %v2837 = vld [vmem:[#allocation10 + $0x470] sm:$0xff]
    %v2838 = vld [vmem:[#allocation10 + $0x478] sm:$0xff]
    %v2839 = vld [vmem:[#allocation10 + $0x480] sm:$0xff]
    %v2840 = vld [vmem:[#allocation10 + $0x488] sm:$0xff]
    %v2841 = vld [vmem:[#allocation10 + $0x490] sm:$0xff]
    %v2842 = vld [vmem:[#allocation10 + $0x498] sm:$0xff]
    %v2843 = vld [vmem:[#allocation10 + $0x4a0] sm:$0xff]
    %v2844 = vld [vmem:[#allocation10 + $0x4a8] sm:$0xff]
    %v2845 = vld [vmem:[#allocation10 + $0x4b0] sm:$0xff]
    %v2846 = vld [vmem:[#allocation10 + $0x4b8] sm:$0xff]
    %v2847 = vld [vmem:[#allocation10 + $0x4c0] sm:$0xff]
    %v2848 = vld [vmem:[#allocation10 + $0x4c8] sm:$0xff]
    %v2849 = vld [vmem:[#allocation10 + $0x4d0] sm:$0xff]
    %v2850 = vld [vmem:[#allocation10 + $0x4d8] sm:$0xff]
    %v2851 = vld [vmem:[#allocation10 + $0x4e0] sm:$0xff]
    %v2852 = vld [vmem:[#allocation10 + $0x4e8] sm:$0xff]
    %v2853 = vld [vmem:[#allocation10 + $0x4f0] sm:$0xff]
    %v2854 = vld [vmem:[#allocation10 + $0x4f8] sm:$0xff]
    %v3015 = vunpack.c.l.b16 %v2695
    %v3016 = vunpack.c.h.b16 %v2695
    %v3017 = vunpack.c.l.b16 %v2696
    %v3018 = vunpack.c.h.b16 %v2696
    %v3019 = vunpack.c.l.b16 %v2697
    %v3020 = vunpack.c.h.b16 %v2697
    %v3021 = vunpack.c.l.b16 %v2698
    %v3022 = vunpack.c.h.b16 %v2698
    %v3023 = vunpack.c.l.b16 %v2699
    %v3024 = vunpack.c.h.b16 %v2699
    %v3025 = vunpack.c.l.b16 %v2700
    %v3026 = vunpack.c.h.b16 %v2700
    %v3027 = vunpack.c.l.b16 %v2701
    %v3028 = vunpack.c.h.b16 %v2701
    %v3029 = vunpack.c.l.b16 %v2702
    %v3030 = vunpack.c.h.b16 %v2702
    %v3031 = vunpack.c.l.b16 %v2703
    %v3032 = vunpack.c.h.b16 %v2703
    %v3033 = vunpack.c.l.b16 %v2704
    %v3034 = vunpack.c.h.b16 %v2704
    %v3035 = vunpack.c.l.b16 %v2705
    %v3036 = vunpack.c.h.b16 %v2705
    %v3037 = vunpack.c.l.b16 %v2706
    %v3038 = vunpack.c.h.b16 %v2706
    %v3039 = vunpack.c.l.b16 %v2707
    %v3040 = vunpack.c.h.b16 %v2707
    %v3041 = vunpack.c.l.b16 %v2708
    %v3042 = vunpack.c.h.b16 %v2708
    %v3043 = vunpack.c.l.b16 %v2709
    %v3044 = vunpack.c.h.b16 %v2709
    %v3045 = vunpack.c.l.b16 %v2710
    %v3046 = vunpack.c.h.b16 %v2710
    %v3047 = vunpack.c.l.b16 %v2711
    %v3048 = vunpack.c.h.b16 %v2711
    %v3049 = vunpack.c.l.b16 %v2712
    %v3050 = vunpack.c.h.b16 %v2712
    %v3051 = vunpack.c.l.b16 %v2713
    %v3052 = vunpack.c.h.b16 %v2713
    %v3053 = vunpack.c.l.b16 %v2714
    %v3054 = vunpack.c.h.b16 %v2714
    %v3055 = vunpack.c.l.b16 %v2715
    %v3056 = vunpack.c.h.b16 %v2715
    %v3057 = vunpack.c.l.b16 %v2716
    %v3058 = vunpack.c.h.b16 %v2716
    %v3059 = vunpack.c.l.b16 %v2717
    %v3060 = vunpack.c.h.b16 %v2717
    %v3061 = vunpack.c.l.b16 %v2718
    %v3062 = vunpack.c.h.b16 %v2718
    %v3063 = vunpack.c.l.b16 %v2719
    %v3064 = vunpack.c.h.b16 %v2719
    %v3065 = vunpack.c.l.b16 %v2720
    %v3066 = vunpack.c.h.b16 %v2720
    %v3067 = vunpack.c.l.b16 %v2721
    %v3068 = vunpack.c.h.b16 %v2721
    %v3069 = vunpack.c.l.b16 %v2722
    %v3070 = vunpack.c.h.b16 %v2722
    %v3071 = vunpack.c.l.b16 %v2723
    %v3072 = vunpack.c.h.b16 %v2723
    %v3073 = vunpack.c.l.b16 %v2724
    %v3074 = vunpack.c.h.b16 %v2724
    %v3075 = vunpack.c.l.b16 %v2725
    %v3076 = vunpack.c.h.b16 %v2725
    %v3077 = vunpack.c.l.b16 %v2726
    %v3078 = vunpack.c.h.b16 %v2726
    %v3079 = vunpack.c.l.b16 %v2727
    %v3080 = vunpack.c.h.b16 %v2727
    %v3081 = vunpack.c.l.b16 %v2728
    %v3082 = vunpack.c.h.b16 %v2728
    %v3083 = vunpack.c.l.b16 %v2729
    %v3084 = vunpack.c.h.b16 %v2729
    %v3085 = vunpack.c.l.b16 %v2730
    %v3086 = vunpack.c.h.b16 %v2730
    %v3087 = vunpack.c.l.b16 %v2731
    %v3088 = vunpack.c.h.b16 %v2731
    %v3089 = vunpack.c.l.b16 %v2732
    %v3090 = vunpack.c.h.b16 %v2732
    %v3091 = vunpack.c.l.b16 %v2733
    %v3092 = vunpack.c.h.b16 %v2733
    %v3093 = vunpack.c.l.b16 %v2734
    %v3094 = vunpack.c.h.b16 %v2734
    %v3095 = vunpack.c.l.b16 %v2735
    %v3096 = vunpack.c.h.b16 %v2735
    %v3097 = vunpack.c.l.b16 %v2736
    %v3098 = vunpack.c.h.b16 %v2736
    %v3099 = vunpack.c.l.b16 %v2737
    %v3100 = vunpack.c.h.b16 %v2737
    %v3101 = vunpack.c.l.b16 %v2738
    %v3102 = vunpack.c.h.b16 %v2738
    %v3103 = vunpack.c.l.b16 %v2739
    %v3104 = vunpack.c.h.b16 %v2739
    %v3105 = vunpack.c.l.b16 %v2740
    %v3106 = vunpack.c.h.b16 %v2740
    %v3107 = vunpack.c.l.b16 %v2741
    %v3108 = vunpack.c.h.b16 %v2741
    %v3109 = vunpack.c.l.b16 %v2742
    %v3110 = vunpack.c.h.b16 %v2742
    %v3111 = vunpack.c.l.b16 %v2743
    %v3112 = vunpack.c.h.b16 %v2743
    %v3113 = vunpack.c.l.b16 %v2744
    %v3114 = vunpack.c.h.b16 %v2744
    %v3115 = vunpack.c.l.b16 %v2745
    %v3116 = vunpack.c.h.b16 %v2745
    %v3117 = vunpack.c.l.b16 %v2746
    %v3118 = vunpack.c.h.b16 %v2746
    %v3119 = vunpack.c.l.b16 %v2747
    %v3120 = vunpack.c.h.b16 %v2747
    %v3121 = vunpack.c.l.b16 %v2748
    %v3122 = vunpack.c.h.b16 %v2748
    %v3123 = vunpack.c.l.b16 %v2749
    %v3124 = vunpack.c.h.b16 %v2749
    %v3125 = vunpack.c.l.b16 %v2750
    %v3126 = vunpack.c.h.b16 %v2750
    %v3127 = vunpack.c.l.b16 %v2751
    %v3128 = vunpack.c.h.b16 %v2751
    %v3129 = vunpack.c.l.b16 %v2752
    %v3130 = vunpack.c.h.b16 %v2752
    %v3131 = vunpack.c.l.b16 %v2753
    %v3132 = vunpack.c.h.b16 %v2753
    %v3133 = vunpack.c.l.b16 %v2754
    %v3134 = vunpack.c.h.b16 %v2754
    %v3135 = vunpack.c.l.b16 %v2755
    %v3136 = vunpack.c.h.b16 %v2755
    %v3137 = vunpack.c.l.b16 %v2756
    %v3138 = vunpack.c.h.b16 %v2756
    %v3139 = vunpack.c.l.b16 %v2757
    %v3140 = vunpack.c.h.b16 %v2757
    %v3141 = vunpack.c.l.b16 %v2758
    %v3142 = vunpack.c.h.b16 %v2758
    %v3143 = vunpack.c.l.b16 %v2759
    %v3144 = vunpack.c.h.b16 %v2759
    %v3145 = vunpack.c.l.b16 %v2760
    %v3146 = vunpack.c.h.b16 %v2760
    %v3147 = vunpack.c.l.b16 %v2761
    %v3148 = vunpack.c.h.b16 %v2761
    %v3149 = vunpack.c.l.b16 %v2762
    %v3150 = vunpack.c.h.b16 %v2762
    %v3151 = vunpack.c.l.b16 %v2763
    %v3152 = vunpack.c.h.b16 %v2763
    %v3153 = vunpack.c.l.b16 %v2764
    %v3154 = vunpack.c.h.b16 %v2764
    %v3155 = vunpack.c.l.b16 %v2765
    %v3156 = vunpack.c.h.b16 %v2765
    %v3157 = vunpack.c.l.b16 %v2766
    %v3158 = vunpack.c.h.b16 %v2766
    %v3159 = vunpack.c.l.b16 %v2767
    %v3160 = vunpack.c.h.b16 %v2767
    %v3161 = vunpack.c.l.b16 %v2768
    %v3162 = vunpack.c.h.b16 %v2768
    %v3163 = vunpack.c.l.b16 %v2769
    %v3164 = vunpack.c.h.b16 %v2769
    %v3165 = vunpack.c.l.b16 %v2770
    %v3166 = vunpack.c.h.b16 %v2770
    %v3167 = vunpack.c.l.b16 %v2771
    %v3168 = vunpack.c.h.b16 %v2771
    %v3169 = vunpack.c.l.b16 %v2772
    %v3170 = vunpack.c.h.b16 %v2772
    %v3171 = vunpack.c.l.b16 %v2773
    %v3172 = vunpack.c.h.b16 %v2773
    %v3173 = vunpack.c.l.b16 %v2774
    %v3174 = vunpack.c.h.b16 %v2774
    %v3175 = vunpack.c.l.b16 %v2775
    %v3176 = vunpack.c.h.b16 %v2775
    %v3177 = vunpack.c.l.b16 %v2776
    %v3178 = vunpack.c.h.b16 %v2776
    %v3179 = vunpack.c.l.b16 %v2777
    %v3180 = vunpack.c.h.b16 %v2777
    %v3181 = vunpack.c.l.b16 %v2778
    %v3182 = vunpack.c.h.b16 %v2778
    %v3183 = vunpack.c.l.b16 %v2779
    %v3184 = vunpack.c.h.b16 %v2779
    %v3185 = vunpack.c.l.b16 %v2780
    %v3186 = vunpack.c.h.b16 %v2780
    %v3187 = vunpack.c.l.b16 %v2781
    %v3188 = vunpack.c.h.b16 %v2781
    %v3189 = vunpack.c.l.b16 %v2782
    %v3190 = vunpack.c.h.b16 %v2782
    %v3191 = vunpack.c.l.b16 %v2783
    %v3192 = vunpack.c.h.b16 %v2783
    %v3193 = vunpack.c.l.b16 %v2784
    %v3194 = vunpack.c.h.b16 %v2784
    %v3195 = vunpack.c.l.b16 %v2785
    %v3196 = vunpack.c.h.b16 %v2785
    %v3197 = vunpack.c.l.b16 %v2786
    %v3198 = vunpack.c.h.b16 %v2786
    %v3199 = vunpack.c.l.b16 %v2787
    %v3200 = vunpack.c.h.b16 %v2787
    %v3201 = vunpack.c.l.b16 %v2788
    %v3202 = vunpack.c.h.b16 %v2788
    %v3203 = vunpack.c.l.b16 %v2789
    %v3204 = vunpack.c.h.b16 %v2789
    %v3205 = vunpack.c.l.b16 %v2790
    %v3206 = vunpack.c.h.b16 %v2790
    %v3207 = vunpack.c.l.b16 %v2791
    %v3208 = vunpack.c.h.b16 %v2791
    %v3209 = vunpack.c.l.b16 %v2792
    %v3210 = vunpack.c.h.b16 %v2792
    %v3211 = vunpack.c.l.b16 %v2793
    %v3212 = vunpack.c.h.b16 %v2793
    %v3213 = vunpack.c.l.b16 %v2794
    %v3214 = vunpack.c.h.b16 %v2794
    %v3215 = vunpack.c.l.b16 %v2795
    %v3216 = vunpack.c.h.b16 %v2795
    %v3217 = vunpack.c.l.b16 %v2796
    %v3218 = vunpack.c.h.b16 %v2796
    %v3219 = vunpack.c.l.b16 %v2797
    %v3220 = vunpack.c.h.b16 %v2797
    %v3221 = vunpack.c.l.b16 %v2798
    %v3222 = vunpack.c.h.b16 %v2798
    %v3223 = vunpack.c.l.b16 %v2799
    %v3224 = vunpack.c.h.b16 %v2799
    %v3225 = vunpack.c.l.b16 %v2800
    %v3226 = vunpack.c.h.b16 %v2800
    %v3227 = vunpack.c.l.b16 %v2801
    %v3228 = vunpack.c.h.b16 %v2801
    %v3229 = vunpack.c.l.b16 %v2802
    %v3230 = vunpack.c.h.b16 %v2802
    %v3231 = vunpack.c.l.b16 %v2803
    %v3232 = vunpack.c.h.b16 %v2803
    %v3233 = vunpack.c.l.b16 %v2804
    %v3234 = vunpack.c.h.b16 %v2804
    %v3235 = vunpack.c.l.b16 %v2805
    %v3236 = vunpack.c.h.b16 %v2805
    %v3237 = vunpack.c.l.b16 %v2806
    %v3238 = vunpack.c.h.b16 %v2806
    %v3239 = vunpack.c.l.b16 %v2807
    %v3240 = vunpack.c.h.b16 %v2807
    %v3241 = vunpack.c.l.b16 %v2808
    %v3242 = vunpack.c.h.b16 %v2808
    %v3243 = vunpack.c.l.b16 %v2809
    %v3244 = vunpack.c.h.b16 %v2809
    %v3245 = vunpack.c.l.b16 %v2810
    %v3246 = vunpack.c.h.b16 %v2810
    %v3247 = vunpack.c.l.b16 %v2811
    %v3248 = vunpack.c.h.b16 %v2811
    %v3249 = vunpack.c.l.b16 %v2812
    %v3250 = vunpack.c.h.b16 %v2812
    %v3251 = vunpack.c.l.b16 %v2813
    %v3252 = vunpack.c.h.b16 %v2813
    %v3253 = vunpack.c.l.b16 %v2814
    %v3254 = vunpack.c.h.b16 %v2814
    %v3255 = vunpack.c.l.b16 %v2815
    %v3256 = vunpack.c.h.b16 %v2815
    %v3257 = vunpack.c.l.b16 %v2816
    %v3258 = vunpack.c.h.b16 %v2816
    %v3259 = vunpack.c.l.b16 %v2817
    %v3260 = vunpack.c.h.b16 %v2817
    %v3261 = vunpack.c.l.b16 %v2818
    %v3262 = vunpack.c.h.b16 %v2818
    %v3263 = vunpack.c.l.b16 %v2819
    %v3264 = vunpack.c.h.b16 %v2819
    %v3265 = vunpack.c.l.b16 %v2820
    %v3266 = vunpack.c.h.b16 %v2820
    %v3267 = vunpack.c.l.b16 %v2821
    %v3268 = vunpack.c.h.b16 %v2821
    %v3269 = vunpack.c.l.b16 %v2822
    %v3270 = vunpack.c.h.b16 %v2822
    %v3271 = vunpack.c.l.b16 %v2823
    %v3272 = vunpack.c.h.b16 %v2823
    %v3273 = vunpack.c.l.b16 %v2824
    %v3274 = vunpack.c.h.b16 %v2824
    %v3275 = vunpack.c.l.b16 %v2825
    %v3276 = vunpack.c.h.b16 %v2825
    %v3277 = vunpack.c.l.b16 %v2826
    %v3278 = vunpack.c.h.b16 %v2826
    %v3279 = vunpack.c.l.b16 %v2827
    %v3280 = vunpack.c.h.b16 %v2827
    %v3281 = vunpack.c.l.b16 %v2828
    %v3282 = vunpack.c.h.b16 %v2828
    %v3283 = vunpack.c.l.b16 %v2829
    %v3284 = vunpack.c.h.b16 %v2829
    %v3285 = vunpack.c.l.b16 %v2830
    %v3286 = vunpack.c.h.b16 %v2830
    %v3287 = vunpack.c.l.b16 %v2831
    %v3288 = vunpack.c.h.b16 %v2831
    %v3289 = vunpack.c.l.b16 %v2832
    %v3290 = vunpack.c.h.b16 %v2832
    %v3291 = vunpack.c.l.b16 %v2833
    %v3292 = vunpack.c.h.b16 %v2833
    %v3293 = vunpack.c.l.b16 %v2834
    %v3294 = vunpack.c.h.b16 %v2834
    %v3295 = vunpack.c.l.b16 %v2835
    %v3296 = vunpack.c.h.b16 %v2835
    %v3297 = vunpack.c.l.b16 %v2836
    %v3298 = vunpack.c.h.b16 %v2836
    %v3299 = vunpack.c.l.b16 %v2837
    %v3300 = vunpack.c.h.b16 %v2837
    %v3301 = vunpack.c.l.b16 %v2838
    %v3302 = vunpack.c.h.b16 %v2838
    %v3303 = vunpack.c.l.b16 %v2839
    %v3304 = vunpack.c.h.b16 %v2839
    %v3305 = vunpack.c.l.b16 %v2840
    %v3306 = vunpack.c.h.b16 %v2840
    %v3307 = vunpack.c.l.b16 %v2841
    %v3308 = vunpack.c.h.b16 %v2841
    %v3309 = vunpack.c.l.b16 %v2842
    %v3310 = vunpack.c.h.b16 %v2842
    %v3311 = vunpack.c.l.b16 %v2843
    %v3312 = vunpack.c.h.b16 %v2843
    %v3313 = vunpack.c.l.b16 %v2844
    %v3314 = vunpack.c.h.b16 %v2844
    %v3315 = vunpack.c.l.b16 %v2845
    %v3316 = vunpack.c.h.b16 %v2845
    %v3317 = vunpack.c.l.b16 %v2846
    %v3318 = vunpack.c.h.b16 %v2846
    %v3319 = vunpack.c.l.b16 %v2847
    %v3320 = vunpack.c.h.b16 %v2847
    %v3321 = vunpack.c.l.b16 %v2848
    %v3322 = vunpack.c.h.b16 %v2848
    %v3323 = vunpack.c.l.b16 %v2849
    %v3324 = vunpack.c.h.b16 %v2849
    %v3325 = vunpack.c.l.b16 %v2850
    %v3326 = vunpack.c.h.b16 %v2850
    %v3327 = vunpack.c.l.b16 %v2851
    %v3328 = vunpack.c.h.b16 %v2851
    %v3329 = vunpack.c.l.b16 %v2852
    %v3330 = vunpack.c.h.b16 %v2852
    %v3331 = vunpack.c.l.b16 %v2853
    %v3332 = vunpack.c.h.b16 %v2853
    %v3333 = vunpack.c.l.b16 %v2854
    %v3334 = vunpack.c.h.b16 %v2854
    %v3335 = vpack.c.b16 %v3019, %v3015
    %v3336 = vpack.c.b16 %v3020, %v3016
    %v3337 = vpack.c.b16 %v3021, %v3017
    %v3338 = vpack.c.b16 %v3022, %v3018
    %v3339 = vpack.c.b16 %v3027, %v3023
    %v3340 = vpack.c.b16 %v3028, %v3024
    %v3341 = vpack.c.b16 %v3029, %v3025
    %v3342 = vpack.c.b16 %v3030, %v3026
    %v3343 = vpack.c.b16 %v3035, %v3031
    %v3344 = vpack.c.b16 %v3036, %v3032
    %v3345 = vpack.c.b16 %v3037, %v3033
    %v3346 = vpack.c.b16 %v3038, %v3034
    %v3347 = vpack.c.b16 %v3043, %v3039
    %v3348 = vpack.c.b16 %v3044, %v3040
    %v3349 = vpack.c.b16 %v3045, %v3041
    %v3350 = vpack.c.b16 %v3046, %v3042
    %v3351 = vpack.c.b16 %v3051, %v3047
    %v3352 = vpack.c.b16 %v3052, %v3048
    %v3353 = vpack.c.b16 %v3053, %v3049
    %v3354 = vpack.c.b16 %v3054, %v3050
    %v3355 = vpack.c.b16 %v3059, %v3055
    %v3356 = vpack.c.b16 %v3060, %v3056
    %v3357 = vpack.c.b16 %v3061, %v3057
    %v3358 = vpack.c.b16 %v3062, %v3058
    %v3359 = vpack.c.b16 %v3067, %v3063
    %v3360 = vpack.c.b16 %v3068, %v3064
    %v3361 = vpack.c.b16 %v3069, %v3065
    %v3362 = vpack.c.b16 %v3070, %v3066
    %v3363 = vpack.c.b16 %v3075, %v3071
    %v3364 = vpack.c.b16 %v3076, %v3072
    %v3365 = vpack.c.b16 %v3077, %v3073
    %v3366 = vpack.c.b16 %v3078, %v3074
    %v3367 = vpack.c.b16 %v3083, %v3079
    %v3368 = vpack.c.b16 %v3084, %v3080
    %v3369 = vpack.c.b16 %v3085, %v3081
    %v3370 = vpack.c.b16 %v3086, %v3082
    %v3371 = vpack.c.b16 %v3091, %v3087
    %v3372 = vpack.c.b16 %v3092, %v3088
    %v3373 = vpack.c.b16 %v3093, %v3089
    %v3374 = vpack.c.b16 %v3094, %v3090
    %v3375 = vpack.c.b16 %v3099, %v3095
    %v3376 = vpack.c.b16 %v3100, %v3096
    %v3377 = vpack.c.b16 %v3101, %v3097
    %v3378 = vpack.c.b16 %v3102, %v3098
    %v3379 = vpack.c.b16 %v3107, %v3103
    %v3380 = vpack.c.b16 %v3108, %v3104
    %v3381 = vpack.c.b16 %v3109, %v3105
    %v3382 = vpack.c.b16 %v3110, %v3106
    %v3383 = vpack.c.b16 %v3115, %v3111
    %v3384 = vpack.c.b16 %v3116, %v3112
    %v3385 = vpack.c.b16 %v3117, %v3113
    %v3386 = vpack.c.b16 %v3118, %v3114
    %v3387 = vpack.c.b16 %v3123, %v3119
    %v3388 = vpack.c.b16 %v3124, %v3120
    %v3389 = vpack.c.b16 %v3125, %v3121
    %v3390 = vpack.c.b16 %v3126, %v3122
    %v3391 = vpack.c.b16 %v3131, %v3127
    %v3392 = vpack.c.b16 %v3132, %v3128
    %v3393 = vpack.c.b16 %v3133, %v3129
    %v3394 = vpack.c.b16 %v3134, %v3130
    %v3395 = vpack.c.b16 %v3139, %v3135
    %v3396 = vpack.c.b16 %v3140, %v3136
    %v3397 = vpack.c.b16 %v3141, %v3137
    %v3398 = vpack.c.b16 %v3142, %v3138
    %v3399 = vpack.c.b16 %v3147, %v3143
    %v3400 = vpack.c.b16 %v3148, %v3144
    %v3401 = vpack.c.b16 %v3149, %v3145
    %v3402 = vpack.c.b16 %v3150, %v3146
    %v3403 = vpack.c.b16 %v3155, %v3151
    %v3404 = vpack.c.b16 %v3156, %v3152
    %v3405 = vpack.c.b16 %v3157, %v3153
    %v3406 = vpack.c.b16 %v3158, %v3154
    %v3407 = vpack.c.b16 %v3163, %v3159
    %v3408 = vpack.c.b16 %v3164, %v3160
    %v3409 = vpack.c.b16 %v3165, %v3161
    %v3410 = vpack.c.b16 %v3166, %v3162
    %v3411 = vpack.c.b16 %v3171, %v3167
    %v3412 = vpack.c.b16 %v3172, %v3168
    %v3413 = vpack.c.b16 %v3173, %v3169
    %v3414 = vpack.c.b16 %v3174, %v3170
    %v3415 = vpack.c.b16 %v3179, %v3175
    %v3416 = vpack.c.b16 %v3180, %v3176
    %v3417 = vpack.c.b16 %v3181, %v3177
    %v3418 = vpack.c.b16 %v3182, %v3178
    %v3419 = vpack.c.b16 %v3187, %v3183
    %v3420 = vpack.c.b16 %v3188, %v3184
    %v3421 = vpack.c.b16 %v3189, %v3185
    %v3422 = vpack.c.b16 %v3190, %v3186
    %v3423 = vpack.c.b16 %v3195, %v3191
    %v3424 = vpack.c.b16 %v3196, %v3192
    %v3425 = vpack.c.b16 %v3197, %v3193
    %v3426 = vpack.c.b16 %v3198, %v3194
    %v3427 = vpack.c.b16 %v3203, %v3199
    %v3428 = vpack.c.b16 %v3204, %v3200
    %v3429 = vpack.c.b16 %v3205, %v3201
    %v3430 = vpack.c.b16 %v3206, %v3202
    %v3431 = vpack.c.b16 %v3211, %v3207
    %v3432 = vpack.c.b16 %v3212, %v3208
    %v3433 = vpack.c.b16 %v3213, %v3209
    %v3434 = vpack.c.b16 %v3214, %v3210
    %v3435 = vpack.c.b16 %v3219, %v3215
    %v3436 = vpack.c.b16 %v3220, %v3216
    %v3437 = vpack.c.b16 %v3221, %v3217
    %v3438 = vpack.c.b16 %v3222, %v3218
    %v3439 = vpack.c.b16 %v3227, %v3223
    %v3440 = vpack.c.b16 %v3228, %v3224
    %v3441 = vpack.c.b16 %v3229, %v3225
    %v3442 = vpack.c.b16 %v3230, %v3226
    %v3443 = vpack.c.b16 %v3235, %v3231
    %v3444 = vpack.c.b16 %v3236, %v3232
    %v3445 = vpack.c.b16 %v3237, %v3233
    %v3446 = vpack.c.b16 %v3238, %v3234
    %v3447 = vpack.c.b16 %v3243, %v3239
    %v3448 = vpack.c.b16 %v3244, %v3240
    %v3449 = vpack.c.b16 %v3245, %v3241
    %v3450 = vpack.c.b16 %v3246, %v3242
    %v3451 = vpack.c.b16 %v3251, %v3247
    %v3452 = vpack.c.b16 %v3252, %v3248
    %v3453 = vpack.c.b16 %v3253, %v3249
    %v3454 = vpack.c.b16 %v3254, %v3250
    %v3455 = vpack.c.b16 %v3259, %v3255
    %v3456 = vpack.c.b16 %v3260, %v3256
    %v3457 = vpack.c.b16 %v3261, %v3257
    %v3458 = vpack.c.b16 %v3262, %v3258
    %v3459 = vpack.c.b16 %v3267, %v3263
    %v3460 = vpack.c.b16 %v3268, %v3264
    %v3461 = vpack.c.b16 %v3269, %v3265
    %v3462 = vpack.c.b16 %v3270, %v3266
    %v3463 = vpack.c.b16 %v3275, %v3271
    %v3464 = vpack.c.b16 %v3276, %v3272
    %v3465 = vpack.c.b16 %v3277, %v3273
    %v3466 = vpack.c.b16 %v3278, %v3274
    %v3467 = vpack.c.b16 %v3283, %v3279
    %v3468 = vpack.c.b16 %v3284, %v3280
    %v3469 = vpack.c.b16 %v3285, %v3281
    %v3470 = vpack.c.b16 %v3286, %v3282
    %v3471 = vpack.c.b16 %v3291, %v3287
    %v3472 = vpack.c.b16 %v3292, %v3288
    %v3473 = vpack.c.b16 %v3293, %v3289
    %v3474 = vpack.c.b16 %v3294, %v3290
    %v3475 = vpack.c.b16 %v3299, %v3295
    %v3476 = vpack.c.b16 %v3300, %v3296
    %v3477 = vpack.c.b16 %v3301, %v3297
    %v3478 = vpack.c.b16 %v3302, %v3298
    %v3479 = vpack.c.b16 %v3307, %v3303
    %v3480 = vpack.c.b16 %v3308, %v3304
    %v3481 = vpack.c.b16 %v3309, %v3305
    %v3482 = vpack.c.b16 %v3310, %v3306
    %v3483 = vpack.c.b16 %v3315, %v3311
    %v3484 = vpack.c.b16 %v3316, %v3312
    %v3485 = vpack.c.b16 %v3317, %v3313
    %v3486 = vpack.c.b16 %v3318, %v3314
    %v3487 = vpack.c.b16 %v3323, %v3319
    %v3488 = vpack.c.b16 %v3324, %v3320
    %v3489 = vpack.c.b16 %v3325, %v3321
    %v3490 = vpack.c.b16 %v3326, %v3322
    %v3491 = vpack.c.b16 %v3331, %v3327
    %v3492 = vpack.c.b16 %v3332, %v3328
    %v3493 = vpack.c.b16 %v3333, %v3329
    %v3494 = vpack.c.b16 %v3334, %v3330
    %3655 = vmatprep.subr.bf16.mxu0 %v3364
    %3656 = vmatpush1.bf16.msra.mxu0 %v3363
    %3657 = vmatprep.subr.bf16.mxu0 %v3360
    %3658 = vmatpush1.bf16.msra.mxu0 %v3359
    %3659 = vmatprep.subr.bf16.mxu0 %v3356
    %3660 = vmatpush1.bf16.msra.mxu0 %v3355
    %3661 = vmatprep.subr.bf16.mxu0 %v3352
    %3662 = vmatpush1.bf16.msra.mxu0 %v3351
    %3663 = vmatprep.subr.bf16.mxu0 %v3348
    %3664 = vmatpush1.bf16.msra.mxu0 %v3347
    %3665 = vmatprep.subr.bf16.mxu0 %v3344
    %3666 = vmatpush1.bf16.msra.mxu0 %v3343
    %3667 = vmatprep.subr.bf16.mxu0 %v3340
    %3668 = vmatpush1.bf16.msra.mxu0 %v3339
    %3669 = vmatprep.subr.bf16.mxu0 %v3336
    %3670 = vmatpush1.bf16.msra.mxu0 %v3335
    %3671 = vmatprep.subr.bf16.mxu0 %v3396
    %3672 = vmatpush2.bf16.msra.mxu0 %v3395
    %3673 = vmatprep.subr.bf16.mxu0 %v3392
    %3674 = vmatpush2.bf16.msra.mxu0 %v3391
    %3675 = vmatprep.subr.bf16.mxu0 %v3388
    %3676 = vmatpush2.bf16.msra.mxu0 %v3387
    %3677 = vmatprep.subr.bf16.mxu0 %v3384
    %3678 = vmatpush2.bf16.msra.mxu0 %v3383
    %3679 = vmatprep.subr.bf16.mxu0 %v3380
    %3680 = vmatpush2.bf16.msra.mxu0 %v3379
    %3681 = vmatprep.subr.bf16.mxu0 %v3376
    %3682 = vmatpush2.bf16.msra.mxu0 %v3375
    %3683 = vmatprep.subr.bf16.mxu0 %v3372
    %3684 = vmatpush2.bf16.msra.mxu0 %v3371
    %3685 = vmatprep.subr.bf16.mxu0 %v3368
    %3686 = vmatpush2.bf16.msra.mxu0 %v3367
    %3687 = vmatprep.mubr.bf16.mxu0 %v2691
    %3688 = vmatmul.mubr.bf16.gmra.mxu0 %v2690
    %v3689 = vpop.f32.mrf.mxu0
    %v3690 = vadd.f32 0.0, %v3689
    %v3691 = vpop.f32.mrf.mxu0
    %v3692 = vadd.f32 0.0, %v3691
    %v3693 = vpop.f32.mrf.mxu0
    %v3694 = vpop.f32.mrf.mxu0
    %3695 = vdwg.mxu0
    %3696 = vmatprep.subr.bf16.mxu0 %v3428
    %3697 = vmatpush1.bf16.msra.mxu0 %v3427
    %3698 = vmatprep.subr.bf16.mxu0 %v3424
    %3699 = vmatpush1.bf16.msra.mxu0 %v3423
    %3700 = vmatprep.subr.bf16.mxu0 %v3420
    %3701 = vmatpush1.bf16.msra.mxu0 %v3419
    %3702 = vmatprep.subr.bf16.mxu0 %v3416
    %3703 = vmatpush1.bf16.msra.mxu0 %v3415
    %3704 = vmatprep.subr.bf16.mxu0 %v3412
    %3705 = vmatpush1.bf16.msra.mxu0 %v3411
    %3706 = vmatprep.subr.bf16.mxu0 %v3408
    %3707 = vmatpush1.bf16.msra.mxu0 %v3407
    %3708 = vmatprep.subr.bf16.mxu0 %v3404
    %3709 = vmatpush1.bf16.msra.mxu0 %v3403
    %3710 = vmatprep.subr.bf16.mxu0 %v3400
    %3711 = vmatpush1.bf16.msra.mxu0 %v3399
    %3712 = vmatprep.subr.bf16.mxu0 %v3460
    %3713 = vmatpush2.bf16.msra.mxu0 %v3459
    %3714 = vmatprep.subr.bf16.mxu0 %v3456
    %3715 = vmatpush2.bf16.msra.mxu0 %v3455
    %3716 = vmatprep.subr.bf16.mxu0 %v3452
    %3717 = vmatpush2.bf16.msra.mxu0 %v3451
    %3718 = vmatprep.subr.bf16.mxu0 %v3448
    %3719 = vmatpush2.bf16.msra.mxu0 %v3447
    %3720 = vmatprep.subr.bf16.mxu0 %v3444
    %3721 = vmatpush2.bf16.msra.mxu0 %v3443
    %3722 = vmatprep.subr.bf16.mxu0 %v3440
    %3723 = vmatpush2.bf16.msra.mxu0 %v3439
    %3724 = vmatprep.subr.bf16.mxu0 %v3436
    %3725 = vmatpush2.bf16.msra.mxu0 %v3435
    %3726 = vmatprep.subr.bf16.mxu0 %v3432
    %3727 = vmatpush2.bf16.msra.mxu0 %v3431
    %3728 = vmatprep.mubr.bf16.mxu0 %v2693
    %3729 = vmatmul.mubr.bf16.gmra.mxu0 %v2692
    %v3730 = vpop.f32.mrf.mxu0
    %v3731 = vadd.f32 %v3690, %v3730
    %v3732 = vpop.f32.mrf.mxu0
    %v3733 = vadd.f32 %v3692, %v3732
    %v3734 = vpop.f32.mrf.mxu0
    %v3735 = vpop.f32.mrf.mxu0
    %3736 = vdwg.mxu0
    %3737 = vmatprep.subr.bf16.mxu0 %v3492
    %3738 = vmatpush1.bf16.msra.mxu0 %v3491
    %3739 = vmatprep.subr.bf16.mxu0 %v3488
    %3740 = vmatpush1.bf16.msra.mxu0 %v3487
    %3741 = vmatprep.subr.bf16.mxu0 %v3484
    %3742 = vmatpush1.bf16.msra.mxu0 %v3483
    %3743 = vmatprep.subr.bf16.mxu0 %v3480
    %3744 = vmatpush1.bf16.msra.mxu0 %v3479
    %3745 = vmatprep.subr.bf16.mxu0 %v3476
    %3746 = vmatpush1.bf16.msra.mxu0 %v3475
    %3747 = vmatprep.subr.bf16.mxu0 %v3472
    %3748 = vmatpush1.bf16.msra.mxu0 %v3471
    %3749 = vmatprep.subr.bf16.mxu0 %v3468
    %3750 = vmatpush1.bf16.msra.mxu0 %v3467
    %3751 = vmatprep.subr.bf16.mxu0 %v3464
    %3752 = vmatpush1.bf16.msra.mxu0 %v3463
    %3753 = vmatprep.subr.bf16.mxu0 0
    %3754 = vmatpush2.bf16.msra.mxu0 0
    %3755 = vmatprep.subr.bf16.mxu0 0
    %3756 = vmatpush2.bf16.msra.mxu0 0
    %3757 = vmatprep.subr.bf16.mxu0 0
    %3758 = vmatpush2.bf16.msra.mxu0 0
    %3759 = vmatprep.subr.bf16.mxu0 0
    %3760 = vmatpush2.bf16.msra.mxu0 0
    %3761 = vmatprep.subr.bf16.mxu0 0
    %3762 = vmatpush2.bf16.msra.mxu0 0
    %3763 = vmatprep.subr.bf16.mxu0 0
    %3764 = vmatpush2.bf16.msra.mxu0 0
    %3765 = vmatprep.subr.bf16.mxu0 0
    %3766 = vmatpush2.bf16.msra.mxu0 0
    %3767 = vmatprep.subr.bf16.mxu0 0
    %3768 = vmatpush2.bf16.msra.mxu0 0
    %3769 = vmatprep.mubr.bf16.mxu0 0
    %3770 = vmatmul.mubr.bf16.gmra.mxu0 %v2694
    %v3771 = vpop.f32.mrf.mxu0
    %v3772 = vadd.f32 %v3731, %v3771
    %v3773 = vpop.f32.mrf.mxu0
    %v3774 = vadd.f32 %v3733, %v3773
    %v3775 = vpop.f32.mrf.mxu0
    %v3776 = vpop.f32.mrf.mxu0
    %3777 = vdwg.mxu0
    %3778 = vmatprep.subr.bf16.mxu0 %v3366
    %3779 = vmatpush1.bf16.msra.mxu0 %v3365
    %3780 = vmatprep.subr.bf16.mxu0 %v3362
    %3781 = vmatpush1.bf16.msra.mxu0 %v3361
    %3782 = vmatprep.subr.bf16.mxu0 %v3358
    %3783 = vmatpush1.bf16.msra.mxu0 %v3357
    %3784 = vmatprep.subr.bf16.mxu0 %v3354
    %3785 = vmatpush1.bf16.msra.mxu0 %v3353
    %3786 = vmatprep.subr.bf16.mxu0 %v3350
    %3787 = vmatpush1.bf16.msra.mxu0 %v3349
    %3788 = vmatprep.subr.bf16.mxu0 %v3346
    %3789 = vmatpush1.bf16.msra.mxu0 %v3345
    %3790 = vmatprep.subr.bf16.mxu0 %v3342
    %3791 = vmatpush1.bf16.msra.mxu0 %v3341
    %3792 = vmatprep.subr.bf16.mxu0 %v3338
    %3793 = vmatpush1.bf16.msra.mxu0 %v3337
    %3794 = vmatprep.subr.bf16.mxu0 %v3398
    %3795 = vmatpush2.bf16.msra.mxu0 %v3397
    %3796 = vmatprep.subr.bf16.mxu0 %v3394
    %3797 = vmatpush2.bf16.msra.mxu0 %v3393
    %3798 = vmatprep.subr.bf16.mxu0 %v3390
    %3799 = vmatpush2.bf16.msra.mxu0 %v3389
    %3800 = vmatprep.subr.bf16.mxu0 %v3386
    %3801 = vmatpush2.bf16.msra.mxu0 %v3385
    %3802 = vmatprep.subr.bf16.mxu0 %v3382
    %3803 = vmatpush2.bf16.msra.mxu0 %v3381
    %3804 = vmatprep.subr.bf16.mxu0 %v3378
    %3805 = vmatpush2.bf16.msra.mxu0 %v3377
    %3806 = vmatprep.subr.bf16.mxu0 %v3374
    %3807 = vmatpush2.bf16.msra.mxu0 %v3373
    %3808 = vmatprep.subr.bf16.mxu0 %v3370
    %3809 = vmatpush2.bf16.msra.mxu0 %v3369
    %3810 = vmatprep.mubr.bf16.mxu0 %v2691
    %3811 = vmatmul.mubr.bf16.gmra.mxu0 %v2690
    %v3812 = vpop.f32.mrf.mxu0
    %v3813 = vadd.f32 0.0, %v3812
    %v3814 = vpop.f32.mrf.mxu0
    %v3815 = vadd.f32 0.0, %v3814
    %v3816 = vpop.f32.mrf.mxu0
    %v3817 = vpop.f32.mrf.mxu0
    %3818 = vdwg.mxu0
    %3819 = vmatprep.subr.bf16.mxu0 %v3430
    %3820 = vmatpush1.bf16.msra.mxu0 %v3429
    %3821 = vmatprep.subr.bf16.mxu0 %v3426
    %3822 = vmatpush1.bf16.msra.mxu0 %v3425
    %3823 = vmatprep.subr.bf16.mxu0 %v3422
    %3824 = vmatpush1.bf16.msra.mxu0 %v3421
    %3825 = vmatprep.subr.bf16.mxu0 %v3418
    %3826 = vmatpush1.bf16.msra.mxu0 %v3417
    %3827 = vmatprep.subr.bf16.mxu0 %v3414
    %3828 = vmatpush1.bf16.msra.mxu0 %v3413
    %3829 = vmatprep.subr.bf16.mxu0 %v3410
    %3830 = vmatpush1.bf16.msra.mxu0 %v3409
    %3831 = vmatprep.subr.bf16.mxu0 %v3406
    %3832 = vmatpush1.bf16.msra.mxu0 %v3405
    %3833 = vmatprep.subr.bf16.mxu0 %v3402
    %3834 = vmatpush1.bf16.msra.mxu0 %v3401
    %3835 = vmatprep.subr.bf16.mxu0 %v3462
    %3836 = vmatpush2.bf16.msra.mxu0 %v3461
    %3837 = vmatprep.subr.bf16.mxu0 %v3458
    %3838 = vmatpush2.bf16.msra.mxu0 %v3457
    %3839 = vmatprep.subr.bf16.mxu0 %v3454
    %3840 = vmatpush2.bf16.msra.mxu0 %v3453
    %3841 = vmatprep.subr.bf16.mxu0 %v3450
    %3842 = vmatpush2.bf16.msra.mxu0 %v3449
    %3843 = vmatprep.subr.bf16.mxu0 %v3446
    %3844 = vmatpush2.bf16.msra.mxu0 %v3445
    %3845 = vmatprep.subr.bf16.mxu0 %v3442
    %3846 = vmatpush2.bf16.msra.mxu0 %v3441
    %3847 = vmatprep.subr.bf16.mxu0 %v3438
    %3848 = vmatpush2.bf16.msra.mxu0 %v3437
    %3849 = vmatprep.subr.bf16.mxu0 %v3434
    %3850 = vmatpush2.bf16.msra.mxu0 %v3433
    %3851 = vmatprep.mubr.bf16.mxu0 %v2693
    %3852 = vmatmul.mubr.bf16.gmra.mxu0 %v2692
    %v3853 = vpop.f32.mrf.mxu0
    %v3854 = vadd.f32 %v3813, %v3853
    %v3855 = vpop.f32.mrf.mxu0
    %v3856 = vadd.f32 %v3815, %v3855
    %v3857 = vpop.f32.mrf.mxu0
    %v3858 = vpop.f32.mrf.mxu0
    %3859 = vdwg.mxu0
    %3860 = vmatprep.subr.bf16.mxu0 %v3494
    %3861 = vmatpush1.bf16.msra.mxu0 %v3493
    %3862 = vmatprep.subr.bf16.mxu0 %v3490
    %3863 = vmatpush1.bf16.msra.mxu0 %v3489
    %3864 = vmatprep.subr.bf16.mxu0 %v3486
    %3865 = vmatpush1.bf16.msra.mxu0 %v3485
    %3866 = vmatprep.subr.bf16.mxu0 %v3482
    %3867 = vmatpush1.bf16.msra.mxu0 %v3481
    %3868 = vmatprep.subr.bf16.mxu0 %v3478
    %3869 = vmatpush1.bf16.msra.mxu0 %v3477
    %3870 = vmatprep.subr.bf16.mxu0 %v3474
    %3871 = vmatpush1.bf16.msra.mxu0 %v3473
    %3872 = vmatprep.subr.bf16.mxu0 %v3470
    %3873 = vmatpush1.bf16.msra.mxu0 %v3469
    %3874 = vmatprep.subr.bf16.mxu0 %v3466
    %3875 = vmatpush1.bf16.msra.mxu0 %v3465
    %3876 = vmatprep.subr.bf16.mxu0 0
    %3877 = vmatpush2.bf16.msra.mxu0 0
    %3878 = vmatprep.subr.bf16.mxu0 0
    %3879 = vmatpush2.bf16.msra.mxu0 0
    %3880 = vmatprep.subr.bf16.mxu0 0
    %3881 = vmatpush2.bf16.msra.mxu0 0
    %3882 = vmatprep.subr.bf16.mxu0 0
    %3883 = vmatpush2.bf16.msra.mxu0 0
    %3884 = vmatprep.subr.bf16.mxu0 0
    %3885 = vmatpush2.bf16.msra.mxu0 0
    %3886 = vmatprep.subr.bf16.mxu0 0
    %3887 = vmatpush2.bf16.msra.mxu0 0
    %3888 = vmatprep.subr.bf16.mxu0 0
    %3889 = vmatpush2.bf16.msra.mxu0 0
    %3890 = vmatprep.subr.bf16.mxu0 0
    %3891 = vmatpush2.bf16.msra.mxu0 0
    %3892 = vmatprep.mubr.bf16.mxu0 0
    %3893 = vmatmul.mubr.bf16.gmra.mxu0 %v2694
    %v3894 = vpop.f32.mrf.mxu0
    %v3895 = vadd.f32 %v3854, %v3894
    %v3896 = vpop.f32.mrf.mxu0
    %v3897 = vadd.f32 %v3856, %v3896
    %v3898 = vpop.f32.mrf.mxu0
    %v3899 = vpop.f32.mrf.mxu0
    %3900 = vdwg.mxu0
    %s3901 = scalar_lea.vmem [#allocation15], 2
    %v3902 = vld [vmem:[%s3901] ss:$8 sm:$0xf]
    %s3903 = scalar_lea.vmem [#allocation15], 3
    %v3904 = vld [vmem:[%s3903] ss:$8 sm:$0xf]
    %v3905 = vrot.slane %v3772, 4
    %v3906 = vadd.f32 %v3772, %v3905
    %v3907 = vrot.slane %v3906, 2
    %v3908 = vadd.f32 %v3906, %v3907
    %v3909 = vrot.slane %v3908, 1
    %v3910 = vadd.f32 %v3908, %v3909
    %v3911 = vrot.slane %v3774, 4
    %v3912 = vadd.f32 %v3774, %v3911
    %v3913 = vrot.slane %v3912, 2
    %v3914 = vadd.f32 %v3912, %v3913
    %v3915 = vrot.slane %v3914, 1
    %v3916 = vadd.f32 %v3914, %v3915
    %v3917 = vrot.slane %v3895, 4
    %v3918 = vadd.f32 %v3895, %v3917
    %v3919 = vrot.slane %v3918, 2
    %v3920 = vadd.f32 %v3918, %v3919
    %v3921 = vrot.slane %v3920, 1
    %v3922 = vadd.f32 %v3920, %v3921
    %v3923 = vrot.slane %v3897, 4
    %v3924 = vadd.f32 %v3897, %v3923
    %v3925 = vrot.slane %v3924, 2
    %v3926 = vadd.f32 %v3924, %v3925
    %v3927 = vrot.slane %v3926, 1
    %v3928 = vadd.f32 %v3926, %v3927
    %v3929 = vmul.f32 %v3910, 0.125
    %v3930 = vmul.f32 %v3916, 0.125
    %v3931 = vmul.f32 %v3922, 0.125
    %v3932 = vmul.f32 %v3928, 0.125
    %v3933 = vmul.f32 %v3772, %v3772
    %v3934 = vmul.f32 %v3774, %v3774
    %v3935 = vmul.f32 %v3895, %v3895
    %v3936 = vmul.f32 %v3897, %v3897
    %v3937 = vrot.slane %v3933, 4
    %v3938 = vadd.f32 %v3933, %v3937
    %v3939 = vrot.slane %v3938, 2
    %v3940 = vadd.f32 %v3938, %v3939
    %v3941 = vrot.slane %v3940, 1
    %v3942 = vadd.f32 %v3940, %v3941
    %v3943 = vrot.slane %v3934, 4
    %v3944 = vadd.f32 %v3934, %v3943
    %v3945 = vrot.slane %v3944, 2
    %v3946 = vadd.f32 %v3944, %v3945
    %v3947 = vrot.slane %v3946, 1
    %v3948 = vadd.f32 %v3946, %v3947
    %v3949 = vrot.slane %v3935, 4
    %v3950 = vadd.f32 %v3935, %v3949
    %v3951 = vrot.slane %v3950, 2
    %v3952 = vadd.f32 %v3950, %v3951
    %v3953 = vrot.slane %v3952, 1
    %v3954 = vadd.f32 %v3952, %v3953
    %v3955 = vrot.slane %v3936, 4
    %v3956 = vadd.f32 %v3936, %v3955
    %v3957 = vrot.slane %v3956, 2
    %v3958 = vadd.f32 %v3956, %v3957
    %v3959 = vrot.slane %v3958, 1
    %v3960 = vadd.f32 %v3958, %v3959
    %v3961 = vmul.f32 %v3942, 0.125
    %v3962 = vmul.f32 %v3948, 0.125
    %v3963 = vmul.f32 %v3954, 0.125
    %v3964 = vmul.f32 %v3960, 0.125
    %v3965 = vmul.f32 %v3929, %v3929
    %v3966 = vmul.f32 %v3930, %v3930
    %v3967 = vmul.f32 %v3931, %v3931
    %v3968 = vmul.f32 %v3932, %v3932
    %v3969 = vsub.f32 %v3961, %v3965
    %v3970 = vsub.f32 %v3962, %v3966
    %v3971 = vsub.f32 %v3963, %v3967
    %v3972 = vsub.f32 %v3964, %v3968
    %v3973 = vsub.f32 %v3772, %v3929
    %v3974 = vsub.f32 %v3774, %v3930
    %v3975 = vsub.f32 %v3895, %v3931
    %v3976 = vsub.f32 %v3897, %v3932
    %v3977 = vadd.f32 %v3969, 1e-05
    %v3978 = vadd.f32 %v3970, 1e-05
    %v3979 = vadd.f32 %v3971, 1e-05
    %v3980 = vadd.f32 %v3972, 1e-05
    %v3981 = vrsqrt.pop %v3977
    %v3982 = vrsqrt.pop %v3978
    %v3983 = vrsqrt.pop %v3979
    %v3984 = vrsqrt.pop %v3980
    %v3985 = vmul.f32 %v3973, %v3981
    %v3986 = vmul.f32 %v3974, %v3982
    %v3987 = vmul.f32 %v3975, %v3983
    %v3988 = vmul.f32 %v3976, %v3984
    %v3990 = vlaneseq
    %v3991 = vshrl.u32 %v3990, 7
    %v3992 = vsub.s32 0, %v3991
    %v3993 = vrot.slane %v3902, %v3992
    %v3994 = vlaneseq
    %v3995 = vshrl.u32 %v3994, 7
    %v3996 = vsub.s32 1, %v3995
    %v3997 = vrot.slane %v3902, %v3996
    %v3998 = vlaneseq
    %v3999 = vshrl.u32 %v3998, 7
    %v4000 = vsub.s32 2, %v3999
    %v4001 = vrot.slane %v3902, %v4000
    %v4002 = vlaneseq
    %v4003 = vshrl.u32 %v4002, 7
    %v4004 = vsub.s32 3, %v4003
    %v4005 = vrot.slane %v3902, %v4004
    %v4010 = vmul.f32 %v3985, %v3993
    %v4011 = vmul.f32 %v3986, %v3997
    %v4012 = vmul.f32 %v3987, %v4001
    %v4013 = vmul.f32 %v3988, %v4005
    %v4015 = vlaneseq
    %v4016 = vshrl.u32 %v4015, 7
    %v4017 = vsub.s32 0, %v4016
    %v4018 = vrot.slane %v3904, %v4017
    %v4019 = vlaneseq
    %v4020 = vshrl.u32 %v4019, 7
    %v4021 = vsub.s32 1, %v4020
    %v4022 = vrot.slane %v3904, %v4021
    %v4023 = vlaneseq
    %v4024 = vshrl.u32 %v4023, 7
    %v4025 = vsub.s32 2, %v4024
    %v4026 = vrot.slane %v3904, %v4025
    %v4027 = vlaneseq
    %v4028 = vshrl.u32 %v4027, 7
    %v4029 = vsub.s32 3, %v4028
    %v4030 = vrot.slane %v3904, %v4029
    %v4035 = vadd.f32 %v4010, %v4018
    %v4036 = vadd.f32 %v4011, %v4022
    %v4037 = vadd.f32 %v4012, %v4026
    %v4038 = vadd.f32 %v4013, %v4030
    %v4039 = vmax.f32 %v4035, 0.0
    %v4040 = vmax.f32 %v4036, 0.0
    %v4041 = vmax.f32 %v4037, 0.0
    %v4042 = vmax.f32 %v4038, 0.0
    %v4043 = vpack.c.bf16 %v4039, %v4039
    %v4044 = vpack.c.bf16 %v4040, %v4040
    %v4045 = vpack.c.bf16 %v4041, %v4041
    %v4046 = vpack.c.bf16 %v4042, %v4042
    %v4047 = vld [vmem:[#allocation12] sm:$0xff]
    %v4048 = vld [vmem:[#allocation12 + $0x8] sm:$0xff]
    %v4049 = vld [vmem:[#allocation12 + $0x10] sm:$0xff]
    %v4050 = vld [vmem:[#allocation12 + $0x18] sm:$0xff]
    %v4051 = vld [vmem:[#allocation12 + $0x20] sm:$0xff]
    %v4052 = vld [vmem:[#allocation12 + $0x28] sm:$0xff]
    %v4053 = vld [vmem:[#allocation12 + $0x30] sm:$0xff]
    %v4054 = vld [vmem:[#allocation12 + $0x38] sm:$0xff]
    %v4055 = vld [vmem:[#allocation12 + $0x40] sm:$0xff]
    %v4056 = vld [vmem:[#allocation12 + $0x48] sm:$0xff]
    %v4057 = vld [vmem:[#allocation12 + $0x50] sm:$0xff]
    %v4058 = vld [vmem:[#allocation12 + $0x58] sm:$0xff]
    %v4059 = vld [vmem:[#allocation12 + $0x60] sm:$0xff]
    %v4060 = vld [vmem:[#allocation12 + $0x68] sm:$0xff]
    %v4061 = vld [vmem:[#allocation12 + $0x70] sm:$0xff]
    %v4062 = vld [vmem:[#allocation12 + $0x78] sm:$0xff]
    %v4063 = vld [vmem:[#allocation12 + $0x80] sm:$0xff]
    %v4064 = vld [vmem:[#allocation12 + $0x88] sm:$0xff]
    %v4065 = vld [vmem:[#allocation12 + $0x90] sm:$0xff]
    %v4066 = vld [vmem:[#allocation12 + $0x98] sm:$0xff]
    %v4067 = vld [vmem:[#allocation12 + $0xa0] sm:$0xff]
    %v4068 = vld [vmem:[#allocation12 + $0xa8] sm:$0xff]
    %v4069 = vld [vmem:[#allocation12 + $0xb0] sm:$0xff]
    %v4070 = vld [vmem:[#allocation12 + $0xb8] sm:$0xff]
    %v4071 = vld [vmem:[#allocation12 + $0xc0] sm:$0xff]
    %v4072 = vld [vmem:[#allocation12 + $0xc8] sm:$0xff]
    %v4073 = vld [vmem:[#allocation12 + $0xd0] sm:$0xff]
    %v4074 = vld [vmem:[#allocation12 + $0xd8] sm:$0xff]
    %v4075 = vld [vmem:[#allocation12 + $0xe0] sm:$0xff]
    %v4076 = vld [vmem:[#allocation12 + $0xe8] sm:$0xff]
    %v4077 = vld [vmem:[#allocation12 + $0xf0] sm:$0xff]
    %v4078 = vld [vmem:[#allocation12 + $0xf8] sm:$0xff]
    %v4079 = vld [vmem:[#allocation12 + $0x100] sm:$0xff]
    %v4080 = vld [vmem:[#allocation12 + $0x108] sm:$0xff]
    %v4081 = vld [vmem:[#allocation12 + $0x110] sm:$0xff]
    %v4082 = vld [vmem:[#allocation12 + $0x118] sm:$0xff]
    %v4083 = vld [vmem:[#allocation12 + $0x120] sm:$0xff]
    %v4084 = vld [vmem:[#allocation12 + $0x128] sm:$0xff]
    %v4085 = vld [vmem:[#allocation12 + $0x130] sm:$0xff]
    %v4086 = vld [vmem:[#allocation12 + $0x138] sm:$0xff]
    %v4087 = vld [vmem:[#allocation12 + $0x140] sm:$0xff]
    %v4088 = vld [vmem:[#allocation12 + $0x148] sm:$0xff]
    %v4089 = vld [vmem:[#allocation12 + $0x150] sm:$0xff]
    %v4090 = vld [vmem:[#allocation12 + $0x158] sm:$0xff]
    %v4091 = vld [vmem:[#allocation12 + $0x160] sm:$0xff]
    %v4092 = vld [vmem:[#allocation12 + $0x168] sm:$0xff]
    %v4093 = vld [vmem:[#allocation12 + $0x170] sm:$0xff]
    %v4094 = vld [vmem:[#allocation12 + $0x178] sm:$0xff]
    %v4095 = vld [vmem:[#allocation12 + $0x180] sm:$0xff]
    %v4096 = vld [vmem:[#allocation12 + $0x188] sm:$0xff]
    %v4097 = vld [vmem:[#allocation12 + $0x190] sm:$0xff]
    %v4098 = vld [vmem:[#allocation12 + $0x198] sm:$0xff]
    %v4099 = vld [vmem:[#allocation12 + $0x1a0] sm:$0xff]
    %v4100 = vld [vmem:[#allocation12 + $0x1a8] sm:$0xff]
    %v4101 = vld [vmem:[#allocation12 + $0x1b0] sm:$0xff]
    %v4102 = vld [vmem:[#allocation12 + $0x1b8] sm:$0xff]
    %v4103 = vld [vmem:[#allocation12 + $0x1c0] sm:$0xff]
    %v4104 = vld [vmem:[#allocation12 + $0x1c8] sm:$0xff]
    %v4105 = vld [vmem:[#allocation12 + $0x1d0] sm:$0xff]
    %v4106 = vld [vmem:[#allocation12 + $0x1d8] sm:$0xff]
    %v4107 = vld [vmem:[#allocation12 + $0x1e0] sm:$0xff]
    %v4108 = vld [vmem:[#allocation12 + $0x1e8] sm:$0xff]
    %v4109 = vld [vmem:[#allocation12 + $0x1f0] sm:$0xff]
    %v4110 = vld [vmem:[#allocation12 + $0x1f8] sm:$0xff]
    %v4175 = vunpack.c.l.b16 %v4047
    %v4176 = vunpack.c.h.b16 %v4047
    %v4177 = vunpack.c.l.b16 %v4048
    %v4178 = vunpack.c.h.b16 %v4048
    %v4179 = vunpack.c.l.b16 %v4049
    %v4180 = vunpack.c.h.b16 %v4049
    %v4181 = vunpack.c.l.b16 %v4050
    %v4182 = vunpack.c.h.b16 %v4050
    %v4183 = vunpack.c.l.b16 %v4051
    %v4184 = vunpack.c.h.b16 %v4051
    %v4185 = vunpack.c.l.b16 %v4052
    %v4186 = vunpack.c.h.b16 %v4052
    %v4187 = vunpack.c.l.b16 %v4053
    %v4188 = vunpack.c.h.b16 %v4053
    %v4189 = vunpack.c.l.b16 %v4054
    %v4190 = vunpack.c.h.b16 %v4054
    %v4191 = vunpack.c.l.b16 %v4055
    %v4192 = vunpack.c.h.b16 %v4055
    %v4193 = vunpack.c.l.b16 %v4056
    %v4194 = vunpack.c.h.b16 %v4056
    %v4195 = vunpack.c.l.b16 %v4057
    %v4196 = vunpack.c.h.b16 %v4057
    %v4197 = vunpack.c.l.b16 %v4058
    %v4198 = vunpack.c.h.b16 %v4058
    %v4199 = vunpack.c.l.b16 %v4059
    %v4200 = vunpack.c.h.b16 %v4059
    %v4201 = vunpack.c.l.b16 %v4060
    %v4202 = vunpack.c.h.b16 %v4060
    %v4203 = vunpack.c.l.b16 %v4061
    %v4204 = vunpack.c.h.b16 %v4061
    %v4205 = vunpack.c.l.b16 %v4062
    %v4206 = vunpack.c.h.b16 %v4062
    %v4207 = vunpack.c.l.b16 %v4063
    %v4208 = vunpack.c.h.b16 %v4063
    %v4209 = vunpack.c.l.b16 %v4064
    %v4210 = vunpack.c.h.b16 %v4064
    %v4211 = vunpack.c.l.b16 %v4065
    %v4212 = vunpack.c.h.b16 %v4065
    %v4213 = vunpack.c.l.b16 %v4066
    %v4214 = vunpack.c.h.b16 %v4066
    %v4215 = vunpack.c.l.b16 %v4067
    %v4216 = vunpack.c.h.b16 %v4067
    %v4217 = vunpack.c.l.b16 %v4068
    %v4218 = vunpack.c.h.b16 %v4068
    %v4219 = vunpack.c.l.b16 %v4069
    %v4220 = vunpack.c.h.b16 %v4069
    %v4221 = vunpack.c.l.b16 %v4070
    %v4222 = vunpack.c.h.b16 %v4070
    %v4223 = vunpack.c.l.b16 %v4071
    %v4224 = vunpack.c.h.b16 %v4071
    %v4225 = vunpack.c.l.b16 %v4072
    %v4226 = vunpack.c.h.b16 %v4072
    %v4227 = vunpack.c.l.b16 %v4073
    %v4228 = vunpack.c.h.b16 %v4073
    %v4229 = vunpack.c.l.b16 %v4074
    %v4230 = vunpack.c.h.b16 %v4074
    %v4231 = vunpack.c.l.b16 %v4075
    %v4232 = vunpack.c.h.b16 %v4075
    %v4233 = vunpack.c.l.b16 %v4076
    %v4234 = vunpack.c.h.b16 %v4076
    %v4235 = vunpack.c.l.b16 %v4077
    %v4236 = vunpack.c.h.b16 %v4077
    %v4237 = vunpack.c.l.b16 %v4078
    %v4238 = vunpack.c.h.b16 %v4078
    %v4239 = vunpack.c.l.b16 %v4079
    %v4240 = vunpack.c.h.b16 %v4079
    %v4241 = vunpack.c.l.b16 %v4080
    %v4242 = vunpack.c.h.b16 %v4080
    %v4243 = vunpack.c.l.b16 %v4081
    %v4244 = vunpack.c.h.b16 %v4081
    %v4245 = vunpack.c.l.b16 %v4082
    %v4246 = vunpack.c.h.b16 %v4082
    %v4247 = vunpack.c.l.b16 %v4083
    %v4248 = vunpack.c.h.b16 %v4083
    %v4249 = vunpack.c.l.b16 %v4084
    %v4250 = vunpack.c.h.b16 %v4084
    %v4251 = vunpack.c.l.b16 %v4085
    %v4252 = vunpack.c.h.b16 %v4085
    %v4253 = vunpack.c.l.b16 %v4086
    %v4254 = vunpack.c.h.b16 %v4086
    %v4255 = vunpack.c.l.b16 %v4087
    %v4256 = vunpack.c.h.b16 %v4087
    %v4257 = vunpack.c.l.b16 %v4088
    %v4258 = vunpack.c.h.b16 %v4088
    %v4259 = vunpack.c.l.b16 %v4089
    %v4260 = vunpack.c.h.b16 %v4089
    %v4261 = vunpack.c.l.b16 %v4090
    %v4262 = vunpack.c.h.b16 %v4090
    %v4263 = vunpack.c.l.b16 %v4091
    %v4264 = vunpack.c.h.b16 %v4091
    %v4265 = vunpack.c.l.b16 %v4092
    %v4266 = vunpack.c.h.b16 %v4092
    %v4267 = vunpack.c.l.b16 %v4093
    %v4268 = vunpack.c.h.b16 %v4093
    %v4269 = vunpack.c.l.b16 %v4094
    %v4270 = vunpack.c.h.b16 %v4094
    %v4271 = vunpack.c.l.b16 %v4095
    %v4272 = vunpack.c.h.b16 %v4095
    %v4273 = vunpack.c.l.b16 %v4096
    %v4274 = vunpack.c.h.b16 %v4096
    %v4275 = vunpack.c.l.b16 %v4097
    %v4276 = vunpack.c.h.b16 %v4097
    %v4277 = vunpack.c.l.b16 %v4098
    %v4278 = vunpack.c.h.b16 %v4098
    %v4279 = vunpack.c.l.b16 %v4099
    %v4280 = vunpack.c.h.b16 %v4099
    %v4281 = vunpack.c.l.b16 %v4100
    %v4282 = vunpack.c.h.b16 %v4100
    %v4283 = vunpack.c.l.b16 %v4101
    %v4284 = vunpack.c.h.b16 %v4101
    %v4285 = vunpack.c.l.b16 %v4102
    %v4286 = vunpack.c.h.b16 %v4102
    %v4287 = vunpack.c.l.b16 %v4103
    %v4288 = vunpack.c.h.b16 %v4103
    %v4289 = vunpack.c.l.b16 %v4104
    %v4290 = vunpack.c.h.b16 %v4104
    %v4291 = vunpack.c.l.b16 %v4105
    %v4292 = vunpack.c.h.b16 %v4105
    %v4293 = vunpack.c.l.b16 %v4106
    %v4294 = vunpack.c.h.b16 %v4106
    %v4295 = vunpack.c.l.b16 %v4107
    %v4296 = vunpack.c.h.b16 %v4107
    %v4297 = vunpack.c.l.b16 %v4108
    %v4298 = vunpack.c.h.b16 %v4108
    %v4299 = vunpack.c.l.b16 %v4109
    %v4300 = vunpack.c.h.b16 %v4109
    %v4301 = vunpack.c.l.b16 %v4110
    %v4302 = vunpack.c.h.b16 %v4110
    %v4303 = vpack.c.b16 %v4177, %v4175
    %v4304 = vpack.c.b16 %v4178, %v4176
    %v4305 = vpack.c.b16 %v4181, %v4179
    %v4306 = vpack.c.b16 %v4182, %v4180
    %v4307 = vpack.c.b16 %v4185, %v4183
    %v4308 = vpack.c.b16 %v4186, %v4184
    %v4309 = vpack.c.b16 %v4189, %v4187
    %v4310 = vpack.c.b16 %v4190, %v4188
    %v4311 = vpack.c.b16 %v4193, %v4191
    %v4312 = vpack.c.b16 %v4194, %v4192
    %v4313 = vpack.c.b16 %v4197, %v4195
    %v4314 = vpack.c.b16 %v4198, %v4196
    %v4315 = vpack.c.b16 %v4201, %v4199
    %v4316 = vpack.c.b16 %v4202, %v4200
    %v4317 = vpack.c.b16 %v4205, %v4203
    %v4318 = vpack.c.b16 %v4206, %v4204
    %v4319 = vpack.c.b16 %v4209, %v4207
    %v4320 = vpack.c.b16 %v4210, %v4208
    %v4321 = vpack.c.b16 %v4213, %v4211
    %v4322 = vpack.c.b16 %v4214, %v4212
    %v4323 = vpack.c.b16 %v4217, %v4215
    %v4324 = vpack.c.b16 %v4218, %v4216
    %v4325 = vpack.c.b16 %v4221, %v4219
    %v4326 = vpack.c.b16 %v4222, %v4220
    %v4327 = vpack.c.b16 %v4225, %v4223
    %v4328 = vpack.c.b16 %v4226, %v4224
    %v4329 = vpack.c.b16 %v4229, %v4227
    %v4330 = vpack.c.b16 %v4230, %v4228
    %v4331 = vpack.c.b16 %v4233, %v4231
    %v4332 = vpack.c.b16 %v4234, %v4232
    %v4333 = vpack.c.b16 %v4237, %v4235
    %v4334 = vpack.c.b16 %v4238, %v4236
    %v4335 = vpack.c.b16 %v4241, %v4239
    %v4336 = vpack.c.b16 %v4242, %v4240
    %v4337 = vpack.c.b16 %v4245, %v4243
    %v4338 = vpack.c.b16 %v4246, %v4244
    %v4339 = vpack.c.b16 %v4249, %v4247
    %v4340 = vpack.c.b16 %v4250, %v4248
    %v4341 = vpack.c.b16 %v4253, %v4251
    %v4342 = vpack.c.b16 %v4254, %v4252
    %v4343 = vpack.c.b16 %v4257, %v4255
    %v4344 = vpack.c.b16 %v4258, %v4256
    %v4345 = vpack.c.b16 %v4261, %v4259
    %v4346 = vpack.c.b16 %v4262, %v4260
    %v4347 = vpack.c.b16 %v4265, %v4263
    %v4348 = vpack.c.b16 %v4266, %v4264
    %v4349 = vpack.c.b16 %v4269, %v4267
    %v4350 = vpack.c.b16 %v4270, %v4268
    %v4351 = vpack.c.b16 %v4273, %v4271
    %v4352 = vpack.c.b16 %v4274, %v4272
    %v4353 = vpack.c.b16 %v4277, %v4275
    %v4354 = vpack.c.b16 %v4278, %v4276
    %v4355 = vpack.c.b16 %v4281, %v4279
    %v4356 = vpack.c.b16 %v4282, %v4280
    %v4357 = vpack.c.b16 %v4285, %v4283
    %v4358 = vpack.c.b16 %v4286, %v4284
    %v4359 = vpack.c.b16 %v4289, %v4287
    %v4360 = vpack.c.b16 %v4290, %v4288
    %v4361 = vpack.c.b16 %v4293, %v4291
    %v4362 = vpack.c.b16 %v4294, %v4292
    %v4363 = vpack.c.b16 %v4297, %v4295
    %v4364 = vpack.c.b16 %v4298, %v4296
    %v4365 = vpack.c.b16 %v4301, %v4299
    %v4366 = vpack.c.b16 %v4302, %v4300
    %4431 = vmatprep.subr.bf16.mxu0 %v4318
    %4432 = vmatpush1.bf16.msra.mxu0 %v4317
    %4433 = vmatprep.subr.bf16.mxu0 %v4316
    %4434 = vmatpush1.bf16.msra.mxu0 %v4315
    %4435 = vmatprep.subr.bf16.mxu0 %v4314
    %4436 = vmatpush1.bf16.msra.mxu0 %v4313
    %4437 = vmatprep.subr.bf16.mxu0 %v4312
    %4438 = vmatpush1.bf16.msra.mxu0 %v4311
    %4439 = vmatprep.subr.bf16.mxu0 %v4310
    %4440 = vmatpush1.bf16.msra.mxu0 %v4309
    %4441 = vmatprep.subr.bf16.mxu0 %v4308
    %4442 = vmatpush1.bf16.msra.mxu0 %v4307
    %4443 = vmatprep.subr.bf16.mxu0 %v4306
    %4444 = vmatpush1.bf16.msra.mxu0 %v4305
    %4445 = vmatprep.subr.bf16.mxu0 %v4304
    %4446 = vmatpush1.bf16.msra.mxu0 %v4303
    %4447 = vmatprep.subr.bf16.mxu0 %v4334
    %4448 = vmatpush2.bf16.msra.mxu0 %v4333
    %4449 = vmatprep.subr.bf16.mxu0 %v4332
    %4450 = vmatpush2.bf16.msra.mxu0 %v4331
    %4451 = vmatprep.subr.bf16.mxu0 %v4330
    %4452 = vmatpush2.bf16.msra.mxu0 %v4329
    %4453 = vmatprep.subr.bf16.mxu0 %v4328
    %4454 = vmatpush2.bf16.msra.mxu0 %v4327
    %4455 = vmatprep.subr.bf16.mxu0 %v4326
    %4456 = vmatpush2.bf16.msra.mxu0 %v4325
    %4457 = vmatprep.subr.bf16.mxu0 %v4324
    %4458 = vmatpush2.bf16.msra.mxu0 %v4323
    %4459 = vmatprep.subr.bf16.mxu0 %v4322
    %4460 = vmatpush2.bf16.msra.mxu0 %v4321
    %4461 = vmatprep.subr.bf16.mxu0 %v4320
    %4462 = vmatpush2.bf16.msra.mxu0 %v4319
    %4463 = vmatprep.mubr.bf16.mxu0 %v4044
    %4464 = vmatmul.mubr.bf16.gmra.mxu0 %v4043
    %v4465 = vpop.f32.mrf.mxu0
    %v4466 = vadd.f32 0.0, %v4465
    %v4467 = vpop.f32.mrf.mxu0
    %v4468 = vadd.f32 0.0, %v4467
    %v4469 = vpop.f32.mrf.mxu0
    %v4470 = vpop.f32.mrf.mxu0
    %4471 = vdwg.mxu0
    %4472 = vmatprep.subr.bf16.mxu0 %v4350
    %4473 = vmatpush1.bf16.msra.mxu0 %v4349
    %4474 = vmatprep.subr.bf16.mxu0 %v4348
    %4475 = vmatpush1.bf16.msra.mxu0 %v4347
    %4476 = vmatprep.subr.bf16.mxu0 %v4346
    %4477 = vmatpush1.bf16.msra.mxu0 %v4345
    %4478 = vmatprep.subr.bf16.mxu0 %v4344
    %4479 = vmatpush1.bf16.msra.mxu0 %v4343
    %4480 = vmatprep.subr.bf16.mxu0 %v4342
    %4481 = vmatpush1.bf16.msra.mxu0 %v4341
    %4482 = vmatprep.subr.bf16.mxu0 %v4340
    %4483 = vmatpush1.bf16.msra.mxu0 %v4339
    %4484 = vmatprep.subr.bf16.mxu0 %v4338
    %4485 = vmatpush1.bf16.msra.mxu0 %v4337
    %4486 = vmatprep.subr.bf16.mxu0 %v4336
    %4487 = vmatpush1.bf16.msra.mxu0 %v4335
    %4488 = vmatprep.subr.bf16.mxu0 %v4366
    %4489 = vmatpush2.bf16.msra.mxu0 %v4365
    %4490 = vmatprep.subr.bf16.mxu0 %v4364
    %4491 = vmatpush2.bf16.msra.mxu0 %v4363
    %4492 = vmatprep.subr.bf16.mxu0 %v4362
    %4493 = vmatpush2.bf16.msra.mxu0 %v4361
    %4494 = vmatprep.subr.bf16.mxu0 %v4360
    %4495 = vmatpush2.bf16.msra.mxu0 %v4359
    %4496 = vmatprep.subr.bf16.mxu0 %v4358
    %4497 = vmatpush2.bf16.msra.mxu0 %v4357
    %4498 = vmatprep.subr.bf16.mxu0 %v4356
    %4499 = vmatpush2.bf16.msra.mxu0 %v4355
    %4500 = vmatprep.subr.bf16.mxu0 %v4354
    %4501 = vmatpush2.bf16.msra.mxu0 %v4353
    %4502 = vmatprep.subr.bf16.mxu0 %v4352
    %4503 = vmatpush2.bf16.msra.mxu0 %v4351
    %4504 = vmatprep.mubr.bf16.mxu0 %v4046
    %4505 = vmatmul.mubr.bf16.gmra.mxu0 %v4045
    %v4506 = vpop.f32.mrf.mxu0
    %v4507 = vadd.f32 %v4466, %v4506
    %v4508 = vpop.f32.mrf.mxu0
    %v4509 = vadd.f32 %v4468, %v4508
    %v4510 = vpop.f32.mrf.mxu0
    %v4511 = vpop.f32.mrf.mxu0
    %4512 = vdwg.mxu0
    %s4513 = scalar_lea.vmem [#allocation15], 4
    %v4514 = vld [vmem:[%s4513] ss:$8 sm:$0x3]
    %s4515 = scalar_lea.vmem [#allocation15], 5
    %v4516 = vld [vmem:[%s4515] ss:$8 sm:$0x3]
    %v4517 = vrot.slane %v4507, 4
    %v4518 = vadd.f32 %v4507, %v4517
    %v4519 = vrot.slane %v4518, 2
    %v4520 = vadd.f32 %v4518, %v4519
    %v4521 = vrot.slane %v4520, 1
    %v4522 = vadd.f32 %v4520, %v4521
    %v4523 = vrot.slane %v4509, 4
    %v4524 = vadd.f32 %v4509, %v4523
    %v4525 = vrot.slane %v4524, 2
    %v4526 = vadd.f32 %v4524, %v4525
    %v4527 = vrot.slane %v4526, 1
    %v4528 = vadd.f32 %v4526, %v4527
    %v4529 = vmul.f32 %v4522, 0.125
    %v4530 = vmul.f32 %v4528, 0.125
    %v4531 = vmul.f32 %v4507, %v4507
    %v4532 = vmul.f32 %v4509, %v4509
    %v4533 = vrot.slane %v4531, 4
    %v4534 = vadd.f32 %v4531, %v4533
    %v4535 = vrot.slane %v4534, 2
    %v4536 = vadd.f32 %v4534, %v4535
    %v4537 = vrot.slane %v4536, 1
    %v4538 = vadd.f32 %v4536, %v4537
    %v4539 = vrot.slane %v4532, 4
    %v4540 = vadd.f32 %v4532, %v4539
    %v4541 = vrot.slane %v4540, 2
    %v4542 = vadd.f32 %v4540, %v4541
    %v4543 = vrot.slane %v4542, 1
    %v4544 = vadd.f32 %v4542, %v4543
    %v4545 = vmul.f32 %v4538, 0.125
    %v4546 = vmul.f32 %v4544, 0.125
    %v4547 = vmul.f32 %v4529, %v4529
    %v4548 = vmul.f32 %v4530, %v4530
    %v4549 = vsub.f32 %v4545, %v4547
    %v4550 = vsub.f32 %v4546, %v4548
    %v4551 = vsub.f32 %v4507, %v4529
    %v4552 = vsub.f32 %v4509, %v4530
    %v4553 = vadd.f32 %v4549, 1e-05
    %v4554 = vadd.f32 %v4550, 1e-05
    %v4555 = vrsqrt.pop %v4553
    %v4556 = vrsqrt.pop %v4554
    %v4557 = vmul.f32 %v4551, %v4555
    %v4558 = vmul.f32 %v4552, %v4556
    %v4560 = vlaneseq
    %v4561 = vshrl.u32 %v4560, 7
    %v4562 = vsub.s32 0, %v4561
    %v4563 = vrot.slane %v4514, %v4562
    %v4564 = vlaneseq
    %v4565 = vshrl.u32 %v4564, 7
    %v4566 = vsub.s32 1, %v4565
    %v4567 = vrot.slane %v4514, %v4566
    %v4570 = vmul.f32 %v4557, %v4563
    %v4571 = vmul.f32 %v4558, %v4567
    %v4573 = vlaneseq
    %v4574 = vshrl.u32 %v4573, 7
    %v4575 = vsub.s32 0, %v4574
    %v4576 = vrot.slane %v4516, %v4575
    %v4577 = vlaneseq
    %v4578 = vshrl.u32 %v4577, 7
    %v4579 = vsub.s32 1, %v4578
    %v4580 = vrot.slane %v4516, %v4579
    %v4583 = vadd.f32 %v4570, %v4576
    %v4584 = vadd.f32 %v4571, %v4580
    %v4585 = vmax.f32 %v4583, 0.0
    %v4586 = vmax.f32 %v4584, 0.0
    %v4587 = vpack.c.bf16 %v4585, %v4585
    %v4588 = vpack.c.bf16 %v4586, %v4586
    %v4589 = vld [vmem:[#allocation13] sm:$0xf]
    %v4590 = vld [vmem:[#allocation13 + $0x4] sm:$0xf]
    %v4591 = vld [vmem:[#allocation13 + $0x8] sm:$0xf]
    %v4592 = vld [vmem:[#allocation13 + $0xc] sm:$0xf]
    %v4593 = vld [vmem:[#allocation13 + $0x10] sm:$0xf]
    %v4594 = vld [vmem:[#allocation13 + $0x14] sm:$0xf]
    %v4595 = vld [vmem:[#allocation13 + $0x18] sm:$0xf]
    %v4596 = vld [vmem:[#allocation13 + $0x1c] sm:$0xf]
    %v4597 = vld [vmem:[#allocation13 + $0x20] sm:$0xf]
    %v4598 = vld [vmem:[#allocation13 + $0x24] sm:$0xf]
    %v4599 = vld [vmem:[#allocation13 + $0x28] sm:$0xf]
    %v4600 = vld [vmem:[#allocation13 + $0x2c] sm:$0xf]
    %v4601 = vld [vmem:[#allocation13 + $0x30] sm:$0xf]
    %v4602 = vld [vmem:[#allocation13 + $0x34] sm:$0xf]
    %v4603 = vld [vmem:[#allocation13 + $0x38] sm:$0xf]
    %v4604 = vld [vmem:[#allocation13 + $0x3c] sm:$0xf]
    %v4605 = vld [vmem:[#allocation13 + $0x40] sm:$0xf]
    %v4606 = vld [vmem:[#allocation13 + $0x44] sm:$0xf]
    %v4607 = vld [vmem:[#allocation13 + $0x48] sm:$0xf]
    %v4608 = vld [vmem:[#allocation13 + $0x4c] sm:$0xf]
    %v4609 = vld [vmem:[#allocation13 + $0x50] sm:$0xf]
    %v4610 = vld [vmem:[#allocation13 + $0x54] sm:$0xf]
    %v4611 = vld [vmem:[#allocation13 + $0x58] sm:$0xf]
    %v4612 = vld [vmem:[#allocation13 + $0x5c] sm:$0xf]
    %v4613 = vld [vmem:[#allocation13 + $0x60] sm:$0xf]
    %v4614 = vld [vmem:[#allocation13 + $0x64] sm:$0xf]
    %v4615 = vld [vmem:[#allocation13 + $0x68] sm:$0xf]
    %v4616 = vld [vmem:[#allocation13 + $0x6c] sm:$0xf]
    %v4617 = vld [vmem:[#allocation13 + $0x70] sm:$0xf]
    %v4618 = vld [vmem:[#allocation13 + $0x74] sm:$0xf]
    %v4619 = vld [vmem:[#allocation13 + $0x78] sm:$0xf]
    %v4620 = vld [vmem:[#allocation13 + $0x7c] sm:$0xf]
    %v4621 = vld [vmem:[#allocation15 + $0x6] ss:$0 sm:$0xff]
    %v4654 = vunpack.c.l.b16 %v4589
    %v4655 = vunpack.c.l.b16 %v4590
    %v4656 = vunpack.c.l.b16 %v4591
    %v4657 = vunpack.c.l.b16 %v4592
    %v4658 = vunpack.c.l.b16 %v4593
    %v4659 = vunpack.c.l.b16 %v4594
    %v4660 = vunpack.c.l.b16 %v4595
    %v4661 = vunpack.c.l.b16 %v4596
    %v4662 = vunpack.c.l.b16 %v4597
    %v4663 = vunpack.c.l.b16 %v4598
    %v4664 = vunpack.c.l.b16 %v4599
    %v4665 = vunpack.c.l.b16 %v4600
    %v4666 = vunpack.c.l.b16 %v4601
    %v4667 = vunpack.c.l.b16 %v4602
    %v4668 = vunpack.c.l.b16 %v4603
    %v4669 = vunpack.c.l.b16 %v4604
    %v4670 = vunpack.c.l.b16 %v4605
    %v4671 = vunpack.c.l.b16 %v4606
    %v4672 = vunpack.c.l.b16 %v4607
    %v4673 = vunpack.c.l.b16 %v4608
    %v4674 = vunpack.c.l.b16 %v4609
    %v4675 = vunpack.c.l.b16 %v4610
    %v4676 = vunpack.c.l.b16 %v4611
    %v4677 = vunpack.c.l.b16 %v4612
    %v4678 = vunpack.c.l.b16 %v4613
    %v4679 = vunpack.c.l.b16 %v4614
    %v4680 = vunpack.c.l.b16 %v4615
    %v4681 = vunpack.c.l.b16 %v4616
    %v4682 = vunpack.c.l.b16 %v4617
    %v4683 = vunpack.c.l.b16 %v4618
    %v4684 = vunpack.c.l.b16 %v4619
    %v4685 = vunpack.c.l.b16 %v4620
    %v4686 = vpack.c.b16 %v4655, %v4654
    %v4687 = vpack.c.b16 %v4657, %v4656
    %v4688 = vpack.c.b16 %v4659, %v4658
    %v4689 = vpack.c.b16 %v4661, %v4660
    %v4690 = vpack.c.b16 %v4663, %v4662
    %v4691 = vpack.c.b16 %v4665, %v4664
    %v4692 = vpack.c.b16 %v4667, %v4666
    %v4693 = vpack.c.b16 %v4669, %v4668
    %v4694 = vpack.c.b16 %v4671, %v4670
    %v4695 = vpack.c.b16 %v4673, %v4672
    %v4696 = vpack.c.b16 %v4675, %v4674
    %v4697 = vpack.c.b16 %v4677, %v4676
    %v4698 = vpack.c.b16 %v4679, %v4678
    %v4699 = vpack.c.b16 %v4681, %v4680
    %v4700 = vpack.c.b16 %v4683, %v4682
    %v4701 = vpack.c.b16 %v4685, %v4684
    %4718 = vmatprep.subr.bf16.mxu0 0
    %4719 = vmatpush1.bf16.msra.mxu0 %v4693
    %4720 = vmatprep.subr.bf16.mxu0 0
    %4721 = vmatpush1.bf16.msra.mxu0 %v4692
    %4722 = vmatprep.subr.bf16.mxu0 0
    %4723 = vmatpush1.bf16.msra.mxu0 %v4691
    %4724 = vmatprep.subr.bf16.mxu0 0
    %4725 = vmatpush1.bf16.msra.mxu0 %v4690
    %4726 = vmatprep.subr.bf16.mxu0 0
    %4727 = vmatpush1.bf16.msra.mxu0 %v4689
    %4728 = vmatprep.subr.bf16.mxu0 0
    %4729 = vmatpush1.bf16.msra.mxu0 %v4688
    %4730 = vmatprep.subr.bf16.mxu0 0
    %4731 = vmatpush1.bf16.msra.mxu0 %v4687
    %4732 = vmatprep.subr.bf16.mxu0 0
    %4733 = vmatpush1.bf16.msra.mxu0 %v4686
    %4734 = vmatprep.subr.bf16.mxu0 0
    %4735 = vmatpush2.bf16.msra.mxu0 %v4701
    %4736 = vmatprep.subr.bf16.mxu0 0
    %4737 = vmatpush2.bf16.msra.mxu0 %v4700
    %4738 = vmatprep.subr.bf16.mxu0 0
    %4739 = vmatpush2.bf16.msra.mxu0 %v4699
    %4740 = vmatprep.subr.bf16.mxu0 0
    %4741 = vmatpush2.bf16.msra.mxu0 %v4698
    %4742 = vmatprep.subr.bf16.mxu0 0
    %4743 = vmatpush2.bf16.msra.mxu0 %v4697
    %4744 = vmatprep.subr.bf16.mxu0 0
    %4745 = vmatpush2.bf16.msra.mxu0 %v4696
    %4746 = vmatprep.subr.bf16.mxu0 0
    %4747 = vmatpush2.bf16.msra.mxu0 %v4695
    %4748 = vmatprep.subr.bf16.mxu0 0
    %4749 = vmatpush2.bf16.msra.mxu0 %v4694
    %4750 = vmatprep.mubr.bf16.mxu0 %v4588
    %4751 = vmatmul.mubr.bf16.gmra.mxu0 %v4587
    %v4752 = vpop.f32.mrf.mxu0
    %v4753 = vadd.f32 %v4621, %v4752
    %v4754 = vpop.f32.mrf.mxu0
    %v4755 = vpop.f32.mrf.mxu0
    %v4756 = vpop.f32.mrf.mxu0
    %4757 = vdwg.mxu0
    %4758 = vst [vmem:[#allocation16] sm:$0xff] %v4753
    // Predicated region
    $region46: #{neural_network_forward.2} parent=1 // pred_check
      _
    $region47: #{neural_network_forward.2} parent=1 // pred_check_branch
      %4760 = sbr.rel (0) target = $region49
    $region48: #{neural_network_forward.2} parent=1 // pred_region
      %s4762 = ssub.s32 128, 128
      %4763 = vsyncadd [#allocation9], %s4762
      %s4765 = sshll.u32 [#allocation16], 4
      %s4766 = int_to_ptr.vmem [resolvable:$true] %s4765
      %4768 = dma.vmem_to_hbm [thread:$0]  %s4766, 128, %s7, [#allocation9]
    $region49: #{neural_network_forward.2} parent=1 // pred_fallthru
      _
    // Predicated region
    $region50: #{neural_network_forward.2} parent=1 // pred_check
      _
    $region51: #{neural_network_forward.2} parent=1 // pred_check_branch
      %4770 = sbr.rel (0) target = $region53
    $region52: #{neural_network_forward.2} parent=1 // pred_region
      %4771 = dma.done [#allocation9], 128
    $region53: #{neural_network_forward.2} parent=1 // pred_fallthru
      _
    %4772 = vsyncpa [#allocation8], 1
    %4773 = vsyncpa [#allocation11], 1
    %4774 = vsyncpa [#allocation14], 1
    %4775 = vsyncpa [#allocation9], 1

</llo_original>
